<compile_context>
chip_gen: v7x
topology: tpu7x:2x2x1
jax: 0.10.0
libtpu: 0.0.40
codegen_flags: <defaults>
</compile_context>

<pallas_src>
import functools

import jax
import jax.numpy as jnp
import numpy as np
from jax.experimental import pallas as pl
from jax.experimental.pallas import tpu as pltpu


# ----------------------------------------------------------------------------
# Pallas kernel: L-layer LSTM recurrence + fused MLP head.
# All tensors are time-major and batch-padded:  rows = T * Bp.
# Gate columns are pre-permuted to [i, f, o, g].
# ----------------------------------------------------------------------------
def _bwlstm3_kernel(
    phi_ref,     # (T*Bp, 2)   f32  [delta_z_dot, z[...,2]]
    h0_ref,      # (L, Bp, H)  f32  initial hidden state (aliased to hout)
    c0_ref,      # (L, Bp, H)  f32  initial cell state   (aliased to cout)
    wih0_ref,    # (2, 4H)     f32  layer-0 input weights (rows: delta, z2)
    wihr_ref,    # (max(L-1,1), H, 4H) f32  input weights, layers 1..L-1
    whh_ref,     # (L, H, 4H)  f32
    b_ref,       # (L, 1, 4H)  f32  (b_ih + b_hh)
    fc1w_ref,    # (H, F)      f32
    fc1b_ref,    # (1, F)      f32
    fc2w_ref,    # (1, F)      f32  (row vector)
    fc2b_ref,    # (1, 1)      f32
    dr_ref,      # (T*Bp, 1)   f32  output dr_dt
    hout_ref,    # (L, Bp, H)  f32  final hidden state
    cout_ref,    # (L, Bp, H)  f32  final cell state
    act,         # scratch (T*Bp, H)  VMEM   layer activations (in-place reuse)
    gbuf,        # scratch (T*Bp, 4H) VMEM   precomputed input gates
):
    L, Bp, H = h0_ref.shape
    T = phi_ref.shape[0] // Bp
    H3 = 3 * H

    unroll = True if T <= 32 else 8

    for l in range(L):
        whh_l = whh_ref[l]                                  # (H, 4H)

        # ---- batched input projection for this layer (hoisted out of loop) --
        if l == 0:
            phiv = phi_ref[...]                             # (T*Bp, 2)
            w0 = wih0_ref[...]                              # (2, 4H)
            gbuf[...] = (phiv[:, 0:1] * w0[0:1, :]
                         + phiv[:, 1:2] * w0[1:2, :]
                         + b_ref[0])
        else:
            gbuf[...] = (jnp.dot(act[...], wihr_ref[l - 1],
                                 preferred_element_type=jnp.float32)
                         + b_ref[l])

        # ---- sequential recurrence: only h @ W_hh + gates[t] per step -------
        def step(t, carry, whh_l=whh_l):
            h, c = carry
            row = pl.multiple_of(t * Bp, 8)
            gates = gbuf[pl.ds(row, Bp), :] + jnp.dot(
                h, whh_l, preferred_element_type=jnp.float32)   # (Bp, 4H)
            # gate order is [i, f, o, g]: one sigmoid block + one tanh block
            ifo = jax.nn.sigmoid(gates[:, :H3])
            g = jnp.tanh(gates[:, H3:])
            c_new = ifo[:, H:2 * H] * c + ifo[:, :H] * g
            h_new = ifo[:, 2 * H:H3] * jnp.tanh(c_new)
            act[pl.ds(row, Bp), :] = h_new
            return h_new, c_new

        h_fin, c_fin = jax.lax.fori_loop(
            0, T, step, (h0_ref[l], c0_ref[l]), unroll=unroll)
        hout_ref[l] = h_fin
        cout_ref[l] = c_fin

    # ---- MLP head: one fused pass over all T*Bp rows ------------------------
    h1 = jnp.dot(act[...], fc1w_ref[...],
                 preferred_element_type=jnp.float32) + fc1b_ref[...]
    h1 = jnp.where(h1 > 0, h1, 0.01 * h1)                   # LeakyReLU(0.01)
    dr_ref[...] = (jnp.sum(h1 * fc2w_ref[...], axis=-1, keepdims=True)
                   + fc2b_ref[...])
    # TODO(synk): LSTM inter-layer dropout and MLP dropout are identity here
    # (inference semantics); for very long T, chunk the T axis (per-chunk gbuf
    # precompute + carried (h, c)) to bound VMEM on v7x.


# ----------------------------------------------------------------------------
# Wrapper (layout plumbing: phi assembly, transpose, batch padding, gate
# permutation, time-major flattening).
# ----------------------------------------------------------------------------
@functools.partial(jax.jit, static_argnames=("return_states",))
def bwlstm3_forward(z, dz_dt, params, hx=None, *, return_states=False):
    B, T, _ = z.shape
    L, H, G = params["w_hh"].shape                  # G = 4H
    F = params["fc1w"].shape[1]
    Bp = ((B + 7) // 8) * 8                         # pad batch to sublane count

    if hx is None:
        h0 = jnp.zeros((L, B, H), jnp.float32)
        c0 = jnp.zeros((L, B, H), jnp.float32)
    else:
        h0, c0 = hx

    # Gate-column permutation (i, f, g, o) -> (i, f, o, g).
    perm = np.concatenate([np.arange(0, H), np.arange(H, 2 * H),
                           np.arange(3 * H, 4 * H), np.arange(2 * H, 3 * H)])
    wih0 = params["w_ih_l0"][:, perm]
    wihr = params["w_ih"][:, :, perm]
    whh = params["w_hh"][:, :, perm]
    b = params["b"][:, :, perm]
    fc2w_row = jnp.transpose(params["fc2w"])        # (1, F)

    # phi = [delta_z_dot, z[..., 2]]   (trivial XLA ops; layout plumbing)
    dz0 = dz_dt[:, 0:1, 1:2]                                      # (B, 1, 1)
    phi = jnp.concatenate([dz_dt[:, :, 1:2] - dz0, z[:, :, 2:3]], axis=2)

    # Time-major, batch-padded, flattened 2-D slab:  (B, T, C) -> (T*Bp, C)
    def to_2d(x):
        x = jnp.transpose(x, (1, 0, 2)).astype(jnp.float32)
        x = jnp.pad(x, ((0, 0), (0, Bp - B), (0, 0)))
        return x.reshape(T * Bp, x.shape[-1])

    phi2d = to_2d(phi)
    h0p = jnp.pad(h0.astype(jnp.float32), ((0, 0), (0, Bp - B), (0, 0)))
    c0p = jnp.pad(c0.astype(jnp.float32), ((0, 0), (0, Bp - B), (0, 0)))

    # Explicit VMEM budget (everything is resident; no grid).
    def _pad_bytes(shape):
        s = tuple(int(d) for d in shape)
        if len(s) < 2:
            s = (1,) + s
        lead = int(np.prod(s[:-2])) if len(s) > 2 else 1
        rows = -(-s[-2] // 8) * 8
        cols = -(-s[-1] // 128) * 128
        return lead * rows * cols * 4

    shapes = [
        (T * Bp, 2), (L, Bp, H), (L, Bp, H),
        (2, G), (max(L - 1, 1), H, G), (L, H, G), (L, 1, G),
        (H, F), (1, F), (1, F), (1, 1),
        (T * Bp, 1), (L, Bp, H), (L, Bp, H),          # outputs
        (T * Bp, H), (T * Bp, G),                     # scratch
    ]
    need = sum(_pad_bytes(s) for s in shapes)
    vmem_limit = int(min(100 * 2**20, max(32 * 2**20, 1.5 * need)))

    vmem = pl.BlockSpec(memory_space=pltpu.MemorySpace.VMEM)
    dr_flat, h_out, c_out = pl.pallas_call(
        _bwlstm3_kernel,
        out_shape=(
            jax.ShapeDtypeStruct((T * Bp, 1), jnp.float32),
            jax.ShapeDtypeStruct((L, Bp, H), jnp.float32),
            jax.ShapeDtypeStruct((L, Bp, H), jnp.float32),
        ),
        in_specs=[vmem] * 11,
        out_specs=(vmem, vmem, vmem),
        scratch_shapes=[
            pltpu.VMEM((T * Bp, H), jnp.float32),
            pltpu.VMEM((T * Bp, G), jnp.float32),
        ],
        input_output_aliases={1: 1, 2: 2},            # h0 -> hout, c0 -> cout
        compiler_params=pltpu.CompilerParams(vmem_limit_bytes=vmem_limit),
    )(phi2d, h0p, c0p, wih0, wihr, whh, b,
      params["fc1w"], params["fc1b"], fc2w_row, params["fc2b"])

    dr_dt = jnp.transpose(dr_flat.reshape(T, Bp, 1)[:, :B, :], (1, 0, 2))
    output = {"dr_dt": dr_dt}
    if return_states:
        return output, (h_out[:, :B, :], c_out[:, :B, :])
    return output


# ----------------------------------------------------------------------------
# Deterministic parameter init (PyTorch layout: transposed weights, gate order
# i, f, g, o; layer-0 input weights kept unpadded as (2, 4H)).
# ----------------------------------------------------------------------------
def init_params(key, num_layers=3, n_dim_model=32, n_dim_fc=None):
    H = n_dim_model
    F = n_dim_fc or H // 2
    L = num_layers
    k = 1.0 / np.sqrt(H)
    keys = iter(jax.random.split(key, 4 * L + 8))

    def u(shape, bound):
        return jax.random.uniform(next(keys), shape, minval=-bound,
                                  maxval=bound, dtype=jnp.float32)

    w_ih_l0 = u((2, 4 * H), k)
    w_ih, w_hh, b = [], [], []
    for l in range(L):
        if l > 0:
            w_ih.append(u((H, 4 * H), k))
        w_hh.append(u((H, 4 * H), k))
        b.append(u((1, 4 * H), k) + u((1, 4 * H), k))     # b_ih + b_hh

    k1 = 1.0 / np.sqrt(H)
    k2 = 1.0 / np.sqrt(F)
    return {
        "w_ih_l0": w_ih_l0,                                # (2, 4H)
        "w_ih": (jnp.stack(w_ih) if L > 1
                 else jnp.zeros((1, H, 4 * H), jnp.float32)),  # (L-1, H, 4H)
        "w_hh": jnp.stack(w_hh),                           # (L, H, 4H)
        "b": jnp.stack(b),                                 # (L, 1, 4H)
        "fc1w": u((H, F), k1),
        "fc1b": u((1, F), k1),
        "fc2w": u((F, 1), k2),
        "fc2b": u((1, 1), k2),
    }


# ----------------------------------------------------------------------------
# Pure-JAX reference (PyTorch gate order, no permutation, no padding).
# ----------------------------------------------------------------------------
def reference_forward(z, dz_dt, params):
    B, T, _ = z.shape
    L, H, _ = params["w_hh"].shape
    dz0 = dz_dt[:, 0:1, 1:2]
    phi = jnp.concatenate([dz_dt[:, :, 1:2] - dz0, z[:, :, 2:3]], axis=2)
    x = jnp.transpose(phi, (1, 0, 2)).astype(jnp.float32)        # (T, B, 2)

    hs, cs = [], []
    for l in range(L):
        wih = params["w_ih_l0"] if l == 0 else params["w_ih"][l - 1]
        whh = params["w_hh"][l]
        bias = params["b"][l]

        def cell(carry, x_t, wih=wih, whh=whh, bias=bias):
            h, c = carry
            gates = x_t @ wih + h @ whh + bias
            i = jax.nn.sigmoid(gates[:, :H])
            f = jax.nn.sigmoid(gates[:, H:2 * H])
            g = jnp.tanh(gates[:, 2 * H:3 * H])
            o = jax.nn.sigmoid(gates[:, 3 * H:])
            c = f * c + i * g
            h = o * jnp.tanh(c)
            return (h, c), h

        init = (jnp.zeros((B, H), jnp.float32), jnp.zeros((B, H), jnp.float32))
        (h_f, c_f), x = jax.lax.scan(cell, init, x)
        hs.append(h_f)
        cs.append(c_f)

    h1 = x @ params["fc1w"] + params["fc1b"]
    h1 = jnp.where(h1 > 0, h1, 0.01 * h1)
    dr = h1 @ params["fc2w"] + params["fc2b"]                    # (T, B, 1)
    return jnp.transpose(dr, (1, 0, 2)), (jnp.stack(hs), jnp.stack(cs))


if __name__ == "__main__":
    # Small shapes consistent with the module's forward:
    #   z: (B, T, 3)  (uses z[..., 2]),  dz_dt: (B, T, 2)  (uses dz_dt[..., 1])
    B, T = 2, 8
    NUM_LAYERS, N_DIM_MODEL, N_DIM_FC = 3, 32, 16

    key = jax.random.PRNGKey(0)
    kz, kd, kp = jax.random.split(key, 3)
    z = jax.random.normal(kz, (B, T, 3), dtype=jnp.float32)
    dz_dt = jax.random.normal(kd, (B, T, 2), dtype=jnp.float32)
    params = init_params(kp, NUM_LAYERS, N_DIM_MODEL, N_DIM_FC)

    out, (h_n, c_n) = bwlstm3_forward(z, dz_dt, params, return_states=True)
    dr_dt = jax.block_until_ready(out["dr_dt"])
    h_n = jax.block_until_ready(h_n)
    c_n = jax.block_until_ready(c_n)

    assert dr_dt.shape == (B, T, 1), dr_dt.shape
    assert h_n.shape == (NUM_LAYERS, B, N_DIM_MODEL)
    assert c_n.shape == (NUM_LAYERS, B, N_DIM_MODEL)
    assert bool(jnp.all(jnp.isfinite(dr_dt)))

    ref_dr, (ref_h, ref_c) = reference_forward(z, dz_dt, params)
    np.testing.assert_allclose(np.asarray(dr_dt), np.asarray(ref_dr),
                               rtol=1e-2, atol=1e-2)
    np.testing.assert_allclose(np.asarray(h_n), np.asarray(ref_h),
                               rtol=1e-2, atol=1e-2)
    np.testing.assert_allclose(np.asarray(c_n), np.asarray(ref_c),
                               rtol=1e-2, atol=1e-2)

    print("KERNEL_OK")
</pallas_src>

<mosaic_0001>
module attributes {stable_mosaic.version = 11 : i64} {
  func.func @_bwlstm3_kernel(%arg0: memref<64x2xf32, #tpu.memory_space<vmem>>, %arg1: memref<3x8x32xf32, #tpu.memory_space<vmem>>, %arg2: memref<3x8x32xf32, #tpu.memory_space<vmem>>, %arg3: memref<2x128xf32, #tpu.memory_space<vmem>>, %arg4: memref<2x32x128xf32, #tpu.memory_space<vmem>>, %arg5: memref<3x32x128xf32, #tpu.memory_space<vmem>>, %arg6: memref<3x1x128xf32, #tpu.memory_space<vmem>>, %arg7: memref<32x16xf32, #tpu.memory_space<vmem>>, %arg8: memref<1x16xf32, #tpu.memory_space<vmem>>, %arg9: memref<1x16xf32, #tpu.memory_space<vmem>>, %arg10: memref<1x1xf32, #tpu.memory_space<vmem>>, %arg11: memref<64x1xf32, #tpu.memory_space<vmem>>, %arg12: memref<3x8x32xf32, #tpu.memory_space<vmem>>, %arg13: memref<3x8x32xf32, #tpu.memory_space<vmem>>, %arg14: memref<64x32xf32, #tpu.memory_space<vmem>>, %arg15: memref<64x128xf32, #tpu.memory_space<vmem>>) attributes {dimension_semantics = [], scalar_prefetch = 0 : i64, scratch_operands = 2 : i64, tpu.core_type = #tpu.core_type<tc>} {
    %c0 = arith.constant 0 : index
    %c0_0 = arith.constant 0 : index
    %c0_1 = arith.constant 0 : index
    %0 = vector.load %arg5[%c0, %c0_0, %c0_1] : memref<3x32x128xf32, #tpu.memory_space<vmem>>, vector<1x32x128xf32>
    %1 = vector.shape_cast %0 : vector<1x32x128xf32> to vector<32x128xf32>
    %c0_2 = arith.constant 0 : index
    %c0_3 = arith.constant 0 : index
    %2 = vector.load %arg0[%c0_2, %c0_3] : memref<64x2xf32, #tpu.memory_space<vmem>>, vector<64x2xf32>
    %c0_4 = arith.constant 0 : index
    %c0_5 = arith.constant 0 : index
    %3 = vector.load %arg3[%c0_4, %c0_5] : memref<2x128xf32, #tpu.memory_space<vmem>>, vector<2x128xf32>
    %4 = vector.extract_strided_slice %2 {offsets = [0, 0], sizes = [64, 1], strides = [1, 1]} : vector<64x2xf32> to vector<64x1xf32>
    %5 = vector.extract_strided_slice %3 {offsets = [0, 0], sizes = [1, 128], strides = [1, 1]} : vector<2x128xf32> to vector<1x128xf32>
    %6 = vector.broadcast %4 : vector<64x1xf32> to vector<64x128xf32>
    %7 = vector.broadcast %5 : vector<1x128xf32> to vector<64x128xf32>
    %8 = arith.mulf %6, %7 : vector<64x128xf32>
    %9 = vector.extract_strided_slice %2 {offsets = [0, 1], sizes = [64, 1], strides = [1, 1]} : vector<64x2xf32> to vector<64x1xf32>
    %10 = vector.extract_strided_slice %3 {offsets = [1, 0], sizes = [1, 128], strides = [1, 1]} : vector<2x128xf32> to vector<1x128xf32>
    %11 = vector.broadcast %9 : vector<64x1xf32> to vector<64x128xf32>
    %12 = vector.broadcast %10 : vector<1x128xf32> to vector<64x128xf32>
    %13 = arith.mulf %11, %12 : vector<64x128xf32>
    %14 = arith.addf %8, %13 : vector<64x128xf32>
    %c0_6 = arith.constant 0 : index
    %c0_7 = arith.constant 0 : index
    %c0_8 = arith.constant 0 : index
    %15 = vector.load %arg6[%c0_6, %c0_7, %c0_8] : memref<3x1x128xf32, #tpu.memory_space<vmem>>, vector<1x1x128xf32>
    %16 = vector.shape_cast %15 : vector<1x1x128xf32> to vector<1x128xf32>
    %17 = vector.broadcast %16 : vector<1x128xf32> to vector<64x128xf32>
    %18 = arith.addf %14, %17 : vector<64x128xf32>
    %c0_9 = arith.constant 0 : index
    %c0_10 = arith.constant 0 : index
    %19 = vector.load %arg15[%c0_9, %c0_10] : memref<64x128xf32, #tpu.memory_space<vmem>>, vector<64x128xf32>
    tpu.vector_store %arg15[%c0_9, %c0_10], %18 {strides = array<i32>} : memref<64x128xf32, #tpu.memory_space<vmem>>, vector<64x128xf32>,
    %c0_11 = arith.constant 0 : index
    %c0_12 = arith.constant 0 : index
    %c0_13 = arith.constant 0 : index
    %20 = vector.load %arg1[%c0_11, %c0_12, %c0_13] : memref<3x8x32xf32, #tpu.memory_space<vmem>>, vector<1x8x32xf32>
    %21 = vector.shape_cast %20 : vector<1x8x32xf32> to vector<8x32xf32>
    %c0_14 = arith.constant 0 : index
    %c0_15 = arith.constant 0 : index
    %c0_16 = arith.constant 0 : index
    %22 = vector.load %arg2[%c0_14, %c0_15, %c0_16] : memref<3x8x32xf32, #tpu.memory_space<vmem>>, vector<1x8x32xf32>
    %23 = vector.shape_cast %22 : vector<1x8x32xf32> to vector<8x32xf32>
    %c0_i32 = arith.constant 0 : i32
    %c8_i32 = arith.constant 8 : i32
    %24 = arith.muli %c0_i32, %c8_i32 : i32
    %25 = tpu.assume_multiple %24, 8 : i32
    %26 = arith.index_cast %25 : i32 to index
    %c0_17 = arith.constant 0 : index
    %27 = vector.load %arg15[%26, %c0_17] : memref<64x128xf32, #tpu.memory_space<vmem>>, vector<8x128xf32>
    %cst = arith.constant dense<0.000000e+00> : vector<8x128xf32>
    %28 = tpu.matmul %21, %1, %cst {dimension_numbers = #tpu.dot_dimension_numbers<[1], [0], [0], [1], [0, 0, 1, 1], [], []>} : vector<8x32xf32>, vector<32x128xf32>, vector<8x128xf32> -> vector<8x128xf32>
    %29 = arith.addf %27, %28 : vector<8x128xf32>
    %30 = vector.extract_strided_slice %29 {offsets = [0, 0], sizes = [8, 96], strides = [1, 1]} : vector<8x128xf32> to vector<8x96xf32>
    %31 = arith.negf %30 : vector<8x96xf32>
    %32 = math.exp %31 : vector<8x96xf32>
    %cst_18 = arith.constant 1.000000e+00 : f32
    %33 = vector.broadcast %cst_18 : f32 to vector<8x96xf32>
    %34 = arith.addf %33, %32 : vector<8x96xf32>
    %35 = arith.divf %33, %34 : vector<8x96xf32>
    %36 = vector.extract_strided_slice %29 {offsets = [0, 96], sizes = [8, 32], strides = [1, 1]} : vector<8x128xf32> to vector<8x32xf32>
    %37 = math.tanh %36 : vector<8x32xf32>
    %38 = vector.extract_strided_slice %35 {offsets = [0, 32], sizes = [8, 32], strides = [1, 1]} : vector<8x96xf32> to vector<8x32xf32>
    %39 = arith.mulf %38, %23 : vector<8x32xf32>
    %40 = vector.extract_strided_slice %35 {offsets = [0, 0], sizes = [8, 32], strides = [1, 1]} : vector<8x96xf32> to vector<8x32xf32>
    %41 = arith.mulf %40, %37 : vector<8x32xf32>
    %42 = arith.addf %39, %41 : vector<8x32xf32>
    %43 = vector.extract_strided_slice %35 {offsets = [0, 64], sizes = [8, 32], strides = [1, 1]} : vector<8x96xf32> to vector<8x32xf32>
    %44 = math.tanh %42 : vector<8x32xf32>
    %45 = arith.mulf %43, %44 : vector<8x32xf32>
    %46 = arith.index_cast %25 : i32 to index
    %c0_19 = arith.constant 0 : index
    %47 = vector.load %arg14[%46, %c0_19] : memref<64x32xf32, #tpu.memory_space<vmem>>, vector<8x32xf32>
    tpu.vector_store %arg14[%46, %c0_19], %45 {strides = array<i32>} : memref<64x32xf32, #tpu.memory_space<vmem>>, vector<8x32xf32>,
    %c1_i32 = arith.constant 1 : i32
    %c8_i32_20 = arith.constant 8 : i32
    %48 = arith.muli %c1_i32, %c8_i32_20 : i32
    %49 = tpu.assume_multiple %48, 8 : i32
    %50 = arith.index_cast %49 : i32 to index
    %c0_21 = arith.constant 0 : index
    %51 = vector.load %arg15[%50, %c0_21] : memref<64x128xf32, #tpu.memory_space<vmem>>, vector<8x128xf32>
    %cst_22 = arith.constant dense<0.000000e+00> : vector<8x128xf32>
    %52 = tpu.matmul %45, %1, %cst_22 {dimension_numbers = #tpu.dot_dimension_numbers<[1], [0], [0], [1], [0, 0, 1, 1], [], []>} : vector<8x32xf32>, vector<32x128xf32>, vector<8x128xf32> -> vector<8x128xf32>
    %53 = arith.addf %51, %52 : vector<8x128xf32>
    %54 = vector.extract_strided_slice %53 {offsets = [0, 0], sizes = [8, 96], strides = [1, 1]} : vector<8x128xf32> to vector<8x96xf32>
    %55 = arith.negf %54 : vector<8x96xf32>
    %56 = math.exp %55 : vector<8x96xf32>
    %cst_23 = arith.constant 1.000000e+00 : f32
    %57 = vector.broadcast %cst_23 : f32 to vector<8x96xf32>
    %58 = arith.addf %57, %56 : vector<8x96xf32>
    %59 = arith.divf %57, %58 : vector<8x96xf32>
    %60 = vector.extract_strided_slice %53 {offsets = [0, 96], sizes = [8, 32], strides = [1, 1]} : vector<8x128xf32> to vector<8x32xf32>
    %61 = math.tanh %60 : vector<8x32xf32>
    %62 = vector.extract_strided_slice %59 {offsets = [0, 32], sizes = [8, 32], strides = [1, 1]} : vector<8x96xf32> to vector<8x32xf32>
    %63 = arith.mulf %62, %42 : vector<8x32xf32>
    %64 = vector.extract_strided_slice %59 {offsets = [0, 0], sizes = [8, 32], strides = [1, 1]} : vector<8x96xf32> to vector<8x32xf32>
    %65 = arith.mulf %64, %61 : vector<8x32xf32>
    %66 = arith.addf %63, %65 : vector<8x32xf32>
    %67 = vector.extract_strided_slice %59 {offsets = [0, 64], sizes = [8, 32], strides = [1, 1]} : vector<8x96xf32> to vector<8x32xf32>
    %68 = math.tanh %66 : vector<8x32xf32>
    %69 = arith.mulf %67, %68 : vector<8x32xf32>
    %70 = arith.index_cast %49 : i32 to index
    %c0_24 = arith.constant 0 : index
    %71 = vector.load %arg14[%70, %c0_24] : memref<64x32xf32, #tpu.memory_space<vmem>>, vector<8x32xf32>
    tpu.vector_store %arg14[%70, %c0_24], %69 {strides = array<i32>} : memref<64x32xf32, #tpu.memory_space<vmem>>, vector<8x32xf32>,
    %c2_i32 = arith.constant 2 : i32
    %c8_i32_25 = arith.constant 8 : i32
    %72 = arith.muli %c2_i32, %c8_i32_25 : i32
    %73 = tpu.assume_multiple %72, 8 : i32
    %74 = arith.index_cast %73 : i32 to index
    %c0_26 = arith.constant 0 : index
    %75 = vector.load %arg15[%74, %c0_26] : memref<64x128xf32, #tpu.memory_space<vmem>>, vector<8x128xf32>
    %cst_27 = arith.constant dense<0.000000e+00> : vector<8x128xf32>
    %76 = tpu.matmul %69, %1, %cst_27 {dimension_numbers = #tpu.dot_dimension_numbers<[1], [0], [0], [1], [0, 0, 1, 1], [], []>} : vector<8x32xf32>, vector<32x128xf32>, vector<8x128xf32> -> vector<8x128xf32>
    %77 = arith.addf %75, %76 : vector<8x128xf32>
    %78 = vector.extract_strided_slice %77 {offsets = [0, 0], sizes = [8, 96], strides = [1, 1]} : vector<8x128xf32> to vector<8x96xf32>
    %79 = arith.negf %78 : vector<8x96xf32>
    %80 = math.exp %79 : vector<8x96xf32>
    %cst_28 = arith.constant 1.000000e+00 : f32
    %81 = vector.broadcast %cst_28 : f32 to vector<8x96xf32>
    %82 = arith.addf %81, %80 : vector<8x96xf32>
    %83 = arith.divf %81, %82 : vector<8x96xf32>
    %84 = vector.extract_strided_slice %77 {offsets = [0, 96], sizes = [8, 32], strides = [1, 1]} : vector<8x128xf32> to vector<8x32xf32>
    %85 = math.tanh %84 : vector<8x32xf32>
    %86 = vector.extract_strided_slice %83 {offsets = [0, 32], sizes = [8, 32], strides = [1, 1]} : vector<8x96xf32> to vector<8x32xf32>
    %87 = arith.mulf %86, %66 : vector<8x32xf32>
    %88 = vector.extract_strided_slice %83 {offsets = [0, 0], sizes = [8, 32], strides = [1, 1]} : vector<8x96xf32> to vector<8x32xf32>
    %89 = arith.mulf %88, %85 : vector<8x32xf32>
    %90 = arith.addf %87, %89 : vector<8x32xf32>
    %91 = vector.extract_strided_slice %83 {offsets = [0, 64], sizes = [8, 32], strides = [1, 1]} : vector<8x96xf32> to vector<8x32xf32>
    %92 = math.tanh %90 : vector<8x32xf32>
    %93 = arith.mulf %91, %92 : vector<8x32xf32>
    %94 = arith.index_cast %73 : i32 to index
    %c0_29 = arith.constant 0 : index
    %95 = vector.load %arg14[%94, %c0_29] : memref<64x32xf32, #tpu.memory_space<vmem>>, vector<8x32xf32>
    tpu.vector_store %arg14[%94, %c0_29], %93 {strides = array<i32>} : memref<64x32xf32, #tpu.memory_space<vmem>>, vector<8x32xf32>,
    %c3_i32 = arith.constant 3 : i32
    %c8_i32_30 = arith.constant 8 : i32
    %96 = arith.muli %c3_i32, %c8_i32_30 : i32
    %97 = tpu.assume_multiple %96, 8 : i32
    %98 = arith.index_cast %97 : i32 to index
    %c0_31 = arith.constant 0 : index
    %99 = vector.load %arg15[%98, %c0_31] : memref<64x128xf32, #tpu.memory_space<vmem>>, vector<8x128xf32>
    %cst_32 = arith.constant dense<0.000000e+00> : vector<8x128xf32>
    %100 = tpu.matmul %93, %1, %cst_32 {dimension_numbers = #tpu.dot_dimension_numbers<[1], [0], [0], [1], [0, 0, 1, 1], [], []>} : vector<8x32xf32>, vector<32x128xf32>, vector<8x128xf32> -> vector<8x128xf32>
    %101 = arith.addf %99, %100 : vector<8x128xf32>
    %102 = vector.extract_strided_slice %101 {offsets = [0, 0], sizes = [8, 96], strides = [1, 1]} : vector<8x128xf32> to vector<8x96xf32>
    %103 = arith.negf %102 : vector<8x96xf32>
    %104 = math.exp %103 : vector<8x96xf32>
    %cst_33 = arith.constant 1.000000e+00 : f32
    %105 = vector.broadcast %cst_33 : f32 to vector<8x96xf32>
    %106 = arith.addf %105, %104 : vector<8x96xf32>
    %107 = arith.divf %105, %106 : vector<8x96xf32>
    %108 = vector.extract_strided_slice %101 {offsets = [0, 96], sizes = [8, 32], strides = [1, 1]} : vector<8x128xf32> to vector<8x32xf32>
    %109 = math.tanh %108 : vector<8x32xf32>
    %110 = vector.extract_strided_slice %107 {offsets = [0, 32], sizes = [8, 32], strides = [1, 1]} : vector<8x96xf32> to vector<8x32xf32>
    %111 = arith.mulf %110, %90 : vector<8x32xf32>
    %112 = vector.extract_strided_slice %107 {offsets = [0, 0], sizes = [8, 32], strides = [1, 1]} : vector<8x96xf32> to vector<8x32xf32>
    %113 = arith.mulf %112, %109 : vector<8x32xf32>
    %114 = arith.addf %111, %113 : vector<8x32xf32>
    %115 = vector.extract_strided_slice %107 {offsets = [0, 64], sizes = [8, 32], strides = [1, 1]} : vector<8x96xf32> to vector<8x32xf32>
    %116 = math.tanh %114 : vector<8x32xf32>
    %117 = arith.mulf %115, %116 : vector<8x32xf32>
    %118 = arith.index_cast %97 : i32 to index
    %c0_34 = arith.constant 0 : index
    %119 = vector.load %arg14[%118, %c0_34] : memref<64x32xf32, #tpu.memory_space<vmem>>, vector<8x32xf32>
    tpu.vector_store %arg14[%118, %c0_34], %117 {strides = array<i32>} : memref<64x32xf32, #tpu.memory_space<vmem>>, vector<8x32xf32>,
    %c4_i32 = arith.constant 4 : i32
    %c8_i32_35 = arith.constant 8 : i32
    %120 = arith.muli %c4_i32, %c8_i32_35 : i32
    %121 = tpu.assume_multiple %120, 8 : i32
    %122 = arith.index_cast %121 : i32 to index
    %c0_36 = arith.constant 0 : index
    %123 = vector.load %arg15[%122, %c0_36] : memref<64x128xf32, #tpu.memory_space<vmem>>, vector<8x128xf32>
    %cst_37 = arith.constant dense<0.000000e+00> : vector<8x128xf32>
    %124 = tpu.matmul %117, %1, %cst_37 {dimension_numbers = #tpu.dot_dimension_numbers<[1], [0], [0], [1], [0, 0, 1, 1], [], []>} : vector<8x32xf32>, vector<32x128xf32>, vector<8x128xf32> -> vector<8x128xf32>
    %125 = arith.addf %123, %124 : vector<8x128xf32>
    %126 = vector.extract_strided_slice %125 {offsets = [0, 0], sizes = [8, 96], strides = [1, 1]} : vector<8x128xf32> to vector<8x96xf32>
    %127 = arith.negf %126 : vector<8x96xf32>
    %128 = math.exp %127 : vector<8x96xf32>
    %cst_38 = arith.constant 1.000000e+00 : f32
    %129 = vector.broadcast %cst_38 : f32 to vector<8x96xf32>
    %130 = arith.addf %129, %128 : vector<8x96xf32>
    %131 = arith.divf %129, %130 : vector<8x96xf32>
    %132 = vector.extract_strided_slice %125 {offsets = [0, 96], sizes = [8, 32], strides = [1, 1]} : vector<8x128xf32> to vector<8x32xf32>
    %133 = math.tanh %132 : vector<8x32xf32>
    %134 = vector.extract_strided_slice %131 {offsets = [0, 32], sizes = [8, 32], strides = [1, 1]} : vector<8x96xf32> to vector<8x32xf32>
    %135 = arith.mulf %134, %114 : vector<8x32xf32>
    %136 = vector.extract_strided_slice %131 {offsets = [0, 0], sizes = [8, 32], strides = [1, 1]} : vector<8x96xf32> to vector<8x32xf32>
    %137 = arith.mulf %136, %133 : vector<8x32xf32>
    %138 = arith.addf %135, %137 : vector<8x32xf32>
    %139 = vector.extract_strided_slice %131 {offsets = [0, 64], sizes = [8, 32], strides = [1, 1]} : vector<8x96xf32> to vector<8x32xf32>
    %140 = math.tanh %138 : vector<8x32xf32>
    %141 = arith.mulf %139, %140 : vector<8x32xf32>
    %142 = arith.index_cast %121 : i32 to index
    %c0_39 = arith.constant 0 : index
    %143 = vector.load %arg14[%142, %c0_39] : memref<64x32xf32, #tpu.memory_space<vmem>>, vector<8x32xf32>
    tpu.vector_store %arg14[%142, %c0_39], %141 {strides = array<i32>} : memref<64x32xf32, #tpu.memory_space<vmem>>, vector<8x32xf32>,
    %c5_i32 = arith.constant 5 : i32
    %c8_i32_40 = arith.constant 8 : i32
    %144 = arith.muli %c5_i32, %c8_i32_40 : i32
    %145 = tpu.assume_multiple %144, 8 : i32
    %146 = arith.index_cast %145 : i32 to index
    %c0_41 = arith.constant 0 : index
    %147 = vector.load %arg15[%146, %c0_41] : memref<64x128xf32, #tpu.memory_space<vmem>>, vector<8x128xf32>
    %cst_42 = arith.constant dense<0.000000e+00> : vector<8x128xf32>
    %148 = tpu.matmul %141, %1, %cst_42 {dimension_numbers = #tpu.dot_dimension_numbers<[1], [0], [0], [1], [0, 0, 1, 1], [], []>} : vector<8x32xf32>, vector<32x128xf32>, vector<8x128xf32> -> vector<8x128xf32>
    %149 = arith.addf %147, %148 : vector<8x128xf32>
    %150 = vector.extract_strided_slice %149 {offsets = [0, 0], sizes = [8, 96], strides = [1, 1]} : vector<8x128xf32> to vector<8x96xf32>
    %151 = arith.negf %150 : vector<8x96xf32>
    %152 = math.exp %151 : vector<8x96xf32>
    %cst_43 = arith.constant 1.000000e+00 : f32
    %153 = vector.broadcast %cst_43 : f32 to vector<8x96xf32>
    %154 = arith.addf %153, %152 : vector<8x96xf32>
    %155 = arith.divf %153, %154 : vector<8x96xf32>
    %156 = vector.extract_strided_slice %149 {offsets = [0, 96], sizes = [8, 32], strides = [1, 1]} : vector<8x128xf32> to vector<8x32xf32>
    %157 = math.tanh %156 : vector<8x32xf32>
    %158 = vector.extract_strided_slice %155 {offsets = [0, 32], sizes = [8, 32], strides = [1, 1]} : vector<8x96xf32> to vector<8x32xf32>
    %159 = arith.mulf %158, %138 : vector<8x32xf32>
    %160 = vector.extract_strided_slice %155 {offsets = [0, 0], sizes = [8, 32], strides = [1, 1]} : vector<8x96xf32> to vector<8x32xf32>
    %161 = arith.mulf %160, %157 : vector<8x32xf32>
    %162 = arith.addf %159, %161 : vector<8x32xf32>
    %163 = vector.extract_strided_slice %155 {offsets = [0, 64], sizes = [8, 32], strides = [1, 1]} : vector<8x96xf32> to vector<8x32xf32>
    %164 = math.tanh %162 : vector<8x32xf32>
    %165 = arith.mulf %163, %164 : vector<8x32xf32>
    %166 = arith.index_cast %145 : i32 to index
    %c0_44 = arith.constant 0 : index
    %167 = vector.load %arg14[%166, %c0_44] : memref<64x32xf32, #tpu.memory_space<vmem>>, vector<8x32xf32>
    tpu.vector_store %arg14[%166, %c0_44], %165 {strides = array<i32>} : memref<64x32xf32, #tpu.memory_space<vmem>>, vector<8x32xf32>,
    %c6_i32 = arith.constant 6 : i32
    %c8_i32_45 = arith.constant 8 : i32
    %168 = arith.muli %c6_i32, %c8_i32_45 : i32
    %169 = tpu.assume_multiple %168, 8 : i32
    %170 = arith.index_cast %169 : i32 to index
    %c0_46 = arith.constant 0 : index
    %171 = vector.load %arg15[%170, %c0_46] : memref<64x128xf32, #tpu.memory_space<vmem>>, vector<8x128xf32>
    %cst_47 = arith.constant dense<0.000000e+00> : vector<8x128xf32>
    %172 = tpu.matmul %165, %1, %cst_47 {dimension_numbers = #tpu.dot_dimension_numbers<[1], [0], [0], [1], [0, 0, 1, 1], [], []>} : vector<8x32xf32>, vector<32x128xf32>, vector<8x128xf32> -> vector<8x128xf32>
    %173 = arith.addf %171, %172 : vector<8x128xf32>
    %174 = vector.extract_strided_slice %173 {offsets = [0, 0], sizes = [8, 96], strides = [1, 1]} : vector<8x128xf32> to vector<8x96xf32>
    %175 = arith.negf %174 : vector<8x96xf32>
    %176 = math.exp %175 : vector<8x96xf32>
    %cst_48 = arith.constant 1.000000e+00 : f32
    %177 = vector.broadcast %cst_48 : f32 to vector<8x96xf32>
    %178 = arith.addf %177, %176 : vector<8x96xf32>
    %179 = arith.divf %177, %178 : vector<8x96xf32>
    %180 = vector.extract_strided_slice %173 {offsets = [0, 96], sizes = [8, 32], strides = [1, 1]} : vector<8x128xf32> to vector<8x32xf32>
    %181 = math.tanh %180 : vector<8x32xf32>
    %182 = vector.extract_strided_slice %179 {offsets = [0, 32], sizes = [8, 32], strides = [1, 1]} : vector<8x96xf32> to vector<8x32xf32>
    %183 = arith.mulf %182, %162 : vector<8x32xf32>
    %184 = vector.extract_strided_slice %179 {offsets = [0, 0], sizes = [8, 32], strides = [1, 1]} : vector<8x96xf32> to vector<8x32xf32>
    %185 = arith.mulf %184, %181 : vector<8x32xf32>
    %186 = arith.addf %183, %185 : vector<8x32xf32>
    %187 = vector.extract_strided_slice %179 {offsets = [0, 64], sizes = [8, 32], strides = [1, 1]} : vector<8x96xf32> to vector<8x32xf32>
    %188 = math.tanh %186 : vector<8x32xf32>
    %189 = arith.mulf %187, %188 : vector<8x32xf32>
    %190 = arith.index_cast %169 : i32 to index
    %c0_49 = arith.constant 0 : index
    %191 = vector.load %arg14[%190, %c0_49] : memref<64x32xf32, #tpu.memory_space<vmem>>, vector<8x32xf32>
    tpu.vector_store %arg14[%190, %c0_49], %189 {strides = array<i32>} : memref<64x32xf32, #tpu.memory_space<vmem>>, vector<8x32xf32>,
    %c7_i32 = arith.constant 7 : i32
    %c8_i32_50 = arith.constant 8 : i32
    %192 = arith.muli %c7_i32, %c8_i32_50 : i32
    %193 = tpu.assume_multiple %192, 8 : i32
    %194 = arith.index_cast %193 : i32 to index
    %c0_51 = arith.constant 0 : index
    %195 = vector.load %arg15[%194, %c0_51] : memref<64x128xf32, #tpu.memory_space<vmem>>, vector<8x128xf32>
    %cst_52 = arith.constant dense<0.000000e+00> : vector<8x128xf32>
    %196 = tpu.matmul %189, %1, %cst_52 {dimension_numbers = #tpu.dot_dimension_numbers<[1], [0], [0], [1], [0, 0, 1, 1], [], []>} : vector<8x32xf32>, vector<32x128xf32>, vector<8x128xf32> -> vector<8x128xf32>
    %197 = arith.addf %195, %196 : vector<8x128xf32>
    %198 = vector.extract_strided_slice %197 {offsets = [0, 0], sizes = [8, 96], strides = [1, 1]} : vector<8x128xf32> to vector<8x96xf32>
    %199 = arith.negf %198 : vector<8x96xf32>
    %200 = math.exp %199 : vector<8x96xf32>
    %cst_53 = arith.constant 1.000000e+00 : f32
    %201 = vector.broadcast %cst_53 : f32 to vector<8x96xf32>
    %202 = arith.addf %201, %200 : vector<8x96xf32>
    %203 = arith.divf %201, %202 : vector<8x96xf32>
    %204 = vector.extract_strided_slice %197 {offsets = [0, 96], sizes = [8, 32], strides = [1, 1]} : vector<8x128xf32> to vector<8x32xf32>
    %205 = math.tanh %204 : vector<8x32xf32>
    %206 = vector.extract_strided_slice %203 {offsets = [0, 32], sizes = [8, 32], strides = [1, 1]} : vector<8x96xf32> to vector<8x32xf32>
    %207 = arith.mulf %206, %186 : vector<8x32xf32>
    %208 = vector.extract_strided_slice %203 {offsets = [0, 0], sizes = [8, 32], strides = [1, 1]} : vector<8x96xf32> to vector<8x32xf32>
    %209 = arith.mulf %208, %205 : vector<8x32xf32>
    %210 = arith.addf %207, %209 : vector<8x32xf32>
    %211 = vector.extract_strided_slice %203 {offsets = [0, 64], sizes = [8, 32], strides = [1, 1]} : vector<8x96xf32> to vector<8x32xf32>
    %212 = math.tanh %210 : vector<8x32xf32>
    %213 = arith.mulf %211, %212 : vector<8x32xf32>
    %214 = arith.index_cast %193 : i32 to index
    %c0_54 = arith.constant 0 : index
    %215 = vector.load %arg14[%214, %c0_54] : memref<64x32xf32, #tpu.memory_space<vmem>>, vector<8x32xf32>
    tpu.vector_store %arg14[%214, %c0_54], %213 {strides = array<i32>} : memref<64x32xf32, #tpu.memory_space<vmem>>, vector<8x32xf32>,
    %c8_i32_55 = arith.constant 8 : i32
    %c0_56 = arith.constant 0 : index
    %c0_57 = arith.constant 0 : index
    %c0_58 = arith.constant 0 : index
    %216 = vector.load %arg12[%c0_56, %c0_57, %c0_58] : memref<3x8x32xf32, #tpu.memory_space<vmem>>, vector<1x8x32xf32>
    %217 = vector.shape_cast %216 : vector<1x8x32xf32> to vector<8x32xf32>
    %218 = vector.shape_cast %213 : vector<8x32xf32> to vector<1x8x32xf32>
    tpu.vector_store %arg12[%c0_56, %c0_57, %c0_58], %218 {strides = array<i32>} : memref<3x8x32xf32, #tpu.memory_space<vmem>>, vector<1x8x32xf32>,
    %c0_59 = arith.constant 0 : index
    %c0_60 = arith.constant 0 : index
    %c0_61 = arith.constant 0 : index
    %219 = vector.load %arg13[%c0_59, %c0_60, %c0_61] : memref<3x8x32xf32, #tpu.memory_space<vmem>>, vector<1x8x32xf32>
    %220 = vector.shape_cast %219 : vector<1x8x32xf32> to vector<8x32xf32>
    %221 = vector.shape_cast %210 : vector<8x32xf32> to vector<1x8x32xf32>
    tpu.vector_store %arg13[%c0_59, %c0_60, %c0_61], %221 {strides = array<i32>} : memref<3x8x32xf32, #tpu.memory_space<vmem>>, vector<1x8x32xf32>,
    %c1 = arith.constant 1 : index
    %c0_62 = arith.constant 0 : index
    %c0_63 = arith.constant 0 : index
    %222 = vector.load %arg5[%c1, %c0_62, %c0_63] : memref<3x32x128xf32, #tpu.memory_space<vmem>>, vector<1x32x128xf32>
    %223 = vector.shape_cast %222 : vector<1x32x128xf32> to vector<32x128xf32>
    %c0_64 = arith.constant 0 : index
    %c0_65 = arith.constant 0 : index
    %224 = vector.load %arg14[%c0_64, %c0_65] : memref<64x32xf32, #tpu.memory_space<vmem>>, vector<64x32xf32>
    %c0_66 = arith.constant 0 : index
    %c0_67 = arith.constant 0 : index
    %c0_68 = arith.constant 0 : index
    %225 = vector.load %arg4[%c0_66, %c0_67, %c0_68] : memref<2x32x128xf32, #tpu.memory_space<vmem>>, vector<1x32x128xf32>
    %226 = vector.shape_cast %225 : vector<1x32x128xf32> to vector<32x128xf32>
    %cst_69 = arith.constant dense<0.000000e+00> : vector<64x128xf32>
    %227 = tpu.matmul %224, %226, %cst_69 {dimension_numbers = #tpu.dot_dimension_numbers<[1], [0], [0], [1], [0, 0, 1, 1], [], []>} : vector<64x32xf32>, vector<32x128xf32>, vector<64x128xf32> -> vector<64x128xf32>
    %c1_70 = arith.constant 1 : index
    %c0_71 = arith.constant 0 : index
    %c0_72 = arith.constant 0 : index
    %228 = vector.load %arg6[%c1_70, %c0_71, %c0_72] : memref<3x1x128xf32, #tpu.memory_space<vmem>>, vector<1x1x128xf32>
    %229 = vector.shape_cast %228 : vector<1x1x128xf32> to vector<1x128xf32>
    %230 = vector.broadcast %229 : vector<1x128xf32> to vector<64x128xf32>
    %231 = arith.addf %227, %230 : vector<64x128xf32>
    %c0_73 = arith.constant 0 : index
    %c0_74 = arith.constant 0 : index
    %232 = vector.load %arg15[%c0_73, %c0_74] : memref<64x128xf32, #tpu.memory_space<vmem>>, vector<64x128xf32>
    tpu.vector_store %arg15[%c0_73, %c0_74], %231 {strides = array<i32>} : memref<64x128xf32, #tpu.memory_space<vmem>>, vector<64x128xf32>,
    %c1_75 = arith.constant 1 : index
    %c0_76 = arith.constant 0 : index
    %c0_77 = arith.constant 0 : index
    %233 = vector.load %arg1[%c1_75, %c0_76, %c0_77] : memref<3x8x32xf32, #tpu.memory_space<vmem>>, vector<1x8x32xf32>
    %234 = vector.shape_cast %233 : vector<1x8x32xf32> to vector<8x32xf32>
    %c1_78 = arith.constant 1 : index
    %c0_79 = arith.constant 0 : index
    %c0_80 = arith.constant 0 : index
    %235 = vector.load %arg2[%c1_78, %c0_79, %c0_80] : memref<3x8x32xf32, #tpu.memory_space<vmem>>, vector<1x8x32xf32>
    %236 = vector.shape_cast %235 : vector<1x8x32xf32> to vector<8x32xf32>
    %c0_i32_81 = arith.constant 0 : i32
    %c8_i32_82 = arith.constant 8 : i32
    %237 = arith.muli %c0_i32_81, %c8_i32_82 : i32
    %238 = tpu.assume_multiple %237, 8 : i32
    %239 = arith.index_cast %238 : i32 to index
    %c0_83 = arith.constant 0 : index
    %240 = vector.load %arg15[%239, %c0_83] : memref<64x128xf32, #tpu.memory_space<vmem>>, vector<8x128xf32>
    %cst_84 = arith.constant dense<0.000000e+00> : vector<8x128xf32>
    %241 = tpu.matmul %234, %223, %cst_84 {dimension_numbers = #tpu.dot_dimension_numbers<[1], [0], [0], [1], [0, 0, 1, 1], [], []>} : vector<8x32xf32>, vector<32x128xf32>, vector<8x128xf32> -> vector<8x128xf32>
    %242 = arith.addf %240, %241 : vector<8x128xf32>
    %243 = vector.extract_strided_slice %242 {offsets = [0, 0], sizes = [8, 96], strides = [1, 1]} : vector<8x128xf32> to vector<8x96xf32>
    %244 = arith.negf %243 : vector<8x96xf32>
    %245 = math.exp %244 : vector<8x96xf32>
    %cst_85 = arith.constant 1.000000e+00 : f32
    %246 = vector.broadcast %cst_85 : f32 to vector<8x96xf32>
    %247 = arith.addf %246, %245 : vector<8x96xf32>
    %248 = arith.divf %246, %247 : vector<8x96xf32>
    %249 = vector.extract_strided_slice %242 {offsets = [0, 96], sizes = [8, 32], strides = [1, 1]} : vector<8x128xf32> to vector<8x32xf32>
    %250 = math.tanh %249 : vector<8x32xf32>
    %251 = vector.extract_strided_slice %248 {offsets = [0, 32], sizes = [8, 32], strides = [1, 1]} : vector<8x96xf32> to vector<8x32xf32>
    %252 = arith.mulf %251, %236 : vector<8x32xf32>
    %253 = vector.extract_strided_slice %248 {offsets = [0, 0], sizes = [8, 32], strides = [1, 1]} : vector<8x96xf32> to vector<8x32xf32>
    %254 = arith.mulf %253, %250 : vector<8x32xf32>
    %255 = arith.addf %252, %254 : vector<8x32xf32>
    %256 = vector.extract_strided_slice %248 {offsets = [0, 64], sizes = [8, 32], strides = [1, 1]} : vector<8x96xf32> to vector<8x32xf32>
    %257 = math.tanh %255 : vector<8x32xf32>
    %258 = arith.mulf %256, %257 : vector<8x32xf32>
    %259 = arith.index_cast %238 : i32 to index
    %c0_86 = arith.constant 0 : index
    %260 = vector.load %arg14[%259, %c0_86] : memref<64x32xf32, #tpu.memory_space<vmem>>, vector<8x32xf32>
    tpu.vector_store %arg14[%259, %c0_86], %258 {strides = array<i32>} : memref<64x32xf32, #tpu.memory_space<vmem>>, vector<8x32xf32>,
    %c1_i32_87 = arith.constant 1 : i32
    %c8_i32_88 = arith.constant 8 : i32
    %261 = arith.muli %c1_i32_87, %c8_i32_88 : i32
    %262 = tpu.assume_multiple %261, 8 : i32
    %263 = arith.index_cast %262 : i32 to index
    %c0_89 = arith.constant 0 : index
    %264 = vector.load %arg15[%263, %c0_89] : memref<64x128xf32, #tpu.memory_space<vmem>>, vector<8x128xf32>
    %cst_90 = arith.constant dense<0.000000e+00> : vector<8x128xf32>
    %265 = tpu.matmul %258, %223, %cst_90 {dimension_numbers = #tpu.dot_dimension_numbers<[1], [0], [0], [1], [0, 0, 1, 1], [], []>} : vector<8x32xf32>, vector<32x128xf32>, vector<8x128xf32> -> vector<8x128xf32>
    %266 = arith.addf %264, %265 : vector<8x128xf32>
    %267 = vector.extract_strided_slice %266 {offsets = [0, 0], sizes = [8, 96], strides = [1, 1]} : vector<8x128xf32> to vector<8x96xf32>
    %268 = arith.negf %267 : vector<8x96xf32>
    %269 = math.exp %268 : vector<8x96xf32>
    %cst_91 = arith.constant 1.000000e+00 : f32
    %270 = vector.broadcast %cst_91 : f32 to vector<8x96xf32>
    %271 = arith.addf %270, %269 : vector<8x96xf32>
    %272 = arith.divf %270, %271 : vector<8x96xf32>
    %273 = vector.extract_strided_slice %266 {offsets = [0, 96], sizes = [8, 32], strides = [1, 1]} : vector<8x128xf32> to vector<8x32xf32>
    %274 = math.tanh %273 : vector<8x32xf32>
    %275 = vector.extract_strided_slice %272 {offsets = [0, 32], sizes = [8, 32], strides = [1, 1]} : vector<8x96xf32> to vector<8x32xf32>
    %276 = arith.mulf %275, %255 : vector<8x32xf32>
    %277 = vector.extract_strided_slice %272 {offsets = [0, 0], sizes = [8, 32], strides = [1, 1]} : vector<8x96xf32> to vector<8x32xf32>
    %278 = arith.mulf %277, %274 : vector<8x32xf32>
    %279 = arith.addf %276, %278 : vector<8x32xf32>
    %280 = vector.extract_strided_slice %272 {offsets = [0, 64], sizes = [8, 32], strides = [1, 1]} : vector<8x96xf32> to vector<8x32xf32>
    %281 = math.tanh %279 : vector<8x32xf32>
    %282 = arith.mulf %280, %281 : vector<8x32xf32>
    %283 = arith.index_cast %262 : i32 to index
    %c0_92 = arith.constant 0 : index
    %284 = vector.load %arg14[%283, %c0_92] : memref<64x32xf32, #tpu.memory_space<vmem>>, vector<8x32xf32>
    tpu.vector_store %arg14[%283, %c0_92], %282 {strides = array<i32>} : memref<64x32xf32, #tpu.memory_space<vmem>>, vector<8x32xf32>,
    %c2_i32_93 = arith.constant 2 : i32
    %c8_i32_94 = arith.constant 8 : i32
    %285 = arith.muli %c2_i32_93, %c8_i32_94 : i32
    %286 = tpu.assume_multiple %285, 8 : i32
    %287 = arith.index_cast %286 : i32 to index
    %c0_95 = arith.constant 0 : index
    %288 = vector.load %arg15[%287, %c0_95] : memref<64x128xf32, #tpu.memory_space<vmem>>, vector<8x128xf32>
    %cst_96 = arith.constant dense<0.000000e+00> : vector<8x128xf32>
    %289 = tpu.matmul %282, %223, %cst_96 {dimension_numbers = #tpu.dot_dimension_numbers<[1], [0], [0], [1], [0, 0, 1, 1], [], []>} : vector<8x32xf32>, vector<32x128xf32>, vector<8x128xf32> -> vector<8x128xf32>
    %290 = arith.addf %288, %289 : vector<8x128xf32>
    %291 = vector.extract_strided_slice %290 {offsets = [0, 0], sizes = [8, 96], strides = [1, 1]} : vector<8x128xf32> to vector<8x96xf32>
    %292 = arith.negf %291 : vector<8x96xf32>
    %293 = math.exp %292 : vector<8x96xf32>
    %cst_97 = arith.constant 1.000000e+00 : f32
    %294 = vector.broadcast %cst_97 : f32 to vector<8x96xf32>
    %295 = arith.addf %294, %293 : vector<8x96xf32>
    %296 = arith.divf %294, %295 : vector<8x96xf32>
    %297 = vector.extract_strided_slice %290 {offsets = [0, 96], sizes = [8, 32], strides = [1, 1]} : vector<8x128xf32> to vector<8x32xf32>
    %298 = math.tanh %297 : vector<8x32xf32>
    %299 = vector.extract_strided_slice %296 {offsets = [0, 32], sizes = [8, 32], strides = [1, 1]} : vector<8x96xf32> to vector<8x32xf32>
    %300 = arith.mulf %299, %279 : vector<8x32xf32>
    %301 = vector.extract_strided_slice %296 {offsets = [0, 0], sizes = [8, 32], strides = [1, 1]} : vector<8x96xf32> to vector<8x32xf32>
    %302 = arith.mulf %301, %298 : vector<8x32xf32>
    %303 = arith.addf %300, %302 : vector<8x32xf32>
    %304 = vector.extract_strided_slice %296 {offsets = [0, 64], sizes = [8, 32], strides = [1, 1]} : vector<8x96xf32> to vector<8x32xf32>
    %305 = math.tanh %303 : vector<8x32xf32>
    %306 = arith.mulf %304, %305 : vector<8x32xf32>
    %307 = arith.index_cast %286 : i32 to index
    %c0_98 = arith.constant 0 : index
    %308 = vector.load %arg14[%307, %c0_98] : memref<64x32xf32, #tpu.memory_space<vmem>>, vector<8x32xf32>
    tpu.vector_store %arg14[%307, %c0_98], %306 {strides = array<i32>} : memref<64x32xf32, #tpu.memory_space<vmem>>, vector<8x32xf32>,
    %c3_i32_99 = arith.constant 3 : i32
    %c8_i32_100 = arith.constant 8 : i32
    %309 = arith.muli %c3_i32_99, %c8_i32_100 : i32
    %310 = tpu.assume_multiple %309, 8 : i32
    %311 = arith.index_cast %310 : i32 to index
    %c0_101 = arith.constant 0 : index
    %312 = vector.load %arg15[%311, %c0_101] : memref<64x128xf32, #tpu.memory_space<vmem>>, vector<8x128xf32>
    %cst_102 = arith.constant dense<0.000000e+00> : vector<8x128xf32>
    %313 = tpu.matmul %306, %223, %cst_102 {dimension_numbers = #tpu.dot_dimension_numbers<[1], [0], [0], [1], [0, 0, 1, 1], [], []>} : vector<8x32xf32>, vector<32x128xf32>, vector<8x128xf32> -> vector<8x128xf32>
    %314 = arith.addf %312, %313 : vector<8x128xf32>
    %315 = vector.extract_strided_slice %314 {offsets = [0, 0], sizes = [8, 96], strides = [1, 1]} : vector<8x128xf32> to vector<8x96xf32>
    %316 = arith.negf %315 : vector<8x96xf32>
    %317 = math.exp %316 : vector<8x96xf32>
    %cst_103 = arith.constant 1.000000e+00 : f32
    %318 = vector.broadcast %cst_103 : f32 to vector<8x96xf32>
    %319 = arith.addf %318, %317 : vector<8x96xf32>
    %320 = arith.divf %318, %319 : vector<8x96xf32>
    %321 = vector.extract_strided_slice %314 {offsets = [0, 96], sizes = [8, 32], strides = [1, 1]} : vector<8x128xf32> to vector<8x32xf32>
    %322 = math.tanh %321 : vector<8x32xf32>
    %323 = vector.extract_strided_slice %320 {offsets = [0, 32], sizes = [8, 32], strides = [1, 1]} : vector<8x96xf32> to vector<8x32xf32>
    %324 = arith.mulf %323, %303 : vector<8x32xf32>
    %325 = vector.extract_strided_slice %320 {offsets = [0, 0], sizes = [8, 32], strides = [1, 1]} : vector<8x96xf32> to vector<8x32xf32>
    %326 = arith.mulf %325, %322 : vector<8x32xf32>
    %327 = arith.addf %324, %326 : vector<8x32xf32>
    %328 = vector.extract_strided_slice %320 {offsets = [0, 64], sizes = [8, 32], strides = [1, 1]} : vector<8x96xf32> to vector<8x32xf32>
    %329 = math.tanh %327 : vector<8x32xf32>
    %330 = arith.mulf %328, %329 : vector<8x32xf32>
    %331 = arith.index_cast %310 : i32 to index
    %c0_104 = arith.constant 0 : index
    %332 = vector.load %arg14[%331, %c0_104] : memref<64x32xf32, #tpu.memory_space<vmem>>, vector<8x32xf32>
    tpu.vector_store %arg14[%331, %c0_104], %330 {strides = array<i32>} : memref<64x32xf32, #tpu.memory_space<vmem>>, vector<8x32xf32>,
    %c4_i32_105 = arith.constant 4 : i32
    %c8_i32_106 = arith.constant 8 : i32
    %333 = arith.muli %c4_i32_105, %c8_i32_106 : i32
    %334 = tpu.assume_multiple %333, 8 : i32
    %335 = arith.index_cast %334 : i32 to index
    %c0_107 = arith.constant 0 : index
    %336 = vector.load %arg15[%335, %c0_107] : memref<64x128xf32, #tpu.memory_space<vmem>>, vector<8x128xf32>
    %cst_108 = arith.constant dense<0.000000e+00> : vector<8x128xf32>
    %337 = tpu.matmul %330, %223, %cst_108 {dimension_numbers = #tpu.dot_dimension_numbers<[1], [0], [0], [1], [0, 0, 1, 1], [], []>} : vector<8x32xf32>, vector<32x128xf32>, vector<8x128xf32> -> vector<8x128xf32>
    %338 = arith.addf %336, %337 : vector<8x128xf32>
    %339 = vector.extract_strided_slice %338 {offsets = [0, 0], sizes = [8, 96], strides = [1, 1]} : vector<8x128xf32> to vector<8x96xf32>
    %340 = arith.negf %339 : vector<8x96xf32>
    %341 = math.exp %340 : vector<8x96xf32>
    %cst_109 = arith.constant 1.000000e+00 : f32
    %342 = vector.broadcast %cst_109 : f32 to vector<8x96xf32>
    %343 = arith.addf %342, %341 : vector<8x96xf32>
    %344 = arith.divf %342, %343 : vector<8x96xf32>
    %345 = vector.extract_strided_slice %338 {offsets = [0, 96], sizes = [8, 32], strides = [1, 1]} : vector<8x128xf32> to vector<8x32xf32>
    %346 = math.tanh %345 : vector<8x32xf32>
    %347 = vector.extract_strided_slice %344 {offsets = [0, 32], sizes = [8, 32], strides = [1, 1]} : vector<8x96xf32> to vector<8x32xf32>
    %348 = arith.mulf %347, %327 : vector<8x32xf32>
    %349 = vector.extract_strided_slice %344 {offsets = [0, 0], sizes = [8, 32], strides = [1, 1]} : vector<8x96xf32> to vector<8x32xf32>
    %350 = arith.mulf %349, %346 : vector<8x32xf32>
    %351 = arith.addf %348, %350 : vector<8x32xf32>
    %352 = vector.extract_strided_slice %344 {offsets = [0, 64], sizes = [8, 32], strides = [1, 1]} : vector<8x96xf32> to vector<8x32xf32>
    %353 = math.tanh %351 : vector<8x32xf32>
    %354 = arith.mulf %352, %353 : vector<8x32xf32>
    %355 = arith.index_cast %334 : i32 to index
    %c0_110 = arith.constant 0 : index
    %356 = vector.load %arg14[%355, %c0_110] : memref<64x32xf32, #tpu.memory_space<vmem>>, vector<8x32xf32>
    tpu.vector_store %arg14[%355, %c0_110], %354 {strides = array<i32>} : memref<64x32xf32, #tpu.memory_space<vmem>>, vector<8x32xf32>,
    %c5_i32_111 = arith.constant 5 : i32
    %c8_i32_112 = arith.constant 8 : i32
    %357 = arith.muli %c5_i32_111, %c8_i32_112 : i32
    %358 = tpu.assume_multiple %357, 8 : i32
    %359 = arith.index_cast %358 : i32 to index
    %c0_113 = arith.constant 0 : index
    %360 = vector.load %arg15[%359, %c0_113] : memref<64x128xf32, #tpu.memory_space<vmem>>, vector<8x128xf32>
    %cst_114 = arith.constant dense<0.000000e+00> : vector<8x128xf32>
    %361 = tpu.matmul %354, %223, %cst_114 {dimension_numbers = #tpu.dot_dimension_numbers<[1], [0], [0], [1], [0, 0, 1, 1], [], []>} : vector<8x32xf32>, vector<32x128xf32>, vector<8x128xf32> -> vector<8x128xf32>
    %362 = arith.addf %360, %361 : vector<8x128xf32>
    %363 = vector.extract_strided_slice %362 {offsets = [0, 0], sizes = [8, 96], strides = [1, 1]} : vector<8x128xf32> to vector<8x96xf32>
    %364 = arith.negf %363 : vector<8x96xf32>
    %365 = math.exp %364 : vector<8x96xf32>
    %cst_115 = arith.constant 1.000000e+00 : f32
    %366 = vector.broadcast %cst_115 : f32 to vector<8x96xf32>
    %367 = arith.addf %366, %365 : vector<8x96xf32>
    %368 = arith.divf %366, %367 : vector<8x96xf32>
    %369 = vector.extract_strided_slice %362 {offsets = [0, 96], sizes = [8, 32], strides = [1, 1]} : vector<8x128xf32> to vector<8x32xf32>
    %370 = math.tanh %369 : vector<8x32xf32>
    %371 = vector.extract_strided_slice %368 {offsets = [0, 32], sizes = [8, 32], strides = [1, 1]} : vector<8x96xf32> to vector<8x32xf32>
    %372 = arith.mulf %371, %351 : vector<8x32xf32>
    %373 = vector.extract_strided_slice %368 {offsets = [0, 0], sizes = [8, 32], strides = [1, 1]} : vector<8x96xf32> to vector<8x32xf32>
    %374 = arith.mulf %373, %370 : vector<8x32xf32>
    %375 = arith.addf %372, %374 : vector<8x32xf32>
    %376 = vector.extract_strided_slice %368 {offsets = [0, 64], sizes = [8, 32], strides = [1, 1]} : vector<8x96xf32> to vector<8x32xf32>
    %377 = math.tanh %375 : vector<8x32xf32>
    %378 = arith.mulf %376, %377 : vector<8x32xf32>
    %379 = arith.index_cast %358 : i32 to index
    %c0_116 = arith.constant 0 : index
    %380 = vector.load %arg14[%379, %c0_116] : memref<64x32xf32, #tpu.memory_space<vmem>>, vector<8x32xf32>
    tpu.vector_store %arg14[%379, %c0_116], %378 {strides = array<i32>} : memref<64x32xf32, #tpu.memory_space<vmem>>, vector<8x32xf32>,
    %c6_i32_117 = arith.constant 6 : i32
    %c8_i32_118 = arith.constant 8 : i32
    %381 = arith.muli %c6_i32_117, %c8_i32_118 : i32
    %382 = tpu.assume_multiple %381, 8 : i32
    %383 = arith.index_cast %382 : i32 to index
    %c0_119 = arith.constant 0 : index
    %384 = vector.load %arg15[%383, %c0_119] : memref<64x128xf32, #tpu.memory_space<vmem>>, vector<8x128xf32>
    %cst_120 = arith.constant dense<0.000000e+00> : vector<8x128xf32>
    %385 = tpu.matmul %378, %223, %cst_120 {dimension_numbers = #tpu.dot_dimension_numbers<[1], [0], [0], [1], [0, 0, 1, 1], [], []>} : vector<8x32xf32>, vector<32x128xf32>, vector<8x128xf32> -> vector<8x128xf32>
    %386 = arith.addf %384, %385 : vector<8x128xf32>
    %387 = vector.extract_strided_slice %386 {offsets = [0, 0], sizes = [8, 96], strides = [1, 1]} : vector<8x128xf32> to vector<8x96xf32>
    %388 = arith.negf %387 : vector<8x96xf32>
    %389 = math.exp %388 : vector<8x96xf32>
    %cst_121 = arith.constant 1.000000e+00 : f32
    %390 = vector.broadcast %cst_121 : f32 to vector<8x96xf32>
    %391 = arith.addf %390, %389 : vector<8x96xf32>
    %392 = arith.divf %390, %391 : vector<8x96xf32>
    %393 = vector.extract_strided_slice %386 {offsets = [0, 96], sizes = [8, 32], strides = [1, 1]} : vector<8x128xf32> to vector<8x32xf32>
    %394 = math.tanh %393 : vector<8x32xf32>
    %395 = vector.extract_strided_slice %392 {offsets = [0, 32], sizes = [8, 32], strides = [1, 1]} : vector<8x96xf32> to vector<8x32xf32>
    %396 = arith.mulf %395, %375 : vector<8x32xf32>
    %397 = vector.extract_strided_slice %392 {offsets = [0, 0], sizes = [8, 32], strides = [1, 1]} : vector<8x96xf32> to vector<8x32xf32>
    %398 = arith.mulf %397, %394 : vector<8x32xf32>
    %399 = arith.addf %396, %398 : vector<8x32xf32>
    %400 = vector.extract_strided_slice %392 {offsets = [0, 64], sizes = [8, 32], strides = [1, 1]} : vector<8x96xf32> to vector<8x32xf32>
    %401 = math.tanh %399 : vector<8x32xf32>
    %402 = arith.mulf %400, %401 : vector<8x32xf32>
    %403 = arith.index_cast %382 : i32 to index
    %c0_122 = arith.constant 0 : index
    %404 = vector.load %arg14[%403, %c0_122] : memref<64x32xf32, #tpu.memory_space<vmem>>, vector<8x32xf32>
    tpu.vector_store %arg14[%403, %c0_122], %402 {strides = array<i32>} : memref<64x32xf32, #tpu.memory_space<vmem>>, vector<8x32xf32>,
    %c7_i32_123 = arith.constant 7 : i32
    %c8_i32_124 = arith.constant 8 : i32
    %405 = arith.muli %c7_i32_123, %c8_i32_124 : i32
    %406 = tpu.assume_multiple %405, 8 : i32
    %407 = arith.index_cast %406 : i32 to index
    %c0_125 = arith.constant 0 : index
    %408 = vector.load %arg15[%407, %c0_125] : memref<64x128xf32, #tpu.memory_space<vmem>>, vector<8x128xf32>
    %cst_126 = arith.constant dense<0.000000e+00> : vector<8x128xf32>
    %409 = tpu.matmul %402, %223, %cst_126 {dimension_numbers = #tpu.dot_dimension_numbers<[1], [0], [0], [1], [0, 0, 1, 1], [], []>} : vector<8x32xf32>, vector<32x128xf32>, vector<8x128xf32> -> vector<8x128xf32>
    %410 = arith.addf %408, %409 : vector<8x128xf32>
    %411 = vector.extract_strided_slice %410 {offsets = [0, 0], sizes = [8, 96], strides = [1, 1]} : vector<8x128xf32> to vector<8x96xf32>
    %412 = arith.negf %411 : vector<8x96xf32>
    %413 = math.exp %412 : vector<8x96xf32>
    %cst_127 = arith.constant 1.000000e+00 : f32
    %414 = vector.broadcast %cst_127 : f32 to vector<8x96xf32>
    %415 = arith.addf %414, %413 : vector<8x96xf32>
    %416 = arith.divf %414, %415 : vector<8x96xf32>
    %417 = vector.extract_strided_slice %410 {offsets = [0, 96], sizes = [8, 32], strides = [1, 1]} : vector<8x128xf32> to vector<8x32xf32>
    %418 = math.tanh %417 : vector<8x32xf32>
    %419 = vector.extract_strided_slice %416 {offsets = [0, 32], sizes = [8, 32], strides = [1, 1]} : vector<8x96xf32> to vector<8x32xf32>
    %420 = arith.mulf %419, %399 : vector<8x32xf32>
    %421 = vector.extract_strided_slice %416 {offsets = [0, 0], sizes = [8, 32], strides = [1, 1]} : vector<8x96xf32> to vector<8x32xf32>
    %422 = arith.mulf %421, %418 : vector<8x32xf32>
    %423 = arith.addf %420, %422 : vector<8x32xf32>
    %424 = vector.extract_strided_slice %416 {offsets = [0, 64], sizes = [8, 32], strides = [1, 1]} : vector<8x96xf32> to vector<8x32xf32>
    %425 = math.tanh %423 : vector<8x32xf32>
    %426 = arith.mulf %424, %425 : vector<8x32xf32>
    %427 = arith.index_cast %406 : i32 to index
    %c0_128 = arith.constant 0 : index
    %428 = vector.load %arg14[%427, %c0_128] : memref<64x32xf32, #tpu.memory_space<vmem>>, vector<8x32xf32>
    tpu.vector_store %arg14[%427, %c0_128], %426 {strides = array<i32>} : memref<64x32xf32, #tpu.memory_space<vmem>>, vector<8x32xf32>,
    %c8_i32_129 = arith.constant 8 : i32
    %c1_130 = arith.constant 1 : index
    %c0_131 = arith.constant 0 : index
    %c0_132 = arith.constant 0 : index
    %429 = vector.load %arg12[%c1_130, %c0_131, %c0_132] : memref<3x8x32xf32, #tpu.memory_space<vmem>>, vector<1x8x32xf32>
    %430 = vector.shape_cast %429 : vector<1x8x32xf32> to vector<8x32xf32>
    %431 = vector.shape_cast %426 : vector<8x32xf32> to vector<1x8x32xf32>
    tpu.vector_store %arg12[%c1_130, %c0_131, %c0_132], %431 {strides = array<i32>} : memref<3x8x32xf32, #tpu.memory_space<vmem>>, vector<1x8x32xf32>,
    %c1_133 = arith.constant 1 : index
    %c0_134 = arith.constant 0 : index
    %c0_135 = arith.constant 0 : index
    %432 = vector.load %arg13[%c1_133, %c0_134, %c0_135] : memref<3x8x32xf32, #tpu.memory_space<vmem>>, vector<1x8x32xf32>
    %433 = vector.shape_cast %432 : vector<1x8x32xf32> to vector<8x32xf32>
    %434 = vector.shape_cast %423 : vector<8x32xf32> to vector<1x8x32xf32>
    tpu.vector_store %arg13[%c1_133, %c0_134, %c0_135], %434 {strides = array<i32>} : memref<3x8x32xf32, #tpu.memory_space<vmem>>, vector<1x8x32xf32>,
    %c2 = arith.constant 2 : index
    %c0_136 = arith.constant 0 : index
    %c0_137 = arith.constant 0 : index
    %435 = vector.load %arg5[%c2, %c0_136, %c0_137] : memref<3x32x128xf32, #tpu.memory_space<vmem>>, vector<1x32x128xf32>
    %436 = vector.shape_cast %435 : vector<1x32x128xf32> to vector<32x128xf32>
    %c0_138 = arith.constant 0 : index
    %c0_139 = arith.constant 0 : index
    %437 = vector.load %arg14[%c0_138, %c0_139] : memref<64x32xf32, #tpu.memory_space<vmem>>, vector<64x32xf32>
    %c1_140 = arith.constant 1 : index
    %c0_141 = arith.constant 0 : index
    %c0_142 = arith.constant 0 : index
    %438 = vector.load %arg4[%c1_140, %c0_141, %c0_142] : memref<2x32x128xf32, #tpu.memory_space<vmem>>, vector<1x32x128xf32>
    %439 = vector.shape_cast %438 : vector<1x32x128xf32> to vector<32x128xf32>
    %cst_143 = arith.constant dense<0.000000e+00> : vector<64x128xf32>
    %440 = tpu.matmul %437, %439, %cst_143 {dimension_numbers = #tpu.dot_dimension_numbers<[1], [0], [0], [1], [0, 0, 1, 1], [], []>} : vector<64x32xf32>, vector<32x128xf32>, vector<64x128xf32> -> vector<64x128xf32>
    %c2_144 = arith.constant 2 : index
    %c0_145 = arith.constant 0 : index
    %c0_146 = arith.constant 0 : index
    %441 = vector.load %arg6[%c2_144, %c0_145, %c0_146] : memref<3x1x128xf32, #tpu.memory_space<vmem>>, vector<1x1x128xf32>
    %442 = vector.shape_cast %441 : vector<1x1x128xf32> to vector<1x128xf32>
    %443 = vector.broadcast %442 : vector<1x128xf32> to vector<64x128xf32>
    %444 = arith.addf %440, %443 : vector<64x128xf32>
    %c0_147 = arith.constant 0 : index
    %c0_148 = arith.constant 0 : index
    %445 = vector.load %arg15[%c0_147, %c0_148] : memref<64x128xf32, #tpu.memory_space<vmem>>, vector<64x128xf32>
    tpu.vector_store %arg15[%c0_147, %c0_148], %444 {strides = array<i32>} : memref<64x128xf32, #tpu.memory_space<vmem>>, vector<64x128xf32>,
    %c2_149 = arith.constant 2 : index
    %c0_150 = arith.constant 0 : index
    %c0_151 = arith.constant 0 : index
    %446 = vector.load %arg1[%c2_149, %c0_150, %c0_151] : memref<3x8x32xf32, #tpu.memory_space<vmem>>, vector<1x8x32xf32>
    %447 = vector.shape_cast %446 : vector<1x8x32xf32> to vector<8x32xf32>
    %c2_152 = arith.constant 2 : index
    %c0_153 = arith.constant 0 : index
    %c0_154 = arith.constant 0 : index
    %448 = vector.load %arg2[%c2_152, %c0_153, %c0_154] : memref<3x8x32xf32, #tpu.memory_space<vmem>>, vector<1x8x32xf32>
    %449 = vector.shape_cast %448 : vector<1x8x32xf32> to vector<8x32xf32>
    %c0_i32_155 = arith.constant 0 : i32
    %c8_i32_156 = arith.constant 8 : i32
    %450 = arith.muli %c0_i32_155, %c8_i32_156 : i32
    %451 = tpu.assume_multiple %450, 8 : i32
    %452 = arith.index_cast %451 : i32 to index
    %c0_157 = arith.constant 0 : index
    %453 = vector.load %arg15[%452, %c0_157] : memref<64x128xf32, #tpu.memory_space<vmem>>, vector<8x128xf32>
    %cst_158 = arith.constant dense<0.000000e+00> : vector<8x128xf32>
    %454 = tpu.matmul %447, %436, %cst_158 {dimension_numbers = #tpu.dot_dimension_numbers<[1], [0], [0], [1], [0, 0, 1, 1], [], []>} : vector<8x32xf32>, vector<32x128xf32>, vector<8x128xf32> -> vector<8x128xf32>
    %455 = arith.addf %453, %454 : vector<8x128xf32>
    %456 = vector.extract_strided_slice %455 {offsets = [0, 0], sizes = [8, 96], strides = [1, 1]} : vector<8x128xf32> to vector<8x96xf32>
    %457 = arith.negf %456 : vector<8x96xf32>
    %458 = math.exp %457 : vector<8x96xf32>
    %cst_159 = arith.constant 1.000000e+00 : f32
    %459 = vector.broadcast %cst_159 : f32 to vector<8x96xf32>
    %460 = arith.addf %459, %458 : vector<8x96xf32>
    %461 = arith.divf %459, %460 : vector<8x96xf32>
    %462 = vector.extract_strided_slice %455 {offsets = [0, 96], sizes = [8, 32], strides = [1, 1]} : vector<8x128xf32> to vector<8x32xf32>
    %463 = math.tanh %462 : vector<8x32xf32>
    %464 = vector.extract_strided_slice %461 {offsets = [0, 32], sizes = [8, 32], strides = [1, 1]} : vector<8x96xf32> to vector<8x32xf32>
    %465 = arith.mulf %464, %449 : vector<8x32xf32>
    %466 = vector.extract_strided_slice %461 {offsets = [0, 0], sizes = [8, 32], strides = [1, 1]} : vector<8x96xf32> to vector<8x32xf32>
    %467 = arith.mulf %466, %463 : vector<8x32xf32>
    %468 = arith.addf %465, %467 : vector<8x32xf32>
    %469 = vector.extract_strided_slice %461 {offsets = [0, 64], sizes = [8, 32], strides = [1, 1]} : vector<8x96xf32> to vector<8x32xf32>
    %470 = math.tanh %468 : vector<8x32xf32>
    %471 = arith.mulf %469, %470 : vector<8x32xf32>
    %472 = arith.index_cast %451 : i32 to index
    %c0_160 = arith.constant 0 : index
    %473 = vector.load %arg14[%472, %c0_160] : memref<64x32xf32, #tpu.memory_space<vmem>>, vector<8x32xf32>
    tpu.vector_store %arg14[%472, %c0_160], %471 {strides = array<i32>} : memref<64x32xf32, #tpu.memory_space<vmem>>, vector<8x32xf32>,
    %c1_i32_161 = arith.constant 1 : i32
    %c8_i32_162 = arith.constant 8 : i32
    %474 = arith.muli %c1_i32_161, %c8_i32_162 : i32
    %475 = tpu.assume_multiple %474, 8 : i32
    %476 = arith.index_cast %475 : i32 to index
    %c0_163 = arith.constant 0 : index
    %477 = vector.load %arg15[%476, %c0_163] : memref<64x128xf32, #tpu.memory_space<vmem>>, vector<8x128xf32>
    %cst_164 = arith.constant dense<0.000000e+00> : vector<8x128xf32>
    %478 = tpu.matmul %471, %436, %cst_164 {dimension_numbers = #tpu.dot_dimension_numbers<[1], [0], [0], [1], [0, 0, 1, 1], [], []>} : vector<8x32xf32>, vector<32x128xf32>, vector<8x128xf32> -> vector<8x128xf32>
    %479 = arith.addf %477, %478 : vector<8x128xf32>
    %480 = vector.extract_strided_slice %479 {offsets = [0, 0], sizes = [8, 96], strides = [1, 1]} : vector<8x128xf32> to vector<8x96xf32>
    %481 = arith.negf %480 : vector<8x96xf32>
    %482 = math.exp %481 : vector<8x96xf32>
    %cst_165 = arith.constant 1.000000e+00 : f32
    %483 = vector.broadcast %cst_165 : f32 to vector<8x96xf32>
    %484 = arith.addf %483, %482 : vector<8x96xf32>
    %485 = arith.divf %483, %484 : vector<8x96xf32>
    %486 = vector.extract_strided_slice %479 {offsets = [0, 96], sizes = [8, 32], strides = [1, 1]} : vector<8x128xf32> to vector<8x32xf32>
    %487 = math.tanh %486 : vector<8x32xf32>
    %488 = vector.extract_strided_slice %485 {offsets = [0, 32], sizes = [8, 32], strides = [1, 1]} : vector<8x96xf32> to vector<8x32xf32>
    %489 = arith.mulf %488, %468 : vector<8x32xf32>
    %490 = vector.extract_strided_slice %485 {offsets = [0, 0], sizes = [8, 32], strides = [1, 1]} : vector<8x96xf32> to vector<8x32xf32>
    %491 = arith.mulf %490, %487 : vector<8x32xf32>
    %492 = arith.addf %489, %491 : vector<8x32xf32>
    %493 = vector.extract_strided_slice %485 {offsets = [0, 64], sizes = [8, 32], strides = [1, 1]} : vector<8x96xf32> to vector<8x32xf32>
    %494 = math.tanh %492 : vector<8x32xf32>
    %495 = arith.mulf %493, %494 : vector<8x32xf32>
    %496 = arith.index_cast %475 : i32 to index
    %c0_166 = arith.constant 0 : index
    %497 = vector.load %arg14[%496, %c0_166] : memref<64x32xf32, #tpu.memory_space<vmem>>, vector<8x32xf32>
    tpu.vector_store %arg14[%496, %c0_166], %495 {strides = array<i32>} : memref<64x32xf32, #tpu.memory_space<vmem>>, vector<8x32xf32>,
    %c2_i32_167 = arith.constant 2 : i32
    %c8_i32_168 = arith.constant 8 : i32
    %498 = arith.muli %c2_i32_167, %c8_i32_168 : i32
    %499 = tpu.assume_multiple %498, 8 : i32
    %500 = arith.index_cast %499 : i32 to index
    %c0_169 = arith.constant 0 : index
    %501 = vector.load %arg15[%500, %c0_169] : memref<64x128xf32, #tpu.memory_space<vmem>>, vector<8x128xf32>
    %cst_170 = arith.constant dense<0.000000e+00> : vector<8x128xf32>
    %502 = tpu.matmul %495, %436, %cst_170 {dimension_numbers = #tpu.dot_dimension_numbers<[1], [0], [0], [1], [0, 0, 1, 1], [], []>} : vector<8x32xf32>, vector<32x128xf32>, vector<8x128xf32> -> vector<8x128xf32>
    %503 = arith.addf %501, %502 : vector<8x128xf32>
    %504 = vector.extract_strided_slice %503 {offsets = [0, 0], sizes = [8, 96], strides = [1, 1]} : vector<8x128xf32> to vector<8x96xf32>
    %505 = arith.negf %504 : vector<8x96xf32>
    %506 = math.exp %505 : vector<8x96xf32>
    %cst_171 = arith.constant 1.000000e+00 : f32
    %507 = vector.broadcast %cst_171 : f32 to vector<8x96xf32>
    %508 = arith.addf %507, %506 : vector<8x96xf32>
    %509 = arith.divf %507, %508 : vector<8x96xf32>
    %510 = vector.extract_strided_slice %503 {offsets = [0, 96], sizes = [8, 32], strides = [1, 1]} : vector<8x128xf32> to vector<8x32xf32>
    %511 = math.tanh %510 : vector<8x32xf32>
    %512 = vector.extract_strided_slice %509 {offsets = [0, 32], sizes = [8, 32], strides = [1, 1]} : vector<8x96xf32> to vector<8x32xf32>
    %513 = arith.mulf %512, %492 : vector<8x32xf32>
    %514 = vector.extract_strided_slice %509 {offsets = [0, 0], sizes = [8, 32], strides = [1, 1]} : vector<8x96xf32> to vector<8x32xf32>
    %515 = arith.mulf %514, %511 : vector<8x32xf32>
    %516 = arith.addf %513, %515 : vector<8x32xf32>
    %517 = vector.extract_strided_slice %509 {offsets = [0, 64], sizes = [8, 32], strides = [1, 1]} : vector<8x96xf32> to vector<8x32xf32>
    %518 = math.tanh %516 : vector<8x32xf32>
    %519 = arith.mulf %517, %518 : vector<8x32xf32>
    %520 = arith.index_cast %499 : i32 to index
    %c0_172 = arith.constant 0 : index
    %521 = vector.load %arg14[%520, %c0_172] : memref<64x32xf32, #tpu.memory_space<vmem>>, vector<8x32xf32>
    tpu.vector_store %arg14[%520, %c0_172], %519 {strides = array<i32>} : memref<64x32xf32, #tpu.memory_space<vmem>>, vector<8x32xf32>,
    %c3_i32_173 = arith.constant 3 : i32
    %c8_i32_174 = arith.constant 8 : i32
    %522 = arith.muli %c3_i32_173, %c8_i32_174 : i32
    %523 = tpu.assume_multiple %522, 8 : i32
    %524 = arith.index_cast %523 : i32 to index
    %c0_175 = arith.constant 0 : index
    %525 = vector.load %arg15[%524, %c0_175] : memref<64x128xf32, #tpu.memory_space<vmem>>, vector<8x128xf32>
    %cst_176 = arith.constant dense<0.000000e+00> : vector<8x128xf32>
    %526 = tpu.matmul %519, %436, %cst_176 {dimension_numbers = #tpu.dot_dimension_numbers<[1], [0], [0], [1], [0, 0, 1, 1], [], []>} : vector<8x32xf32>, vector<32x128xf32>, vector<8x128xf32> -> vector<8x128xf32>
    %527 = arith.addf %525, %526 : vector<8x128xf32>
    %528 = vector.extract_strided_slice %527 {offsets = [0, 0], sizes = [8, 96], strides = [1, 1]} : vector<8x128xf32> to vector<8x96xf32>
    %529 = arith.negf %528 : vector<8x96xf32>
    %530 = math.exp %529 : vector<8x96xf32>
    %cst_177 = arith.constant 1.000000e+00 : f32
    %531 = vector.broadcast %cst_177 : f32 to vector<8x96xf32>
    %532 = arith.addf %531, %530 : vector<8x96xf32>
    %533 = arith.divf %531, %532 : vector<8x96xf32>
    %534 = vector.extract_strided_slice %527 {offsets = [0, 96], sizes = [8, 32], strides = [1, 1]} : vector<8x128xf32> to vector<8x32xf32>
    %535 = math.tanh %534 : vector<8x32xf32>
    %536 = vector.extract_strided_slice %533 {offsets = [0, 32], sizes = [8, 32], strides = [1, 1]} : vector<8x96xf32> to vector<8x32xf32>
    %537 = arith.mulf %536, %516 : vector<8x32xf32>
    %538 = vector.extract_strided_slice %533 {offsets = [0, 0], sizes = [8, 32], strides = [1, 1]} : vector<8x96xf32> to vector<8x32xf32>
    %539 = arith.mulf %538, %535 : vector<8x32xf32>
    %540 = arith.addf %537, %539 : vector<8x32xf32>
    %541 = vector.extract_strided_slice %533 {offsets = [0, 64], sizes = [8, 32], strides = [1, 1]} : vector<8x96xf32> to vector<8x32xf32>
    %542 = math.tanh %540 : vector<8x32xf32>
    %543 = arith.mulf %541, %542 : vector<8x32xf32>
    %544 = arith.index_cast %523 : i32 to index
    %c0_178 = arith.constant 0 : index
    %545 = vector.load %arg14[%544, %c0_178] : memref<64x32xf32, #tpu.memory_space<vmem>>, vector<8x32xf32>
    tpu.vector_store %arg14[%544, %c0_178], %543 {strides = array<i32>} : memref<64x32xf32, #tpu.memory_space<vmem>>, vector<8x32xf32>,
    %c4_i32_179 = arith.constant 4 : i32
    %c8_i32_180 = arith.constant 8 : i32
    %546 = arith.muli %c4_i32_179, %c8_i32_180 : i32
    %547 = tpu.assume_multiple %546, 8 : i32
    %548 = arith.index_cast %547 : i32 to index
    %c0_181 = arith.constant 0 : index
    %549 = vector.load %arg15[%548, %c0_181] : memref<64x128xf32, #tpu.memory_space<vmem>>, vector<8x128xf32>
    %cst_182 = arith.constant dense<0.000000e+00> : vector<8x128xf32>
    %550 = tpu.matmul %543, %436, %cst_182 {dimension_numbers = #tpu.dot_dimension_numbers<[1], [0], [0], [1], [0, 0, 1, 1], [], []>} : vector<8x32xf32>, vector<32x128xf32>, vector<8x128xf32> -> vector<8x128xf32>
    %551 = arith.addf %549, %550 : vector<8x128xf32>
    %552 = vector.extract_strided_slice %551 {offsets = [0, 0], sizes = [8, 96], strides = [1, 1]} : vector<8x128xf32> to vector<8x96xf32>
    %553 = arith.negf %552 : vector<8x96xf32>
    %554 = math.exp %553 : vector<8x96xf32>
    %cst_183 = arith.constant 1.000000e+00 : f32
    %555 = vector.broadcast %cst_183 : f32 to vector<8x96xf32>
    %556 = arith.addf %555, %554 : vector<8x96xf32>
    %557 = arith.divf %555, %556 : vector<8x96xf32>
    %558 = vector.extract_strided_slice %551 {offsets = [0, 96], sizes = [8, 32], strides = [1, 1]} : vector<8x128xf32> to vector<8x32xf32>
    %559 = math.tanh %558 : vector<8x32xf32>
    %560 = vector.extract_strided_slice %557 {offsets = [0, 32], sizes = [8, 32], strides = [1, 1]} : vector<8x96xf32> to vector<8x32xf32>
    %561 = arith.mulf %560, %540 : vector<8x32xf32>
    %562 = vector.extract_strided_slice %557 {offsets = [0, 0], sizes = [8, 32], strides = [1, 1]} : vector<8x96xf32> to vector<8x32xf32>
    %563 = arith.mulf %562, %559 : vector<8x32xf32>
    %564 = arith.addf %561, %563 : vector<8x32xf32>
    %565 = vector.extract_strided_slice %557 {offsets = [0, 64], sizes = [8, 32], strides = [1, 1]} : vector<8x96xf32> to vector<8x32xf32>
    %566 = math.tanh %564 : vector<8x32xf32>
    %567 = arith.mulf %565, %566 : vector<8x32xf32>
    %568 = arith.index_cast %547 : i32 to index
    %c0_184 = arith.constant 0 : index
    %569 = vector.load %arg14[%568, %c0_184] : memref<64x32xf32, #tpu.memory_space<vmem>>, vector<8x32xf32>
    tpu.vector_store %arg14[%568, %c0_184], %567 {strides = array<i32>} : memref<64x32xf32, #tpu.memory_space<vmem>>, vector<8x32xf32>,
    %c5_i32_185 = arith.constant 5 : i32
    %c8_i32_186 = arith.constant 8 : i32
    %570 = arith.muli %c5_i32_185, %c8_i32_186 : i32
    %571 = tpu.assume_multiple %570, 8 : i32
    %572 = arith.index_cast %571 : i32 to index
    %c0_187 = arith.constant 0 : index
    %573 = vector.load %arg15[%572, %c0_187] : memref<64x128xf32, #tpu.memory_space<vmem>>, vector<8x128xf32>
    %cst_188 = arith.constant dense<0.000000e+00> : vector<8x128xf32>
    %574 = tpu.matmul %567, %436, %cst_188 {dimension_numbers = #tpu.dot_dimension_numbers<[1], [0], [0], [1], [0, 0, 1, 1], [], []>} : vector<8x32xf32>, vector<32x128xf32>, vector<8x128xf32> -> vector<8x128xf32>
    %575 = arith.addf %573, %574 : vector<8x128xf32>
    %576 = vector.extract_strided_slice %575 {offsets = [0, 0], sizes = [8, 96], strides = [1, 1]} : vector<8x128xf32> to vector<8x96xf32>
    %577 = arith.negf %576 : vector<8x96xf32>
    %578 = math.exp %577 : vector<8x96xf32>
    %cst_189 = arith.constant 1.000000e+00 : f32
    %579 = vector.broadcast %cst_189 : f32 to vector<8x96xf32>
    %580 = arith.addf %579, %578 : vector<8x96xf32>
    %581 = arith.divf %579, %580 : vector<8x96xf32>
    %582 = vector.extract_strided_slice %575 {offsets = [0, 96], sizes = [8, 32], strides = [1, 1]} : vector<8x128xf32> to vector<8x32xf32>
    %583 = math.tanh %582 : vector<8x32xf32>
    %584 = vector.extract_strided_slice %581 {offsets = [0, 32], sizes = [8, 32], strides = [1, 1]} : vector<8x96xf32> to vector<8x32xf32>
    %585 = arith.mulf %584, %564 : vector<8x32xf32>
    %586 = vector.extract_strided_slice %581 {offsets = [0, 0], sizes = [8, 32], strides = [1, 1]} : vector<8x96xf32> to vector<8x32xf32>
    %587 = arith.mulf %586, %583 : vector<8x32xf32>
    %588 = arith.addf %585, %587 : vector<8x32xf32>
    %589 = vector.extract_strided_slice %581 {offsets = [0, 64], sizes = [8, 32], strides = [1, 1]} : vector<8x96xf32> to vector<8x32xf32>
    %590 = math.tanh %588 : vector<8x32xf32>
    %591 = arith.mulf %589, %590 : vector<8x32xf32>
    %592 = arith.index_cast %571 : i32 to index
    %c0_190 = arith.constant 0 : index
    %593 = vector.load %arg14[%592, %c0_190] : memref<64x32xf32, #tpu.memory_space<vmem>>, vector<8x32xf32>
    tpu.vector_store %arg14[%592, %c0_190], %591 {strides = array<i32>} : memref<64x32xf32, #tpu.memory_space<vmem>>, vector<8x32xf32>,
    %c6_i32_191 = arith.constant 6 : i32
    %c8_i32_192 = arith.constant 8 : i32
    %594 = arith.muli %c6_i32_191, %c8_i32_192 : i32
    %595 = tpu.assume_multiple %594, 8 : i32
    %596 = arith.index_cast %595 : i32 to index
    %c0_193 = arith.constant 0 : index
    %597 = vector.load %arg15[%596, %c0_193] : memref<64x128xf32, #tpu.memory_space<vmem>>, vector<8x128xf32>
    %cst_194 = arith.constant dense<0.000000e+00> : vector<8x128xf32>
    %598 = tpu.matmul %591, %436, %cst_194 {dimension_numbers = #tpu.dot_dimension_numbers<[1], [0], [0], [1], [0, 0, 1, 1], [], []>} : vector<8x32xf32>, vector<32x128xf32>, vector<8x128xf32> -> vector<8x128xf32>
    %599 = arith.addf %597, %598 : vector<8x128xf32>
    %600 = vector.extract_strided_slice %599 {offsets = [0, 0], sizes = [8, 96], strides = [1, 1]} : vector<8x128xf32> to vector<8x96xf32>
    %601 = arith.negf %600 : vector<8x96xf32>
    %602 = math.exp %601 : vector<8x96xf32>
    %cst_195 = arith.constant 1.000000e+00 : f32
    %603 = vector.broadcast %cst_195 : f32 to vector<8x96xf32>
    %604 = arith.addf %603, %602 : vector<8x96xf32>
    %605 = arith.divf %603, %604 : vector<8x96xf32>
    %606 = vector.extract_strided_slice %599 {offsets = [0, 96], sizes = [8, 32], strides = [1, 1]} : vector<8x128xf32> to vector<8x32xf32>
    %607 = math.tanh %606 : vector<8x32xf32>
    %608 = vector.extract_strided_slice %605 {offsets = [0, 32], sizes = [8, 32], strides = [1, 1]} : vector<8x96xf32> to vector<8x32xf32>
    %609 = arith.mulf %608, %588 : vector<8x32xf32>
    %610 = vector.extract_strided_slice %605 {offsets = [0, 0], sizes = [8, 32], strides = [1, 1]} : vector<8x96xf32> to vector<8x32xf32>
    %611 = arith.mulf %610, %607 : vector<8x32xf32>
    %612 = arith.addf %609, %611 : vector<8x32xf32>
    %613 = vector.extract_strided_slice %605 {offsets = [0, 64], sizes = [8, 32], strides = [1, 1]} : vector<8x96xf32> to vector<8x32xf32>
    %614 = math.tanh %612 : vector<8x32xf32>
    %615 = arith.mulf %613, %614 : vector<8x32xf32>
    %616 = arith.index_cast %595 : i32 to index
    %c0_196 = arith.constant 0 : index
    %617 = vector.load %arg14[%616, %c0_196] : memref<64x32xf32, #tpu.memory_space<vmem>>, vector<8x32xf32>
    tpu.vector_store %arg14[%616, %c0_196], %615 {strides = array<i32>} : memref<64x32xf32, #tpu.memory_space<vmem>>, vector<8x32xf32>,
    %c7_i32_197 = arith.constant 7 : i32
    %c8_i32_198 = arith.constant 8 : i32
    %618 = arith.muli %c7_i32_197, %c8_i32_198 : i32
    %619 = tpu.assume_multiple %618, 8 : i32
    %620 = arith.index_cast %619 : i32 to index
    %c0_199 = arith.constant 0 : index
    %621 = vector.load %arg15[%620, %c0_199] : memref<64x128xf32, #tpu.memory_space<vmem>>, vector<8x128xf32>
    %cst_200 = arith.constant dense<0.000000e+00> : vector<8x128xf32>
    %622 = tpu.matmul %615, %436, %cst_200 {dimension_numbers = #tpu.dot_dimension_numbers<[1], [0], [0], [1], [0, 0, 1, 1], [], []>} : vector<8x32xf32>, vector<32x128xf32>, vector<8x128xf32> -> vector<8x128xf32>
    %623 = arith.addf %621, %622 : vector<8x128xf32>
    %624 = vector.extract_strided_slice %623 {offsets = [0, 0], sizes = [8, 96], strides = [1, 1]} : vector<8x128xf32> to vector<8x96xf32>
    %625 = arith.negf %624 : vector<8x96xf32>
    %626 = math.exp %625 : vector<8x96xf32>
    %cst_201 = arith.constant 1.000000e+00 : f32
    %627 = vector.broadcast %cst_201 : f32 to vector<8x96xf32>
    %628 = arith.addf %627, %626 : vector<8x96xf32>
    %629 = arith.divf %627, %628 : vector<8x96xf32>
    %630 = vector.extract_strided_slice %623 {offsets = [0, 96], sizes = [8, 32], strides = [1, 1]} : vector<8x128xf32> to vector<8x32xf32>
    %631 = math.tanh %630 : vector<8x32xf32>
    %632 = vector.extract_strided_slice %629 {offsets = [0, 32], sizes = [8, 32], strides = [1, 1]} : vector<8x96xf32> to vector<8x32xf32>
    %633 = arith.mulf %632, %612 : vector<8x32xf32>
    %634 = vector.extract_strided_slice %629 {offsets = [0, 0], sizes = [8, 32], strides = [1, 1]} : vector<8x96xf32> to vector<8x32xf32>
    %635 = arith.mulf %634, %631 : vector<8x32xf32>
    %636 = arith.addf %633, %635 : vector<8x32xf32>
    %637 = vector.extract_strided_slice %629 {offsets = [0, 64], sizes = [8, 32], strides = [1, 1]} : vector<8x96xf32> to vector<8x32xf32>
    %638 = math.tanh %636 : vector<8x32xf32>
    %639 = arith.mulf %637, %638 : vector<8x32xf32>
    %640 = arith.index_cast %619 : i32 to index
    %c0_202 = arith.constant 0 : index
    %641 = vector.load %arg14[%640, %c0_202] : memref<64x32xf32, #tpu.memory_space<vmem>>, vector<8x32xf32>
    tpu.vector_store %arg14[%640, %c0_202], %639 {strides = array<i32>} : memref<64x32xf32, #tpu.memory_space<vmem>>, vector<8x32xf32>,
    %c8_i32_203 = arith.constant 8 : i32
    %c2_204 = arith.constant 2 : index
    %c0_205 = arith.constant 0 : index
    %c0_206 = arith.constant 0 : index
    %642 = vector.load %arg12[%c2_204, %c0_205, %c0_206] : memref<3x8x32xf32, #tpu.memory_space<vmem>>, vector<1x8x32xf32>
    %643 = vector.shape_cast %642 : vector<1x8x32xf32> to vector<8x32xf32>
    %644 = vector.shape_cast %639 : vector<8x32xf32> to vector<1x8x32xf32>
    tpu.vector_store %arg12[%c2_204, %c0_205, %c0_206], %644 {strides = array<i32>} : memref<3x8x32xf32, #tpu.memory_space<vmem>>, vector<1x8x32xf32>,
    %c2_207 = arith.constant 2 : index
    %c0_208 = arith.constant 0 : index
    %c0_209 = arith.constant 0 : index
    %645 = vector.load %arg13[%c2_207, %c0_208, %c0_209] : memref<3x8x32xf32, #tpu.memory_space<vmem>>, vector<1x8x32xf32>
    %646 = vector.shape_cast %645 : vector<1x8x32xf32> to vector<8x32xf32>
    %647 = vector.shape_cast %636 : vector<8x32xf32> to vector<1x8x32xf32>
    tpu.vector_store %arg13[%c2_207, %c0_208, %c0_209], %647 {strides = array<i32>} : memref<3x8x32xf32, #tpu.memory_space<vmem>>, vector<1x8x32xf32>,
    %c0_210 = arith.constant 0 : index
    %c0_211 = arith.constant 0 : index
    %648 = vector.load %arg14[%c0_210, %c0_211] : memref<64x32xf32, #tpu.memory_space<vmem>>, vector<64x32xf32>
    %c0_212 = arith.constant 0 : index
    %c0_213 = arith.constant 0 : index
    %649 = vector.load %arg7[%c0_212, %c0_213] : memref<32x16xf32, #tpu.memory_space<vmem>>, vector<32x16xf32>
    %cst_214 = arith.constant dense<0.000000e+00> : vector<64x16xf32>
    %650 = tpu.matmul %648, %649, %cst_214 {dimension_numbers = #tpu.dot_dimension_numbers<[1], [0], [0], [1], [0, 0, 1, 1], [], []>} : vector<64x32xf32>, vector<32x16xf32>, vector<64x16xf32> -> vector<64x16xf32>
    %c0_215 = arith.constant 0 : index
    %c0_216 = arith.constant 0 : index
    %651 = vector.load %arg8[%c0_215, %c0_216] : memref<1x16xf32, #tpu.memory_space<vmem>>, vector<1x16xf32>
    %652 = vector.broadcast %651 : vector<1x16xf32> to vector<64x16xf32>
    %653 = arith.addf %650, %652 : vector<64x16xf32>
    %cst_217 = arith.constant 0.000000e+00 : f32
    %654 = vector.broadcast %cst_217 : f32 to vector<64x16xf32>
    %655 = arith.cmpf ogt, %653, %654 : vector<64x16xf32>
    %cst_218 = arith.constant 0.00999999977 : f32
    %656 = vector.broadcast %cst_218 : f32 to vector<64x16xf32>
    %657 = arith.mulf %656, %653 : vector<64x16xf32>
    %658 = arith.select %655, %653, %657 : vector<64x16xi1>, vector<64x16xf32>
    %c0_219 = arith.constant 0 : index
    %c0_220 = arith.constant 0 : index
    %659 = vector.load %arg9[%c0_219, %c0_220] : memref<1x16xf32, #tpu.memory_space<vmem>>, vector<1x16xf32>
    %660 = vector.broadcast %659 : vector<1x16xf32> to vector<64x16xf32>
    %661 = arith.mulf %658, %660 : vector<64x16xf32>
    %cst_221 = arith.constant dense<0.000000e+00> : vector<64xf32>
    %662 = vector.multi_reduction <add>, %661, %cst_221 [1] : vector<64x16xf32> to vector<64xf32>
    %663 = vector.shape_cast %662 : vector<64xf32> to vector<64x1xf32>
    %c0_222 = arith.constant 0 : index
    %c0_223 = arith.constant 0 : index
    %664 = vector.load %arg10[%c0_222, %c0_223] : memref<1x1xf32, #tpu.memory_space<vmem>>, vector<1x1xf32>
    %665 = vector.broadcast %664 : vector<1x1xf32> to vector<64x1xf32>
    %666 = arith.addf %663, %665 : vector<64x1xf32>
    %c0_224 = arith.constant 0 : index
    %c0_225 = arith.constant 0 : index
    %667 = vector.load %arg11[%c0_224, %c0_225] : memref<64x1xf32, #tpu.memory_space<vmem>>, vector<64x1xf32>
    tpu.vector_store %arg11[%c0_224, %c0_225], %666 {strides = array<i32>} : memref<64x1xf32, #tpu.memory_space<vmem>>, vector<64x1xf32>,
    return
  }
}

</mosaic_0001>

<llo_original>
// kernel: bwlstm3_forward.1
$region0: #{bwlstm3_forward.1}
  #allocation0 [shape = 'u32[]', space=smem, size = 0x4, offset = 0x4, fixed_abs, tag = 'smem constant byte address 0x4 - core index']
  #allocation1 [shape = 'u32[144,128]{1,0:T(1,128)}', space=vmem, size = 0x12000, scoped, tag = 'internal scratch']
  #allocation2 [shape = 'f32[64,32]{1,0:T(8,128)}', space=vmem, size = 0x8000, scoped, tag = 'scratch operand']
  #allocation3 [shape = 'f32[64,128]{1,0:T(8,128)}', space=vmem, size = 0x8000, scoped, tag = 'scratch operand']
  #allocation4 [shape = 'f32[1,1]{1,0:T(1,128)S(1)}', space=vmem, size = 0x200, scoped, tag = 'scoped memory for bwlstm3_forward.1']
  %s0 = inlined_call_operand.vmem [shape: f32[64,2], index: 0, kind: input, shape index: {}]
  %s1 = inlined_call_operand.vmem [shape: f32[3,8,32], index: 1, kind: input, shape index: {}, may-alias: {1,12}]
  %s2 = inlined_call_operand.vmem [shape: f32[3,8,32], index: 2, kind: input, shape index: {}, may-alias: {2,13}]
  %s3 = inlined_call_operand.vmem [shape: f32[2,128], index: 3, kind: input, shape index: {}]
  %s4 = inlined_call_operand.vmem [shape: f32[2,32,128], index: 4, kind: input, shape index: {}]
  %s5 = inlined_call_operand.vmem [shape: f32[3,32,128], index: 5, kind: input, shape index: {}]
  %s6 = inlined_call_operand.vmem [shape: f32[3,1,128], index: 6, kind: input, shape index: {}]
  %s7 = inlined_call_operand.vmem [shape: f32[32,16], index: 7, kind: input, shape index: {}]
  %s8 = inlined_call_operand.vmem [shape: f32[1,16], index: 8, kind: input, shape index: {}]
  %s9 = inlined_call_operand.vmem [shape: f32[1,16], index: 9, kind: input, shape index: {}]
  %s10 = inlined_call_operand.<no memory space> [shape: f32[1,1], index: 10, kind: input, shape index: {}]
  %s11 = inlined_call_operand.vmem [shape: f32[64,1], index: 11, kind: output, shape index: {0}]
  %s12 = inlined_call_operand.vmem [shape: f32[3,8,32], index: 12, kind: output, shape index: {1}, may-alias: {1,12}]
  %s13 = inlined_call_operand.vmem [shape: f32[3,8,32], index: 13, kind: output, shape index: {2}, may-alias: {2,13}]
  %14 = xla_tuple %s11, %s12, %s13
  %s15 = sld [smem:[#allocation0]]
  $region70: #{bwlstm3_forward.1} parent=0
    _
  %s17 = ssub.s32 1, %s15
  %s18 = scalar_select 0, %s17, %s15
  %v19 = vstv %s10
  %20 = vst [vmem:[#allocation4] sm:$0x1] %v19
  // Predicated region
  $region2: #{bwlstm3_forward.1} parent=0 // pred_check
    _
  $region3: #{bwlstm3_forward.1} parent=0 // pred_check_branch
    %22 = sbr.rel (0) target = $region5
  $region4: #{bwlstm3_forward.1} parent=0 // pred_region
    _
  $region5: #{bwlstm3_forward.1} parent=0 // pred_fallthru
    _
  // Predicated region
  $region6: #{bwlstm3_forward.1} parent=0 // pred_check
    _
  $region7: #{bwlstm3_forward.1} parent=0 // pred_check_branch
    %24 = sbr.rel (0) target = $region9
  $region8: #{bwlstm3_forward.1} parent=0 // pred_region
    _
  $region9: #{bwlstm3_forward.1} parent=0 // pred_fallthru
    _
  // Predicated region
  $region10: #{bwlstm3_forward.1} parent=0 // pred_check
    _
  $region11: #{bwlstm3_forward.1} parent=0 // pred_check_branch
    %26 = sbr.rel (0) target = $region13
  $region12: #{bwlstm3_forward.1} parent=0 // pred_region
    _
  $region13: #{bwlstm3_forward.1} parent=0 // pred_fallthru
    _
  // Predicated region
  $region14: #{bwlstm3_forward.1} parent=0 // pred_check
    _
  $region15: #{bwlstm3_forward.1} parent=0 // pred_check_branch
    %28 = sbr.rel (0) target = $region17
  $region16: #{bwlstm3_forward.1} parent=0 // pred_region
    _
  $region17: #{bwlstm3_forward.1} parent=0 // pred_fallthru
    _
  // Predicated region
  $region18: #{bwlstm3_forward.1} parent=0 // pred_check
    _
  $region19: #{bwlstm3_forward.1} parent=0 // pred_check_branch
    %30 = sbr.rel (0) target = $region21
  $region20: #{bwlstm3_forward.1} parent=0 // pred_region
    _
  $region21: #{bwlstm3_forward.1} parent=0 // pred_fallthru
    _
  // Predicated region
  $region22: #{bwlstm3_forward.1} parent=0 // pred_check
    _
  $region23: #{bwlstm3_forward.1} parent=0 // pred_check_branch
    %32 = sbr.rel (0) target = $region25
  $region24: #{bwlstm3_forward.1} parent=0 // pred_region
    _
  $region25: #{bwlstm3_forward.1} parent=0 // pred_fallthru
    _
  // Predicated region
  $region26: #{bwlstm3_forward.1} parent=0 // pred_check
    _
  $region27: #{bwlstm3_forward.1} parent=0 // pred_check_branch
    %34 = sbr.rel (0) target = $region29
  $region28: #{bwlstm3_forward.1} parent=0 // pred_region
    _
  $region29: #{bwlstm3_forward.1} parent=0 // pred_fallthru
    _
  // Predicated region
  $region30: #{bwlstm3_forward.1} parent=0 // pred_check
    _
  $region31: #{bwlstm3_forward.1} parent=0 // pred_check_branch
    %36 = sbr.rel (0) target = $region33
  $region32: #{bwlstm3_forward.1} parent=0 // pred_region
    _
  $region33: #{bwlstm3_forward.1} parent=0 // pred_fallthru
    _
  // Predicated region
  $region34: #{bwlstm3_forward.1} parent=0 // pred_check
    _
  $region35: #{bwlstm3_forward.1} parent=0 // pred_check_branch
    %38 = sbr.rel (0) target = $region37
  $region36: #{bwlstm3_forward.1} parent=0 // pred_region
    _
  $region37: #{bwlstm3_forward.1} parent=0 // pred_fallthru
    _
  // Predicated region
  $region38: #{bwlstm3_forward.1} parent=0 // pred_check
    _
  $region39: #{bwlstm3_forward.1} parent=0 // pred_check_branch
    %40 = sbr.rel (0) target = $region41
  $region40: #{bwlstm3_forward.1} parent=0 // pred_region
    _
  $region41: #{bwlstm3_forward.1} parent=0 // pred_fallthru
    _
  // Predicated region
  $region42: #{bwlstm3_forward.1} parent=0 // pred_check
    _
  $region43: #{bwlstm3_forward.1} parent=0 // pred_check_branch
    %42 = sbr.rel (0) target = $region45
  $region44: #{bwlstm3_forward.1} parent=0 // pred_region
    _
  $region45: #{bwlstm3_forward.1} parent=0 // pred_fallthru
    _
  %v43 = vld [vmem:[%s5] sm:$0xff]
  %v44 = vld [vmem:[%s5 + $0x8] sm:$0xff]
  %v45 = vld [vmem:[%s5 + $0x10] sm:$0xff]
  %v46 = vld [vmem:[%s5 + $0x18] sm:$0xff]
  %v47 = vld [vmem:[%s0] sm:$0xff]
  %v48 = vld [vmem:[%s0 + $0x8] sm:$0xff]
  %v49 = vld [vmem:[%s0 + $0x10] sm:$0xff]
  %v50 = vld [vmem:[%s0 + $0x18] sm:$0xff]
  %v51 = vld [vmem:[%s0 + $0x20] sm:$0xff]
  %v52 = vld [vmem:[%s0 + $0x28] sm:$0xff]
  %v53 = vld [vmem:[%s0 + $0x30] sm:$0xff]
  %v54 = vld [vmem:[%s0 + $0x38] sm:$0xff]
  %v55 = vld [vmem:[%s3] sm:$0x3]
  %57 = vset.pattern.permute.xlu0 0
  %58 = vperm.xlu0 %57, %v47
  %v59 = vpop.permute.xlu0 %58
  %62 = vset.pattern.permute.xlu0 0
  %63 = vperm.xlu0 %62, %v48
  %v64 = vpop.permute.xlu0 %63
  %67 = vset.pattern.permute.xlu0 0
  %68 = vperm.xlu0 %67, %v49
  %v69 = vpop.permute.xlu0 %68
  %72 = vset.pattern.permute.xlu0 0
  %73 = vperm.xlu0 %72, %v50
  %v74 = vpop.permute.xlu0 %73
  %77 = vset.pattern.permute.xlu0 0
  %78 = vperm.xlu0 %77, %v51
  %v79 = vpop.permute.xlu0 %78
  %82 = vset.pattern.permute.xlu0 0
  %83 = vperm.xlu0 %82, %v52
  %v84 = vpop.permute.xlu0 %83
  %87 = vset.pattern.permute.xlu0 0
  %88 = vperm.xlu0 %87, %v53
  %v89 = vpop.permute.xlu0 %88
  %92 = vset.pattern.permute.xlu0 0
  %93 = vperm.xlu0 %92, %v54
  %v94 = vpop.permute.xlu0 %93
  %v96 = vlaneseq
  %v97 = vshrl.u32 %v96, 7
  %v98 = vsub.s32 0, %v97
  %v99 = vrot.slane %v55, %v98
  %v100 = vmul.f32 %v59, %v99
  %v101 = vmul.f32 %v64, %v99
  %v102 = vmul.f32 %v69, %v99
  %v103 = vmul.f32 %v74, %v99
  %v104 = vmul.f32 %v79, %v99
  %v105 = vmul.f32 %v84, %v99
  %v106 = vmul.f32 %v89, %v99
  %v107 = vmul.f32 %v94, %v99
  %108 = vset.pattern.permute.xlu0 1
  %109 = vperm.xlu0 %108, %v47
  %v110 = vpop.permute.xlu0 %109
  %112 = vset.pattern.permute.xlu0 1
  %113 = vperm.xlu0 %112, %v48
  %v114 = vpop.permute.xlu0 %113
  %116 = vset.pattern.permute.xlu0 1
  %117 = vperm.xlu0 %116, %v49
  %v118 = vpop.permute.xlu0 %117
  %120 = vset.pattern.permute.xlu0 1
  %121 = vperm.xlu0 %120, %v50
  %v122 = vpop.permute.xlu0 %121
  %124 = vset.pattern.permute.xlu0 1
  %125 = vperm.xlu0 %124, %v51
  %v126 = vpop.permute.xlu0 %125
  %128 = vset.pattern.permute.xlu0 1
  %129 = vperm.xlu0 %128, %v52
  %v130 = vpop.permute.xlu0 %129
  %132 = vset.pattern.permute.xlu0 1
  %133 = vperm.xlu0 %132, %v53
  %v134 = vpop.permute.xlu0 %133
  %136 = vset.pattern.permute.xlu0 1
  %137 = vperm.xlu0 %136, %v54
  %v138 = vpop.permute.xlu0 %137
  %v140 = vlaneseq
  %v141 = vshrl.u32 %v140, 7
  %v142 = vsub.s32 1, %v141
  %v143 = vrot.slane %v55, %v142
  %v144 = vmul.f32 %v110, %v143
  %v145 = vmul.f32 %v114, %v143
  %v146 = vmul.f32 %v118, %v143
  %v147 = vmul.f32 %v122, %v143
  %v148 = vmul.f32 %v126, %v143
  %v149 = vmul.f32 %v130, %v143
  %v150 = vmul.f32 %v134, %v143
  %v151 = vmul.f32 %v138, %v143
  %v152 = vadd.f32 %v100, %v144
  %v153 = vadd.f32 %v101, %v145
  %v154 = vadd.f32 %v102, %v146
  %v155 = vadd.f32 %v103, %v147
  %v156 = vadd.f32 %v104, %v148
  %v157 = vadd.f32 %v105, %v149
  %v158 = vadd.f32 %v106, %v150
  %v159 = vadd.f32 %v107, %v151
  %v160 = vld [vmem:[%s6] sm:$0x1]
  %v162 = vlaneseq
  %v163 = vshrl.u32 %v162, 7
  %v164 = vsub.s32 0, %v163
  %v165 = vrot.slane %v160, %v164
  %v167 = vadd.f32 %v152, %v165
  %v168 = vadd.f32 %v153, %v165
  %v169 = vadd.f32 %v154, %v165
  %v170 = vadd.f32 %v155, %v165
  %v171 = vadd.f32 %v156, %v165
  %v172 = vadd.f32 %v157, %v165
  %v173 = vadd.f32 %v158, %v165
  %v174 = vadd.f32 %v159, %v165
  %175 = vst [vmem:[#allocation3] sm:$0xff] %v167
  %176 = vst [vmem:[#allocation3 + $0x8] sm:$0xff] %v168
  %177 = vst [vmem:[#allocation3 + $0x10] sm:$0xff] %v169
  %178 = vst [vmem:[#allocation3 + $0x18] sm:$0xff] %v170
  %179 = vst [vmem:[#allocation3 + $0x20] sm:$0xff] %v171
  %180 = vst [vmem:[#allocation3 + $0x28] sm:$0xff] %v172
  %181 = vst [vmem:[#allocation3 + $0x30] sm:$0xff] %v173
  %182 = vst [vmem:[#allocation3 + $0x38] sm:$0xff] %v174
  %v183 = vld [vmem:[%s1] sm:$0xff]
  %v184 = vld [vmem:[%s2] sm:$0xff]
  %v185 = vld [vmem:[#allocation3] sm:$0xff]
  %vm186 = vcmask 261120
  %v188 = vsel %vm186, %v183, 0
  %190 = vmatprep.subr.mxu0 0.0
  %191 = vmatpush1.msra.mxu0 %v43
  %192 = vmatprep.subr.mxu0 0.0
  %193 = vmatpush1.msra.mxu0 %v44
  %194 = vmatprep.subr.mxu0 0.0
  %195 = vmatpush1.msra.mxu0 %v45
  %196 = vmatprep.subr.mxu0 0.0
  %197 = vmatpush1.msra.mxu0 %v46
  %198 = vmatprep.subr.mxu0 0.0
  %199 = vmatpush1.msra.mxu0 0.0
  %200 = vmatprep.subr.mxu0 0.0
  %201 = vmatpush1.msra.mxu0 0.0
  %202 = vmatprep.subr.mxu0 0.0
  %203 = vmatpush1.msra.mxu0 0.0
  %204 = vmatprep.subr.mxu0 0.0
  %205 = vmatpush1.msra.mxu0 0.0
  %206 = vmatprep.subr.mxu0 0.0
  %207 = vmatpush1.msra.mxu0 0.0
  %208 = vmatprep.subr.mxu0 0.0
  %209 = vmatpush1.msra.mxu0 0.0
  %210 = vmatprep.subr.mxu0 0.0
  %211 = vmatpush1.msra.mxu0 0.0
  %212 = vmatprep.subr.mxu0 0.0
  %213 = vmatpush1.msra.mxu0 0.0
  %214 = vmatprep.subr.mxu0 0.0
  %215 = vmatpush1.msra.mxu0 0.0
  %216 = vmatprep.subr.mxu0 0.0
  %217 = vmatpush1.msra.mxu0 0.0
  %218 = vmatprep.subr.mxu0 0.0
  %219 = vmatpush1.msra.mxu0 0.0
  %220 = vmatprep.subr.mxu0 0.0
  %221 = vmatpush1.msra.mxu0 0.0
  %222 = vmatprep.subr.mxu0 0.0
  %223 = vmatpush1.msra.mxu0 0.0
  %224 = vmatprep.subr.mxu0 0.0
  %225 = vmatpush1.msra.mxu0 0.0
  %226 = vmatprep.subr.mxu0 0.0
  %227 = vmatpush1.msra.mxu0 0.0
  %228 = vmatprep.subr.mxu0 0.0
  %229 = vmatpush1.msra.mxu0 0.0
  %230 = vmatprep.subr.mxu0 0.0
  %231 = vmatpush1.msra.mxu0 0.0
  %232 = vmatprep.subr.mxu0 0.0
  %233 = vmatpush1.msra.mxu0 0.0
  %234 = vmatprep.subr.mxu0 0.0
  %235 = vmatpush1.msra.mxu0 0.0
  %236 = vmatprep.subr.mxu0 0.0
  %237 = vmatpush1.msra.mxu0 0.0
  %238 = vmatprep.subr.mxu0 0.0
  %239 = vmatpush1.msra.mxu0 0.0
  %240 = vmatprep.subr.mxu0 0.0
  %241 = vmatpush1.msra.mxu0 0.0
  %242 = vmatprep.subr.mxu0 0.0
  %243 = vmatpush1.msra.mxu0 0.0
  %244 = vmatprep.subr.mxu0 0.0
  %245 = vmatpush1.msra.mxu0 0.0
  %246 = vmatprep.subr.mxu0 0.0
  %247 = vmatpush1.msra.mxu0 0.0
  %248 = vmatprep.subr.mxu0 0.0
  %249 = vmatpush1.msra.mxu0 0.0
  %250 = vmatprep.subr.mxu0 0.0
  %251 = vmatpush1.msra.mxu0 0.0
  %252 = vmatprep.subr.mxu0 0.0
  %253 = vmatpush1.msra.mxu0 0.0
  %254 = vmatprep.mubr.f32.mxu0 0.0
  %255 = vmatmul.mubr.f32.gmra.mrb[0].mxu0 %v188
  %v256 = vpop.f32.mrb[0].mxu0
  %v257 = vadd.f32 0.0, %v256
  %v258 = vpop.f32.mrb[0].mxu0
  %259 = vdwg.mxu0
  %v260 = vadd.f32 %v185, %v257
  %v261 = vxor.u32 %v260, 2147483648
  %v262 = vmul.f32 %v261, 1.442695
  %v263 = vpow.pop %v262
  %v264 = vadd.f32 %v263, 1.0
  %v265 = vrcp.pop %v264
  %v266 = vmul.f32 1.0, %v265
  %v267 = vtanh.pop %v260
  %269 = vrot.lane.b32.xlu0 %v184, 32
  %v270 = vpop.permute.xlu0 %269
  %v272 = vmul.f32 %v266, %v270
  %274 = vrot.lane.b32.xlu0 %v267, 32
  %v275 = vpop.permute.xlu0 %274
  %v277 = vmul.f32 %v266, %v275
  %279 = vrot.lane.b32.xlu0 %v277, 32
  %v280 = vpop.permute.xlu0 %279
  %v282 = vadd.f32 %v272, %v280
  %v283 = vtanh.pop %v282
  %285 = vrot.lane.b32.xlu0 %v283, 32
  %v286 = vpop.permute.xlu0 %285
  %v288 = vmul.f32 %v266, %v286
  %290 = vrot.lane.b32.xlu0 %v288, 64
  %v291 = vpop.permute.xlu0 %290
  %293 = vst.msk [vmem:[#allocation2] sm:$0xff] %vm186, %v291
  %s294 = scalar_lea.vmem [#allocation3], 8
  %v295 = vld [vmem:[%s294] sm:$0xff]
  %v296 = vsel %vm186, %v291, 0
  %298 = vmatprep.subr.mxu0 0.0
  %299 = vmatpush1.msra.mxu0 %v43
  %300 = vmatprep.subr.mxu0 0.0
  %301 = vmatpush1.msra.mxu0 %v44
  %302 = vmatprep.subr.mxu0 0.0
  %303 = vmatpush1.msra.mxu0 %v45
  %304 = vmatprep.subr.mxu0 0.0
  %305 = vmatpush1.msra.mxu0 %v46
  %306 = vmatprep.subr.mxu0 0.0
  %307 = vmatpush1.msra.mxu0 0.0
  %308 = vmatprep.subr.mxu0 0.0
  %309 = vmatpush1.msra.mxu0 0.0
  %310 = vmatprep.subr.mxu0 0.0
  %311 = vmatpush1.msra.mxu0 0.0
  %312 = vmatprep.subr.mxu0 0.0
  %313 = vmatpush1.msra.mxu0 0.0
  %314 = vmatprep.subr.mxu0 0.0
  %315 = vmatpush1.msra.mxu0 0.0
  %316 = vmatprep.subr.mxu0 0.0
  %317 = vmatpush1.msra.mxu0 0.0
  %318 = vmatprep.subr.mxu0 0.0
  %319 = vmatpush1.msra.mxu0 0.0
  %320 = vmatprep.subr.mxu0 0.0
  %321 = vmatpush1.msra.mxu0 0.0
  %322 = vmatprep.subr.mxu0 0.0
  %323 = vmatpush1.msra.mxu0 0.0
  %324 = vmatprep.subr.mxu0 0.0
  %325 = vmatpush1.msra.mxu0 0.0
  %326 = vmatprep.subr.mxu0 0.0
  %327 = vmatpush1.msra.mxu0 0.0
  %328 = vmatprep.subr.mxu0 0.0
  %329 = vmatpush1.msra.mxu0 0.0
  %330 = vmatprep.subr.mxu0 0.0
  %331 = vmatpush1.msra.mxu0 0.0
  %332 = vmatprep.subr.mxu0 0.0
  %333 = vmatpush1.msra.mxu0 0.0
  %334 = vmatprep.subr.mxu0 0.0
  %335 = vmatpush1.msra.mxu0 0.0
  %336 = vmatprep.subr.mxu0 0.0
  %337 = vmatpush1.msra.mxu0 0.0
  %338 = vmatprep.subr.mxu0 0.0
  %339 = vmatpush1.msra.mxu0 0.0
  %340 = vmatprep.subr.mxu0 0.0
  %341 = vmatpush1.msra.mxu0 0.0
  %342 = vmatprep.subr.mxu0 0.0
  %343 = vmatpush1.msra.mxu0 0.0
  %344 = vmatprep.subr.mxu0 0.0
  %345 = vmatpush1.msra.mxu0 0.0
  %346 = vmatprep.subr.mxu0 0.0
  %347 = vmatpush1.msra.mxu0 0.0
  %348 = vmatprep.subr.mxu0 0.0
  %349 = vmatpush1.msra.mxu0 0.0
  %350 = vmatprep.subr.mxu0 0.0
  %351 = vmatpush1.msra.mxu0 0.0
  %352 = vmatprep.subr.mxu0 0.0
  %353 = vmatpush1.msra.mxu0 0.0
  %354 = vmatprep.subr.mxu0 0.0
  %355 = vmatpush1.msra.mxu0 0.0
  %356 = vmatprep.subr.mxu0 0.0
  %357 = vmatpush1.msra.mxu0 0.0
  %358 = vmatprep.subr.mxu0 0.0
  %359 = vmatpush1.msra.mxu0 0.0
  %360 = vmatprep.subr.mxu0 0.0
  %361 = vmatpush1.msra.mxu0 0.0
  %362 = vmatprep.mubr.f32.mxu0 0.0
  %363 = vmatmul.mubr.f32.gmra.mrb[0].mxu0 %v296
  %v364 = vpop.f32.mrb[0].mxu0
  %v365 = vadd.f32 0.0, %v364
  %v366 = vpop.f32.mrb[0].mxu0
  %367 = vdwg.mxu0
  %v368 = vadd.f32 %v295, %v365
  %v369 = vxor.u32 %v368, 2147483648
  %v370 = vmul.f32 %v369, 1.442695
  %v371 = vpow.pop %v370
  %v372 = vadd.f32 %v371, 1.0
  %v373 = vrcp.pop %v372
  %v374 = vmul.f32 1.0, %v373
  %v375 = vtanh.pop %v368
  %v376 = vmul.f32 %v374, %v282
  %378 = vrot.lane.b32.xlu0 %v375, 32
  %v379 = vpop.permute.xlu0 %378
  %v381 = vmul.f32 %v374, %v379
  %383 = vrot.lane.b32.xlu0 %v381, 32
  %v384 = vpop.permute.xlu0 %383
  %v386 = vadd.f32 %v376, %v384
  %v387 = vtanh.pop %v386
  %389 = vrot.lane.b32.xlu0 %v387, 32
  %v390 = vpop.permute.xlu0 %389
  %v392 = vmul.f32 %v374, %v390
  %394 = vrot.lane.b32.xlu0 %v392, 64
  %v395 = vpop.permute.xlu0 %394
  %s397 = scalar_lea.vmem [#allocation2], 8
  %398 = vst.msk [vmem:[%s397] sm:$0xff] %vm186, %v395
  %s399 = scalar_lea.vmem [#allocation3], 16
  %v400 = vld [vmem:[%s399] sm:$0xff]
  %v401 = vsel %vm186, %v395, 0
  %403 = vmatprep.subr.mxu0 0.0
  %404 = vmatpush1.msra.mxu0 %v43
  %405 = vmatprep.subr.mxu0 0.0
  %406 = vmatpush1.msra.mxu0 %v44
  %407 = vmatprep.subr.mxu0 0.0
  %408 = vmatpush1.msra.mxu0 %v45
  %409 = vmatprep.subr.mxu0 0.0
  %410 = vmatpush1.msra.mxu0 %v46
  %411 = vmatprep.subr.mxu0 0.0
  %412 = vmatpush1.msra.mxu0 0.0
  %413 = vmatprep.subr.mxu0 0.0
  %414 = vmatpush1.msra.mxu0 0.0
  %415 = vmatprep.subr.mxu0 0.0
  %416 = vmatpush1.msra.mxu0 0.0
  %417 = vmatprep.subr.mxu0 0.0
  %418 = vmatpush1.msra.mxu0 0.0
  %419 = vmatprep.subr.mxu0 0.0
  %420 = vmatpush1.msra.mxu0 0.0
  %421 = vmatprep.subr.mxu0 0.0
  %422 = vmatpush1.msra.mxu0 0.0
  %423 = vmatprep.subr.mxu0 0.0
  %424 = vmatpush1.msra.mxu0 0.0
  %425 = vmatprep.subr.mxu0 0.0
  %426 = vmatpush1.msra.mxu0 0.0
  %427 = vmatprep.subr.mxu0 0.0
  %428 = vmatpush1.msra.mxu0 0.0
  %429 = vmatprep.subr.mxu0 0.0
  %430 = vmatpush1.msra.mxu0 0.0
  %431 = vmatprep.subr.mxu0 0.0
  %432 = vmatpush1.msra.mxu0 0.0
  %433 = vmatprep.subr.mxu0 0.0
  %434 = vmatpush1.msra.mxu0 0.0
  %435 = vmatprep.subr.mxu0 0.0
  %436 = vmatpush1.msra.mxu0 0.0
  %437 = vmatprep.subr.mxu0 0.0
  %438 = vmatpush1.msra.mxu0 0.0
  %439 = vmatprep.subr.mxu0 0.0
  %440 = vmatpush1.msra.mxu0 0.0
  %441 = vmatprep.subr.mxu0 0.0
  %442 = vmatpush1.msra.mxu0 0.0
  %443 = vmatprep.subr.mxu0 0.0
  %444 = vmatpush1.msra.mxu0 0.0
  %445 = vmatprep.subr.mxu0 0.0
  %446 = vmatpush1.msra.mxu0 0.0
  %447 = vmatprep.subr.mxu0 0.0
  %448 = vmatpush1.msra.mxu0 0.0
  %449 = vmatprep.subr.mxu0 0.0
  %450 = vmatpush1.msra.mxu0 0.0
  %451 = vmatprep.subr.mxu0 0.0
  %452 = vmatpush1.msra.mxu0 0.0
  %453 = vmatprep.subr.mxu0 0.0
  %454 = vmatpush1.msra.mxu0 0.0
  %455 = vmatprep.subr.mxu0 0.0
  %456 = vmatpush1.msra.mxu0 0.0
  %457 = vmatprep.subr.mxu0 0.0
  %458 = vmatpush1.msra.mxu0 0.0
  %459 = vmatprep.subr.mxu0 0.0
  %460 = vmatpush1.msra.mxu0 0.0
  %461 = vmatprep.subr.mxu0 0.0
  %462 = vmatpush1.msra.mxu0 0.0
  %463 = vmatprep.subr.mxu0 0.0
  %464 = vmatpush1.msra.mxu0 0.0
  %465 = vmatprep.subr.mxu0 0.0
  %466 = vmatpush1.msra.mxu0 0.0
  %467 = vmatprep.mubr.f32.mxu0 0.0
  %468 = vmatmul.mubr.f32.gmra.mrb[0].mxu0 %v401
  %v469 = vpop.f32.mrb[0].mxu0
  %v470 = vadd.f32 0.0, %v469
  %v471 = vpop.f32.mrb[0].mxu0
  %472 = vdwg.mxu0
  %v473 = vadd.f32 %v400, %v470
  %v474 = vxor.u32 %v473, 2147483648
  %v475 = vmul.f32 %v474, 1.442695
  %v476 = vpow.pop %v475
  %v477 = vadd.f32 %v476, 1.0
  %v478 = vrcp.pop %v477
  %v479 = vmul.f32 1.0, %v478
  %v480 = vtanh.pop %v473
  %v481 = vmul.f32 %v479, %v386
  %483 = vrot.lane.b32.xlu0 %v480, 32
  %v484 = vpop.permute.xlu0 %483
  %v486 = vmul.f32 %v479, %v484
  %488 = vrot.lane.b32.xlu0 %v486, 32
  %v489 = vpop.permute.xlu0 %488
  %v491 = vadd.f32 %v481, %v489
  %v492 = vtanh.pop %v491
  %494 = vrot.lane.b32.xlu0 %v492, 32
  %v495 = vpop.permute.xlu0 %494
  %v497 = vmul.f32 %v479, %v495
  %499 = vrot.lane.b32.xlu0 %v497, 64
  %v500 = vpop.permute.xlu0 %499
  %s502 = scalar_lea.vmem [#allocation2], 16
  %503 = vst.msk [vmem:[%s502] sm:$0xff] %vm186, %v500
  %s504 = scalar_lea.vmem [#allocation3], 24
  %v505 = vld [vmem:[%s504] sm:$0xff]
  %v506 = vsel %vm186, %v500, 0
  %508 = vmatprep.subr.mxu0 0.0
  %509 = vmatpush1.msra.mxu0 %v43
  %510 = vmatprep.subr.mxu0 0.0
  %511 = vmatpush1.msra.mxu0 %v44
  %512 = vmatprep.subr.mxu0 0.0
  %513 = vmatpush1.msra.mxu0 %v45
  %514 = vmatprep.subr.mxu0 0.0
  %515 = vmatpush1.msra.mxu0 %v46
  %516 = vmatprep.subr.mxu0 0.0
  %517 = vmatpush1.msra.mxu0 0.0
  %518 = vmatprep.subr.mxu0 0.0
  %519 = vmatpush1.msra.mxu0 0.0
  %520 = vmatprep.subr.mxu0 0.0
  %521 = vmatpush1.msra.mxu0 0.0
  %522 = vmatprep.subr.mxu0 0.0
  %523 = vmatpush1.msra.mxu0 0.0
  %524 = vmatprep.subr.mxu0 0.0
  %525 = vmatpush1.msra.mxu0 0.0
  %526 = vmatprep.subr.mxu0 0.0
  %527 = vmatpush1.msra.mxu0 0.0
  %528 = vmatprep.subr.mxu0 0.0
  %529 = vmatpush1.msra.mxu0 0.0
  %530 = vmatprep.subr.mxu0 0.0
  %531 = vmatpush1.msra.mxu0 0.0
  %532 = vmatprep.subr.mxu0 0.0
  %533 = vmatpush1.msra.mxu0 0.0
  %534 = vmatprep.subr.mxu0 0.0
  %535 = vmatpush1.msra.mxu0 0.0
  %536 = vmatprep.subr.mxu0 0.0
  %537 = vmatpush1.msra.mxu0 0.0
  %538 = vmatprep.subr.mxu0 0.0
  %539 = vmatpush1.msra.mxu0 0.0
  %540 = vmatprep.subr.mxu0 0.0
  %541 = vmatpush1.msra.mxu0 0.0
  %542 = vmatprep.subr.mxu0 0.0
  %543 = vmatpush1.msra.mxu0 0.0
  %544 = vmatprep.subr.mxu0 0.0
  %545 = vmatpush1.msra.mxu0 0.0
  %546 = vmatprep.subr.mxu0 0.0
  %547 = vmatpush1.msra.mxu0 0.0
  %548 = vmatprep.subr.mxu0 0.0
  %549 = vmatpush1.msra.mxu0 0.0
  %550 = vmatprep.subr.mxu0 0.0
  %551 = vmatpush1.msra.mxu0 0.0
  %552 = vmatprep.subr.mxu0 0.0
  %553 = vmatpush1.msra.mxu0 0.0
  %554 = vmatprep.subr.mxu0 0.0
  %555 = vmatpush1.msra.mxu0 0.0
  %556 = vmatprep.subr.mxu0 0.0
  %557 = vmatpush1.msra.mxu0 0.0
  %558 = vmatprep.subr.mxu0 0.0
  %559 = vmatpush1.msra.mxu0 0.0
  %560 = vmatprep.subr.mxu0 0.0
  %561 = vmatpush1.msra.mxu0 0.0
  %562 = vmatprep.subr.mxu0 0.0
  %563 = vmatpush1.msra.mxu0 0.0
  %564 = vmatprep.subr.mxu0 0.0
  %565 = vmatpush1.msra.mxu0 0.0
  %566 = vmatprep.subr.mxu0 0.0
  %567 = vmatpush1.msra.mxu0 0.0
  %568 = vmatprep.subr.mxu0 0.0
  %569 = vmatpush1.msra.mxu0 0.0
  %570 = vmatprep.subr.mxu0 0.0
  %571 = vmatpush1.msra.mxu0 0.0
  %572 = vmatprep.mubr.f32.mxu0 0.0
  %573 = vmatmul.mubr.f32.gmra.mrb[0].mxu0 %v506
  %v574 = vpop.f32.mrb[0].mxu0
  %v575 = vadd.f32 0.0, %v574
  %v576 = vpop.f32.mrb[0].mxu0
  %577 = vdwg.mxu0
  %v578 = vadd.f32 %v505, %v575
  %v579 = vxor.u32 %v578, 2147483648
  %v580 = vmul.f32 %v579, 1.442695
  %v581 = vpow.pop %v580
  %v582 = vadd.f32 %v581, 1.0
  %v583 = vrcp.pop %v582
  %v584 = vmul.f32 1.0, %v583
  %v585 = vtanh.pop %v578
  %v586 = vmul.f32 %v584, %v491
  %588 = vrot.lane.b32.xlu0 %v585, 32
  %v589 = vpop.permute.xlu0 %588
  %v591 = vmul.f32 %v584, %v589
  %593 = vrot.lane.b32.xlu0 %v591, 32
  %v594 = vpop.permute.xlu0 %593
  %v596 = vadd.f32 %v586, %v594
  %v597 = vtanh.pop %v596
  %599 = vrot.lane.b32.xlu0 %v597, 32
  %v600 = vpop.permute.xlu0 %599
  %v602 = vmul.f32 %v584, %v600
  %604 = vrot.lane.b32.xlu0 %v602, 64
  %v605 = vpop.permute.xlu0 %604
  %s607 = scalar_lea.vmem [#allocation2], 24
  %608 = vst.msk [vmem:[%s607] sm:$0xff] %vm186, %v605
  %s609 = scalar_lea.vmem [#allocation3], 32
  %v610 = vld [vmem:[%s609] sm:$0xff]
  %v611 = vsel %vm186, %v605, 0
  %613 = vmatprep.subr.mxu0 0.0
  %614 = vmatpush1.msra.mxu0 %v43
  %615 = vmatprep.subr.mxu0 0.0
  %616 = vmatpush1.msra.mxu0 %v44
  %617 = vmatprep.subr.mxu0 0.0
  %618 = vmatpush1.msra.mxu0 %v45
  %619 = vmatprep.subr.mxu0 0.0
  %620 = vmatpush1.msra.mxu0 %v46
  %621 = vmatprep.subr.mxu0 0.0
  %622 = vmatpush1.msra.mxu0 0.0
  %623 = vmatprep.subr.mxu0 0.0
  %624 = vmatpush1.msra.mxu0 0.0
  %625 = vmatprep.subr.mxu0 0.0
  %626 = vmatpush1.msra.mxu0 0.0
  %627 = vmatprep.subr.mxu0 0.0
  %628 = vmatpush1.msra.mxu0 0.0
  %629 = vmatprep.subr.mxu0 0.0
  %630 = vmatpush1.msra.mxu0 0.0
  %631 = vmatprep.subr.mxu0 0.0
  %632 = vmatpush1.msra.mxu0 0.0
  %633 = vmatprep.subr.mxu0 0.0
  %634 = vmatpush1.msra.mxu0 0.0
  %635 = vmatprep.subr.mxu0 0.0
  %636 = vmatpush1.msra.mxu0 0.0
  %637 = vmatprep.subr.mxu0 0.0
  %638 = vmatpush1.msra.mxu0 0.0
  %639 = vmatprep.subr.mxu0 0.0
  %640 = vmatpush1.msra.mxu0 0.0
  %641 = vmatprep.subr.mxu0 0.0
  %642 = vmatpush1.msra.mxu0 0.0
  %643 = vmatprep.subr.mxu0 0.0
  %644 = vmatpush1.msra.mxu0 0.0
  %645 = vmatprep.subr.mxu0 0.0
  %646 = vmatpush1.msra.mxu0 0.0
  %647 = vmatprep.subr.mxu0 0.0
  %648 = vmatpush1.msra.mxu0 0.0
  %649 = vmatprep.subr.mxu0 0.0
  %650 = vmatpush1.msra.mxu0 0.0
  %651 = vmatprep.subr.mxu0 0.0
  %652 = vmatpush1.msra.mxu0 0.0
  %653 = vmatprep.subr.mxu0 0.0
  %654 = vmatpush1.msra.mxu0 0.0
  %655 = vmatprep.subr.mxu0 0.0
  %656 = vmatpush1.msra.mxu0 0.0
  %657 = vmatprep.subr.mxu0 0.0
  %658 = vmatpush1.msra.mxu0 0.0
  %659 = vmatprep.subr.mxu0 0.0
  %660 = vmatpush1.msra.mxu0 0.0
  %661 = vmatprep.subr.mxu0 0.0
  %662 = vmatpush1.msra.mxu0 0.0
  %663 = vmatprep.subr.mxu0 0.0
  %664 = vmatpush1.msra.mxu0 0.0
  %665 = vmatprep.subr.mxu0 0.0
  %666 = vmatpush1.msra.mxu0 0.0
  %667 = vmatprep.subr.mxu0 0.0
  %668 = vmatpush1.msra.mxu0 0.0
  %669 = vmatprep.subr.mxu0 0.0
  %670 = vmatpush1.msra.mxu0 0.0
  %671 = vmatprep.subr.mxu0 0.0
  %672 = vmatpush1.msra.mxu0 0.0
  %673 = vmatprep.subr.mxu0 0.0
  %674 = vmatpush1.msra.mxu0 0.0
  %675 = vmatprep.subr.mxu0 0.0
  %676 = vmatpush1.msra.mxu0 0.0
  %677 = vmatprep.mubr.f32.mxu0 0.0
  %678 = vmatmul.mubr.f32.gmra.mrb[0].mxu0 %v611
  %v679 = vpop.f32.mrb[0].mxu0
  %v680 = vadd.f32 0.0, %v679
  %v681 = vpop.f32.mrb[0].mxu0
  %682 = vdwg.mxu0
  %v683 = vadd.f32 %v610, %v680
  %v684 = vxor.u32 %v683, 2147483648
  %v685 = vmul.f32 %v684, 1.442695
  %v686 = vpow.pop %v685
  %v687 = vadd.f32 %v686, 1.0
  %v688 = vrcp.pop %v687
  %v689 = vmul.f32 1.0, %v688
  %v690 = vtanh.pop %v683
  %v691 = vmul.f32 %v689, %v596
  %693 = vrot.lane.b32.xlu0 %v690, 32
  %v694 = vpop.permute.xlu0 %693
  %v696 = vmul.f32 %v689, %v694
  %698 = vrot.lane.b32.xlu0 %v696, 32
  %v699 = vpop.permute.xlu0 %698
  %v701 = vadd.f32 %v691, %v699
  %v702 = vtanh.pop %v701
  %704 = vrot.lane.b32.xlu0 %v702, 32
  %v705 = vpop.permute.xlu0 %704
  %v707 = vmul.f32 %v689, %v705
  %709 = vrot.lane.b32.xlu0 %v707, 64
  %v710 = vpop.permute.xlu0 %709
  %s712 = scalar_lea.vmem [#allocation2], 32
  %713 = vst.msk [vmem:[%s712] sm:$0xff] %vm186, %v710
  %s714 = scalar_lea.vmem [#allocation3], 40
  %v715 = vld [vmem:[%s714] sm:$0xff]
  %v716 = vsel %vm186, %v710, 0
  %718 = vmatprep.subr.mxu0 0.0
  %719 = vmatpush1.msra.mxu0 %v43
  %720 = vmatprep.subr.mxu0 0.0
  %721 = vmatpush1.msra.mxu0 %v44
  %722 = vmatprep.subr.mxu0 0.0
  %723 = vmatpush1.msra.mxu0 %v45
  %724 = vmatprep.subr.mxu0 0.0
  %725 = vmatpush1.msra.mxu0 %v46
  %726 = vmatprep.subr.mxu0 0.0
  %727 = vmatpush1.msra.mxu0 0.0
  %728 = vmatprep.subr.mxu0 0.0
  %729 = vmatpush1.msra.mxu0 0.0
  %730 = vmatprep.subr.mxu0 0.0
  %731 = vmatpush1.msra.mxu0 0.0
  %732 = vmatprep.subr.mxu0 0.0
  %733 = vmatpush1.msra.mxu0 0.0
  %734 = vmatprep.subr.mxu0 0.0
  %735 = vmatpush1.msra.mxu0 0.0
  %736 = vmatprep.subr.mxu0 0.0
  %737 = vmatpush1.msra.mxu0 0.0
  %738 = vmatprep.subr.mxu0 0.0
  %739 = vmatpush1.msra.mxu0 0.0
  %740 = vmatprep.subr.mxu0 0.0
  %741 = vmatpush1.msra.mxu0 0.0
  %742 = vmatprep.subr.mxu0 0.0
  %743 = vmatpush1.msra.mxu0 0.0
  %744 = vmatprep.subr.mxu0 0.0
  %745 = vmatpush1.msra.mxu0 0.0
  %746 = vmatprep.subr.mxu0 0.0
  %747 = vmatpush1.msra.mxu0 0.0
  %748 = vmatprep.subr.mxu0 0.0
  %749 = vmatpush1.msra.mxu0 0.0
  %750 = vmatprep.subr.mxu0 0.0
  %751 = vmatpush1.msra.mxu0 0.0
  %752 = vmatprep.subr.mxu0 0.0
  %753 = vmatpush1.msra.mxu0 0.0
  %754 = vmatprep.subr.mxu0 0.0
  %755 = vmatpush1.msra.mxu0 0.0
  %756 = vmatprep.subr.mxu0 0.0
  %757 = vmatpush1.msra.mxu0 0.0
  %758 = vmatprep.subr.mxu0 0.0
  %759 = vmatpush1.msra.mxu0 0.0
  %760 = vmatprep.subr.mxu0 0.0
  %761 = vmatpush1.msra.mxu0 0.0
  %762 = vmatprep.subr.mxu0 0.0
  %763 = vmatpush1.msra.mxu0 0.0
  %764 = vmatprep.subr.mxu0 0.0
  %765 = vmatpush1.msra.mxu0 0.0
  %766 = vmatprep.subr.mxu0 0.0
  %767 = vmatpush1.msra.mxu0 0.0
  %768 = vmatprep.subr.mxu0 0.0
  %769 = vmatpush1.msra.mxu0 0.0
  %770 = vmatprep.subr.mxu0 0.0
  %771 = vmatpush1.msra.mxu0 0.0
  %772 = vmatprep.subr.mxu0 0.0
  %773 = vmatpush1.msra.mxu0 0.0
  %774 = vmatprep.subr.mxu0 0.0
  %775 = vmatpush1.msra.mxu0 0.0
  %776 = vmatprep.subr.mxu0 0.0
  %777 = vmatpush1.msra.mxu0 0.0
  %778 = vmatprep.subr.mxu0 0.0
  %779 = vmatpush1.msra.mxu0 0.0
  %780 = vmatprep.subr.mxu0 0.0
  %781 = vmatpush1.msra.mxu0 0.0
  %782 = vmatprep.mubr.f32.mxu0 0.0
  %783 = vmatmul.mubr.f32.gmra.mrb[0].mxu0 %v716
  %v784 = vpop.f32.mrb[0].mxu0
  %v785 = vadd.f32 0.0, %v784
  %v786 = vpop.f32.mrb[0].mxu0
  %787 = vdwg.mxu0
  %v788 = vadd.f32 %v715, %v785
  %v789 = vxor.u32 %v788, 2147483648
  %v790 = vmul.f32 %v789, 1.442695
  %v791 = vpow.pop %v790
  %v792 = vadd.f32 %v791, 1.0
  %v793 = vrcp.pop %v792
  %v794 = vmul.f32 1.0, %v793
  %v795 = vtanh.pop %v788
  %v796 = vmul.f32 %v794, %v701
  %798 = vrot.lane.b32.xlu0 %v795, 32
  %v799 = vpop.permute.xlu0 %798
  %v801 = vmul.f32 %v794, %v799
  %803 = vrot.lane.b32.xlu0 %v801, 32
  %v804 = vpop.permute.xlu0 %803
  %v806 = vadd.f32 %v796, %v804
  %v807 = vtanh.pop %v806
  %809 = vrot.lane.b32.xlu0 %v807, 32
  %v810 = vpop.permute.xlu0 %809
  %v812 = vmul.f32 %v794, %v810
  %814 = vrot.lane.b32.xlu0 %v812, 64
  %v815 = vpop.permute.xlu0 %814
  %s817 = scalar_lea.vmem [#allocation2], 40
  %818 = vst.msk [vmem:[%s817] sm:$0xff] %vm186, %v815
  %s819 = scalar_lea.vmem [#allocation3], 48
  %v820 = vld [vmem:[%s819] sm:$0xff]
  %v821 = vsel %vm186, %v815, 0
  %823 = vmatprep.subr.mxu0 0.0
  %824 = vmatpush1.msra.mxu0 %v43
  %825 = vmatprep.subr.mxu0 0.0
  %826 = vmatpush1.msra.mxu0 %v44
  %827 = vmatprep.subr.mxu0 0.0
  %828 = vmatpush1.msra.mxu0 %v45
  %829 = vmatprep.subr.mxu0 0.0
  %830 = vmatpush1.msra.mxu0 %v46
  %831 = vmatprep.subr.mxu0 0.0
  %832 = vmatpush1.msra.mxu0 0.0
  %833 = vmatprep.subr.mxu0 0.0
  %834 = vmatpush1.msra.mxu0 0.0
  %835 = vmatprep.subr.mxu0 0.0
  %836 = vmatpush1.msra.mxu0 0.0
  %837 = vmatprep.subr.mxu0 0.0
  %838 = vmatpush1.msra.mxu0 0.0
  %839 = vmatprep.subr.mxu0 0.0
  %840 = vmatpush1.msra.mxu0 0.0
  %841 = vmatprep.subr.mxu0 0.0
  %842 = vmatpush1.msra.mxu0 0.0
  %843 = vmatprep.subr.mxu0 0.0
  %844 = vmatpush1.msra.mxu0 0.0
  %845 = vmatprep.subr.mxu0 0.0
  %846 = vmatpush1.msra.mxu0 0.0
  %847 = vmatprep.subr.mxu0 0.0
  %848 = vmatpush1.msra.mxu0 0.0
  %849 = vmatprep.subr.mxu0 0.0
  %850 = vmatpush1.msra.mxu0 0.0
  %851 = vmatprep.subr.mxu0 0.0
  %852 = vmatpush1.msra.mxu0 0.0
  %853 = vmatprep.subr.mxu0 0.0
  %854 = vmatpush1.msra.mxu0 0.0
  %855 = vmatprep.subr.mxu0 0.0
  %856 = vmatpush1.msra.mxu0 0.0
  %857 = vmatprep.subr.mxu0 0.0
  %858 = vmatpush1.msra.mxu0 0.0
  %859 = vmatprep.subr.mxu0 0.0
  %860 = vmatpush1.msra.mxu0 0.0
  %861 = vmatprep.subr.mxu0 0.0
  %862 = vmatpush1.msra.mxu0 0.0
  %863 = vmatprep.subr.mxu0 0.0
  %864 = vmatpush1.msra.mxu0 0.0
  %865 = vmatprep.subr.mxu0 0.0
  %866 = vmatpush1.msra.mxu0 0.0
  %867 = vmatprep.subr.mxu0 0.0
  %868 = vmatpush1.msra.mxu0 0.0
  %869 = vmatprep.subr.mxu0 0.0
  %870 = vmatpush1.msra.mxu0 0.0
  %871 = vmatprep.subr.mxu0 0.0
  %872 = vmatpush1.msra.mxu0 0.0
  %873 = vmatprep.subr.mxu0 0.0
  %874 = vmatpush1.msra.mxu0 0.0
  %875 = vmatprep.subr.mxu0 0.0
  %876 = vmatpush1.msra.mxu0 0.0
  %877 = vmatprep.subr.mxu0 0.0
  %878 = vmatpush1.msra.mxu0 0.0
  %879 = vmatprep.subr.mxu0 0.0
  %880 = vmatpush1.msra.mxu0 0.0
  %881 = vmatprep.subr.mxu0 0.0
  %882 = vmatpush1.msra.mxu0 0.0
  %883 = vmatprep.subr.mxu0 0.0
  %884 = vmatpush1.msra.mxu0 0.0
  %885 = vmatprep.subr.mxu0 0.0
  %886 = vmatpush1.msra.mxu0 0.0
  %887 = vmatprep.mubr.f32.mxu0 0.0
  %888 = vmatmul.mubr.f32.gmra.mrb[0].mxu0 %v821
  %v889 = vpop.f32.mrb[0].mxu0
  %v890 = vadd.f32 0.0, %v889
  %v891 = vpop.f32.mrb[0].mxu0
  %892 = vdwg.mxu0
  %v893 = vadd.f32 %v820, %v890
  %v894 = vxor.u32 %v893, 2147483648
  %v895 = vmul.f32 %v894, 1.442695
  %v896 = vpow.pop %v895
  %v897 = vadd.f32 %v896, 1.0
  %v898 = vrcp.pop %v897
  %v899 = vmul.f32 1.0, %v898
  %v900 = vtanh.pop %v893
  %v901 = vmul.f32 %v899, %v806
  %903 = vrot.lane.b32.xlu0 %v900, 32
  %v904 = vpop.permute.xlu0 %903
  %v906 = vmul.f32 %v899, %v904
  %908 = vrot.lane.b32.xlu0 %v906, 32
  %v909 = vpop.permute.xlu0 %908
  %v911 = vadd.f32 %v901, %v909
  %v912 = vtanh.pop %v911
  %914 = vrot.lane.b32.xlu0 %v912, 32
  %v915 = vpop.permute.xlu0 %914
  %v917 = vmul.f32 %v899, %v915
  %919 = vrot.lane.b32.xlu0 %v917, 64
  %v920 = vpop.permute.xlu0 %919
  %s922 = scalar_lea.vmem [#allocation2], 48
  %923 = vst.msk [vmem:[%s922] sm:$0xff] %vm186, %v920
  %s924 = scalar_lea.vmem [#allocation3], 56
  %v925 = vld [vmem:[%s924] sm:$0xff]
  %v926 = vsel %vm186, %v920, 0
  %928 = vmatprep.subr.mxu0 0.0
  %929 = vmatpush1.msra.mxu0 %v43
  %930 = vmatprep.subr.mxu0 0.0
  %931 = vmatpush1.msra.mxu0 %v44
  %932 = vmatprep.subr.mxu0 0.0
  %933 = vmatpush1.msra.mxu0 %v45
  %934 = vmatprep.subr.mxu0 0.0
  %935 = vmatpush1.msra.mxu0 %v46
  %936 = vmatprep.subr.mxu0 0.0
  %937 = vmatpush1.msra.mxu0 0.0
  %938 = vmatprep.subr.mxu0 0.0
  %939 = vmatpush1.msra.mxu0 0.0
  %940 = vmatprep.subr.mxu0 0.0
  %941 = vmatpush1.msra.mxu0 0.0
  %942 = vmatprep.subr.mxu0 0.0
  %943 = vmatpush1.msra.mxu0 0.0
  %944 = vmatprep.subr.mxu0 0.0
  %945 = vmatpush1.msra.mxu0 0.0
  %946 = vmatprep.subr.mxu0 0.0
  %947 = vmatpush1.msra.mxu0 0.0
  %948 = vmatprep.subr.mxu0 0.0
  %949 = vmatpush1.msra.mxu0 0.0
  %950 = vmatprep.subr.mxu0 0.0
  %951 = vmatpush1.msra.mxu0 0.0
  %952 = vmatprep.subr.mxu0 0.0
  %953 = vmatpush1.msra.mxu0 0.0
  %954 = vmatprep.subr.mxu0 0.0
  %955 = vmatpush1.msra.mxu0 0.0
  %956 = vmatprep.subr.mxu0 0.0
  %957 = vmatpush1.msra.mxu0 0.0
  %958 = vmatprep.subr.mxu0 0.0
  %959 = vmatpush1.msra.mxu0 0.0
  %960 = vmatprep.subr.mxu0 0.0
  %961 = vmatpush1.msra.mxu0 0.0
  %962 = vmatprep.subr.mxu0 0.0
  %963 = vmatpush1.msra.mxu0 0.0
  %964 = vmatprep.subr.mxu0 0.0
  %965 = vmatpush1.msra.mxu0 0.0
  %966 = vmatprep.subr.mxu0 0.0
  %967 = vmatpush1.msra.mxu0 0.0
  %968 = vmatprep.subr.mxu0 0.0
  %969 = vmatpush1.msra.mxu0 0.0
  %970 = vmatprep.subr.mxu0 0.0
  %971 = vmatpush1.msra.mxu0 0.0
  %972 = vmatprep.subr.mxu0 0.0
  %973 = vmatpush1.msra.mxu0 0.0
  %974 = vmatprep.subr.mxu0 0.0
  %975 = vmatpush1.msra.mxu0 0.0
  %976 = vmatprep.subr.mxu0 0.0
  %977 = vmatpush1.msra.mxu0 0.0
  %978 = vmatprep.subr.mxu0 0.0
  %979 = vmatpush1.msra.mxu0 0.0
  %980 = vmatprep.subr.mxu0 0.0
  %981 = vmatpush1.msra.mxu0 0.0
  %982 = vmatprep.subr.mxu0 0.0
  %983 = vmatpush1.msra.mxu0 0.0
  %984 = vmatprep.subr.mxu0 0.0
  %985 = vmatpush1.msra.mxu0 0.0
  %986 = vmatprep.subr.mxu0 0.0
  %987 = vmatpush1.msra.mxu0 0.0
  %988 = vmatprep.subr.mxu0 0.0
  %989 = vmatpush1.msra.mxu0 0.0
  %990 = vmatprep.subr.mxu0 0.0
  %991 = vmatpush1.msra.mxu0 0.0
  %992 = vmatprep.mubr.f32.mxu0 0.0
  %993 = vmatmul.mubr.f32.gmra.mrb[0].mxu0 %v926
  %v994 = vpop.f32.mrb[0].mxu0
  %v995 = vadd.f32 0.0, %v994
  %v996 = vpop.f32.mrb[0].mxu0
  %997 = vdwg.mxu0
  %v998 = vadd.f32 %v925, %v995
  %v999 = vxor.u32 %v998, 2147483648
  %v1000 = vmul.f32 %v999, 1.442695
  %v1001 = vpow.pop %v1000
  %v1002 = vadd.f32 %v1001, 1.0
  %v1003 = vrcp.pop %v1002
  %v1004 = vmul.f32 1.0, %v1003
  %v1005 = vtanh.pop %v998
  %v1006 = vmul.f32 %v1004, %v911
  %1008 = vrot.lane.b32.xlu0 %v1005, 32
  %v1009 = vpop.permute.xlu0 %1008
  %v1011 = vmul.f32 %v1004, %v1009
  %1013 = vrot.lane.b32.xlu0 %v1011, 32
  %v1014 = vpop.permute.xlu0 %1013
  %v1016 = vadd.f32 %v1006, %v1014
  %v1017 = vtanh.pop %v1016
  %1019 = vrot.lane.b32.xlu0 %v1017, 32
  %v1020 = vpop.permute.xlu0 %1019
  %v1022 = vmul.f32 %v1004, %v1020
  %1024 = vrot.lane.b32.xlu0 %v1022, 64
  %v1025 = vpop.permute.xlu0 %1024
  %s1027 = scalar_lea.vmem [#allocation2], 56
  %1028 = vst.msk [vmem:[%s1027] sm:$0xff] %vm186, %v1025
  %1029 = vst.msk [vmem:[%s12] sm:$0xff] %vm186, %v1025
  %1031 = vrot.lane.b32.xlu0 %v1016, 96
  %v1032 = vpop.permute.xlu0 %1031
  %1034 = vst.msk [vmem:[%s13] sm:$0xff] %vm186, %v1032
  %s1035 = scalar_lea.vmem %s5, 32
  %v1036 = vld [vmem:[%s1035] sm:$0xff]
  %v1037 = vld [vmem:[%s1035 + $0x8] sm:$0xff]
  %v1038 = vld [vmem:[%s1035 + $0x10] sm:$0xff]
  %v1039 = vld [vmem:[%s1035 + $0x18] sm:$0xff]
  %v1040 = vld [vmem:[#allocation2] sm:$0xff]
  %v1041 = vld [vmem:[#allocation2 + $0x8] sm:$0xff]
  %v1042 = vld [vmem:[#allocation2 + $0x10] sm:$0xff]
  %v1043 = vld [vmem:[#allocation2 + $0x18] sm:$0xff]
  %v1044 = vld [vmem:[#allocation2 + $0x20] sm:$0xff]
  %v1045 = vld [vmem:[#allocation2 + $0x28] sm:$0xff]
  %v1046 = vld [vmem:[#allocation2 + $0x30] sm:$0xff]
  %v1047 = vld [vmem:[#allocation2 + $0x38] sm:$0xff]
  %v1048 = vld [vmem:[%s4] sm:$0xff]
  %v1049 = vld [vmem:[%s4 + $0x8] sm:$0xff]
  %v1050 = vld [vmem:[%s4 + $0x10] sm:$0xff]
  %v1051 = vld [vmem:[%s4 + $0x18] sm:$0xff]
  %s1052 = scalar_lea.vmem %s6, 1
  %v1053 = vld [vmem:[%s1052] sm:$0x1]
  %v1055 = vlaneseq
  %v1056 = vshrl.u32 %v1055, 7
  %v1057 = vsub.s32 0, %v1056
  %v1058 = vrot.slane %v1053, %v1057
  %v1061 = vsel %vm186, %v1040, 0
  %v1064 = vsel %vm186, %v1041, 0
  %v1067 = vsel %vm186, %v1042, 0
  %v1070 = vsel %vm186, %v1043, 0
  %v1073 = vsel %vm186, %v1044, 0
  %v1076 = vsel %vm186, %v1045, 0
  %v1079 = vsel %vm186, %v1046, 0
  %v1082 = vsel %vm186, %v1047, 0
  %1084 = vmatprep.subr.mxu0 0.0
  %1085 = vmatpush1.msra.mxu0 %v1048
  %1086 = vmatprep.subr.mxu0 0.0
  %1087 = vmatpush1.msra.mxu0 %v1049
  %1088 = vmatprep.subr.mxu0 0.0
  %1089 = vmatpush1.msra.mxu0 %v1050
  %1090 = vmatprep.subr.mxu0 0.0
  %1091 = vmatpush1.msra.mxu0 %v1051
  %1092 = vmatprep.subr.mxu0 0.0
  %1093 = vmatpush1.msra.mxu0 0.0
  %1094 = vmatprep.subr.mxu0 0.0
  %1095 = vmatpush1.msra.mxu0 0.0
  %1096 = vmatprep.subr.mxu0 0.0
  %1097 = vmatpush1.msra.mxu0 0.0
  %1098 = vmatprep.subr.mxu0 0.0
  %1099 = vmatpush1.msra.mxu0 0.0
  %1100 = vmatprep.subr.mxu0 0.0
  %1101 = vmatpush1.msra.mxu0 0.0
  %1102 = vmatprep.subr.mxu0 0.0
  %1103 = vmatpush1.msra.mxu0 0.0
  %1104 = vmatprep.subr.mxu0 0.0
  %1105 = vmatpush1.msra.mxu0 0.0
  %1106 = vmatprep.subr.mxu0 0.0
  %1107 = vmatpush1.msra.mxu0 0.0
  %1108 = vmatprep.subr.mxu0 0.0
  %1109 = vmatpush1.msra.mxu0 0.0
  %1110 = vmatprep.subr.mxu0 0.0
  %1111 = vmatpush1.msra.mxu0 0.0
  %1112 = vmatprep.subr.mxu0 0.0
  %1113 = vmatpush1.msra.mxu0 0.0
  %1114 = vmatprep.subr.mxu0 0.0
  %1115 = vmatpush1.msra.mxu0 0.0
  %1116 = vmatprep.subr.mxu0 0.0
  %1117 = vmatpush1.msra.mxu0 0.0
  %1118 = vmatprep.subr.mxu0 0.0
  %1119 = vmatpush1.msra.mxu0 0.0
  %1120 = vmatprep.subr.mxu0 0.0
  %1121 = vmatpush1.msra.mxu0 0.0
  %1122 = vmatprep.subr.mxu0 0.0
  %1123 = vmatpush1.msra.mxu0 0.0
  %1124 = vmatprep.subr.mxu0 0.0
  %1125 = vmatpush1.msra.mxu0 0.0
  %1126 = vmatprep.subr.mxu0 0.0
  %1127 = vmatpush1.msra.mxu0 0.0
  %1128 = vmatprep.subr.mxu0 0.0
  %1129 = vmatpush1.msra.mxu0 0.0
  %1130 = vmatprep.subr.mxu0 0.0
  %1131 = vmatpush1.msra.mxu0 0.0
  %1132 = vmatprep.subr.mxu0 0.0
  %1133 = vmatpush1.msra.mxu0 0.0
  %1134 = vmatprep.subr.mxu0 0.0
  %1135 = vmatpush1.msra.mxu0 0.0
  %1136 = vmatprep.subr.mxu0 0.0
  %1137 = vmatpush1.msra.mxu0 0.0
  %1138 = vmatprep.subr.mxu0 0.0
  %1139 = vmatpush1.msra.mxu0 0.0
  %1140 = vmatprep.subr.mxu0 0.0
  %1141 = vmatpush1.msra.mxu0 0.0
  %1142 = vmatprep.subr.mxu0 0.0
  %1143 = vmatpush1.msra.mxu0 0.0
  %1144 = vmatprep.subr.mxu0 0.0
  %1145 = vmatpush1.msra.mxu0 0.0
  %1146 = vmatprep.subr.mxu0 0.0
  %1147 = vmatpush1.msra.mxu0 0.0
  %1148 = vmatprep.mubr.f32.mxu0 0.0
  %1149 = vmatmul.mubr.f32.gmra.mrb[0].mxu0 %v1061
  %v1150 = vpop.f32.mrb[0].mxu0
  %v1151 = vadd.f32 %v1058, %v1150
  %v1152 = vpop.f32.mrb[0].mxu0
  %1153 = vmatprep.mubr.f32.mxu0 0.0
  %1154 = vmatmul.mubr.f32.gmra.mrb[0].mxu0 %v1064
  %v1155 = vpop.f32.mrb[0].mxu0
  %v1156 = vadd.f32 %v1058, %v1155
  %v1157 = vpop.f32.mrb[0].mxu0
  %1158 = vmatprep.mubr.f32.mxu0 0.0
  %1159 = vmatmul.mubr.f32.gmra.mrb[0].mxu0 %v1067
  %v1160 = vpop.f32.mrb[0].mxu0
  %v1161 = vadd.f32 %v1058, %v1160
  %v1162 = vpop.f32.mrb[0].mxu0
  %1163 = vmatprep.mubr.f32.mxu0 0.0
  %1164 = vmatmul.mubr.f32.gmra.mrb[0].mxu0 %v1070
  %v1165 = vpop.f32.mrb[0].mxu0
  %v1166 = vadd.f32 %v1058, %v1165
  %v1167 = vpop.f32.mrb[0].mxu0
  %1168 = vmatprep.mubr.f32.mxu0 0.0
  %1169 = vmatmul.mubr.f32.gmra.mrb[0].mxu0 %v1073
  %v1170 = vpop.f32.mrb[0].mxu0
  %v1171 = vadd.f32 %v1058, %v1170
  %v1172 = vpop.f32.mrb[0].mxu0
  %1173 = vmatprep.mubr.f32.mxu0 0.0
  %1174 = vmatmul.mubr.f32.gmra.mrb[0].mxu0 %v1076
  %v1175 = vpop.f32.mrb[0].mxu0
  %v1176 = vadd.f32 %v1058, %v1175
  %v1177 = vpop.f32.mrb[0].mxu0
  %1178 = vmatprep.mubr.f32.mxu0 0.0
  %1179 = vmatmul.mubr.f32.gmra.mrb[0].mxu0 %v1079
  %v1180 = vpop.f32.mrb[0].mxu0
  %v1181 = vadd.f32 %v1058, %v1180
  %v1182 = vpop.f32.mrb[0].mxu0
  %1183 = vmatprep.mubr.f32.mxu0 0.0
  %1184 = vmatmul.mubr.f32.gmra.mrb[0].mxu0 %v1082
  %v1185 = vpop.f32.mrb[0].mxu0
  %v1186 = vadd.f32 %v1058, %v1185
  %v1187 = vpop.f32.mrb[0].mxu0
  %1188 = vdwg.mxu0
  %1189 = vst [vmem:[#allocation3] sm:$0xff] %v1151
  %1190 = vst [vmem:[#allocation3 + $0x8] sm:$0xff] %v1156
  %1191 = vst [vmem:[#allocation3 + $0x10] sm:$0xff] %v1161
  %1192 = vst [vmem:[#allocation3 + $0x18] sm:$0xff] %v1166
  %1193 = vst [vmem:[#allocation3 + $0x20] sm:$0xff] %v1171
  %1194 = vst [vmem:[#allocation3 + $0x28] sm:$0xff] %v1176
  %1195 = vst [vmem:[#allocation3 + $0x30] sm:$0xff] %v1181
  %1196 = vst [vmem:[#allocation3 + $0x38] sm:$0xff] %v1186
  %s1197 = scalar_lea.vmem %s1, 8
  %v1198 = vld [vmem:[%s1197] sm:$0xff]
  %s1199 = scalar_lea.vmem %s2, 8
  %v1200 = vld [vmem:[%s1199] sm:$0xff]
  %v1201 = vld [vmem:[#allocation3] sm:$0xff]
  %v1203 = vsel %vm186, %v1198, 0
  %1205 = vmatprep.subr.mxu0 0.0
  %1206 = vmatpush1.msra.mxu0 %v1036
  %1207 = vmatprep.subr.mxu0 0.0
  %1208 = vmatpush1.msra.mxu0 %v1037
  %1209 = vmatprep.subr.mxu0 0.0
  %1210 = vmatpush1.msra.mxu0 %v1038
  %1211 = vmatprep.subr.mxu0 0.0
  %1212 = vmatpush1.msra.mxu0 %v1039
  %1213 = vmatprep.subr.mxu0 0.0
  %1214 = vmatpush1.msra.mxu0 0.0
  %1215 = vmatprep.subr.mxu0 0.0
  %1216 = vmatpush1.msra.mxu0 0.0
  %1217 = vmatprep.subr.mxu0 0.0
  %1218 = vmatpush1.msra.mxu0 0.0
  %1219 = vmatprep.subr.mxu0 0.0
  %1220 = vmatpush1.msra.mxu0 0.0
  %1221 = vmatprep.subr.mxu0 0.0
  %1222 = vmatpush1.msra.mxu0 0.0
  %1223 = vmatprep.subr.mxu0 0.0
  %1224 = vmatpush1.msra.mxu0 0.0
  %1225 = vmatprep.subr.mxu0 0.0
  %1226 = vmatpush1.msra.mxu0 0.0
  %1227 = vmatprep.subr.mxu0 0.0
  %1228 = vmatpush1.msra.mxu0 0.0
  %1229 = vmatprep.subr.mxu0 0.0
  %1230 = vmatpush1.msra.mxu0 0.0
  %1231 = vmatprep.subr.mxu0 0.0
  %1232 = vmatpush1.msra.mxu0 0.0
  %1233 = vmatprep.subr.mxu0 0.0
  %1234 = vmatpush1.msra.mxu0 0.0
  %1235 = vmatprep.subr.mxu0 0.0
  %1236 = vmatpush1.msra.mxu0 0.0
  %1237 = vmatprep.subr.mxu0 0.0
  %1238 = vmatpush1.msra.mxu0 0.0
  %1239 = vmatprep.subr.mxu0 0.0
  %1240 = vmatpush1.msra.mxu0 0.0
  %1241 = vmatprep.subr.mxu0 0.0
  %1242 = vmatpush1.msra.mxu0 0.0
  %1243 = vmatprep.subr.mxu0 0.0
  %1244 = vmatpush1.msra.mxu0 0.0
  %1245 = vmatprep.subr.mxu0 0.0
  %1246 = vmatpush1.msra.mxu0 0.0
  %1247 = vmatprep.subr.mxu0 0.0
  %1248 = vmatpush1.msra.mxu0 0.0
  %1249 = vmatprep.subr.mxu0 0.0
  %1250 = vmatpush1.msra.mxu0 0.0
  %1251 = vmatprep.subr.mxu0 0.0
  %1252 = vmatpush1.msra.mxu0 0.0
  %1253 = vmatprep.subr.mxu0 0.0
  %1254 = vmatpush1.msra.mxu0 0.0
  %1255 = vmatprep.subr.mxu0 0.0
  %1256 = vmatpush1.msra.mxu0 0.0
  %1257 = vmatprep.subr.mxu0 0.0
  %1258 = vmatpush1.msra.mxu0 0.0
  %1259 = vmatprep.subr.mxu0 0.0
  %1260 = vmatpush1.msra.mxu0 0.0
  %1261 = vmatprep.subr.mxu0 0.0
  %1262 = vmatpush1.msra.mxu0 0.0
  %1263 = vmatprep.subr.mxu0 0.0
  %1264 = vmatpush1.msra.mxu0 0.0
  %1265 = vmatprep.subr.mxu0 0.0
  %1266 = vmatpush1.msra.mxu0 0.0
  %1267 = vmatprep.subr.mxu0 0.0
  %1268 = vmatpush1.msra.mxu0 0.0
  %1269 = vmatprep.mubr.f32.mxu0 0.0
  %1270 = vmatmul.mubr.f32.gmra.mrb[0].mxu0 %v1203
  %v1271 = vpop.f32.mrb[0].mxu0
  %v1272 = vadd.f32 0.0, %v1271
  %v1273 = vpop.f32.mrb[0].mxu0
  %1274 = vdwg.mxu0
  %v1275 = vadd.f32 %v1201, %v1272
  %v1276 = vxor.u32 %v1275, 2147483648
  %v1277 = vmul.f32 %v1276, 1.442695
  %v1278 = vpow.pop %v1277
  %v1279 = vadd.f32 %v1278, 1.0
  %v1280 = vrcp.pop %v1279
  %v1281 = vmul.f32 1.0, %v1280
  %v1282 = vtanh.pop %v1275
  %1284 = vrot.lane.b32.xlu0 %v1200, 32
  %v1285 = vpop.permute.xlu0 %1284
  %v1287 = vmul.f32 %v1281, %v1285
  %1289 = vrot.lane.b32.xlu0 %v1282, 32
  %v1290 = vpop.permute.xlu0 %1289
  %v1292 = vmul.f32 %v1281, %v1290
  %1294 = vrot.lane.b32.xlu0 %v1292, 32
  %v1295 = vpop.permute.xlu0 %1294
  %v1297 = vadd.f32 %v1287, %v1295
  %v1298 = vtanh.pop %v1297
  %1300 = vrot.lane.b32.xlu0 %v1298, 32
  %v1301 = vpop.permute.xlu0 %1300
  %v1303 = vmul.f32 %v1281, %v1301
  %1305 = vrot.lane.b32.xlu0 %v1303, 64
  %v1306 = vpop.permute.xlu0 %1305
  %1308 = vst.msk [vmem:[#allocation2] sm:$0xff] %vm186, %v1306
  %v1309 = vld [vmem:[%s294] sm:$0xff]
  %v1310 = vsel %vm186, %v1306, 0
  %1312 = vmatprep.subr.mxu0 0.0
  %1313 = vmatpush1.msra.mxu0 %v1036
  %1314 = vmatprep.subr.mxu0 0.0
  %1315 = vmatpush1.msra.mxu0 %v1037
  %1316 = vmatprep.subr.mxu0 0.0
  %1317 = vmatpush1.msra.mxu0 %v1038
  %1318 = vmatprep.subr.mxu0 0.0
  %1319 = vmatpush1.msra.mxu0 %v1039
  %1320 = vmatprep.subr.mxu0 0.0
  %1321 = vmatpush1.msra.mxu0 0.0
  %1322 = vmatprep.subr.mxu0 0.0
  %1323 = vmatpush1.msra.mxu0 0.0
  %1324 = vmatprep.subr.mxu0 0.0
  %1325 = vmatpush1.msra.mxu0 0.0
  %1326 = vmatprep.subr.mxu0 0.0
  %1327 = vmatpush1.msra.mxu0 0.0
  %1328 = vmatprep.subr.mxu0 0.0
  %1329 = vmatpush1.msra.mxu0 0.0
  %1330 = vmatprep.subr.mxu0 0.0
  %1331 = vmatpush1.msra.mxu0 0.0
  %1332 = vmatprep.subr.mxu0 0.0
  %1333 = vmatpush1.msra.mxu0 0.0
  %1334 = vmatprep.subr.mxu0 0.0
  %1335 = vmatpush1.msra.mxu0 0.0
  %1336 = vmatprep.subr.mxu0 0.0
  %1337 = vmatpush1.msra.mxu0 0.0
  %1338 = vmatprep.subr.mxu0 0.0
  %1339 = vmatpush1.msra.mxu0 0.0
  %1340 = vmatprep.subr.mxu0 0.0
  %1341 = vmatpush1.msra.mxu0 0.0
  %1342 = vmatprep.subr.mxu0 0.0
  %1343 = vmatpush1.msra.mxu0 0.0
  %1344 = vmatprep.subr.mxu0 0.0
  %1345 = vmatpush1.msra.mxu0 0.0
  %1346 = vmatprep.subr.mxu0 0.0
  %1347 = vmatpush1.msra.mxu0 0.0
  %1348 = vmatprep.subr.mxu0 0.0
  %1349 = vmatpush1.msra.mxu0 0.0
  %1350 = vmatprep.subr.mxu0 0.0
  %1351 = vmatpush1.msra.mxu0 0.0
  %1352 = vmatprep.subr.mxu0 0.0
  %1353 = vmatpush1.msra.mxu0 0.0
  %1354 = vmatprep.subr.mxu0 0.0
  %1355 = vmatpush1.msra.mxu0 0.0
  %1356 = vmatprep.subr.mxu0 0.0
  %1357 = vmatpush1.msra.mxu0 0.0
  %1358 = vmatprep.subr.mxu0 0.0
  %1359 = vmatpush1.msra.mxu0 0.0
  %1360 = vmatprep.subr.mxu0 0.0
  %1361 = vmatpush1.msra.mxu0 0.0
  %1362 = vmatprep.subr.mxu0 0.0
  %1363 = vmatpush1.msra.mxu0 0.0
  %1364 = vmatprep.subr.mxu0 0.0
  %1365 = vmatpush1.msra.mxu0 0.0
  %1366 = vmatprep.subr.mxu0 0.0
  %1367 = vmatpush1.msra.mxu0 0.0
  %1368 = vmatprep.subr.mxu0 0.0
  %1369 = vmatpush1.msra.mxu0 0.0
  %1370 = vmatprep.subr.mxu0 0.0
  %1371 = vmatpush1.msra.mxu0 0.0
  %1372 = vmatprep.subr.mxu0 0.0
  %1373 = vmatpush1.msra.mxu0 0.0
  %1374 = vmatprep.subr.mxu0 0.0
  %1375 = vmatpush1.msra.mxu0 0.0
  %1376 = vmatprep.mubr.f32.mxu0 0.0
  %1377 = vmatmul.mubr.f32.gmra.mrb[0].mxu0 %v1310
  %v1378 = vpop.f32.mrb[0].mxu0
  %v1379 = vadd.f32 0.0, %v1378
  %v1380 = vpop.f32.mrb[0].mxu0
  %1381 = vdwg.mxu0
  %v1382 = vadd.f32 %v1309, %v1379
  %v1383 = vxor.u32 %v1382, 2147483648
  %v1384 = vmul.f32 %v1383, 1.442695
  %v1385 = vpow.pop %v1384
  %v1386 = vadd.f32 %v1385, 1.0
  %v1387 = vrcp.pop %v1386
  %v1388 = vmul.f32 1.0, %v1387
  %v1389 = vtanh.pop %v1382
  %v1390 = vmul.f32 %v1388, %v1297
  %1392 = vrot.lane.b32.xlu0 %v1389, 32
  %v1393 = vpop.permute.xlu0 %1392
  %v1395 = vmul.f32 %v1388, %v1393
  %1397 = vrot.lane.b32.xlu0 %v1395, 32
  %v1398 = vpop.permute.xlu0 %1397
  %v1400 = vadd.f32 %v1390, %v1398
  %v1401 = vtanh.pop %v1400
  %1403 = vrot.lane.b32.xlu0 %v1401, 32
  %v1404 = vpop.permute.xlu0 %1403
  %v1406 = vmul.f32 %v1388, %v1404
  %1408 = vrot.lane.b32.xlu0 %v1406, 64
  %v1409 = vpop.permute.xlu0 %1408
  %1411 = vst.msk [vmem:[%s397] sm:$0xff] %vm186, %v1409
  %v1412 = vld [vmem:[%s399] sm:$0xff]
  %v1413 = vsel %vm186, %v1409, 0
  %1415 = vmatprep.subr.mxu0 0.0
  %1416 = vmatpush1.msra.mxu0 %v1036
  %1417 = vmatprep.subr.mxu0 0.0
  %1418 = vmatpush1.msra.mxu0 %v1037
  %1419 = vmatprep.subr.mxu0 0.0
  %1420 = vmatpush1.msra.mxu0 %v1038
  %1421 = vmatprep.subr.mxu0 0.0
  %1422 = vmatpush1.msra.mxu0 %v1039
  %1423 = vmatprep.subr.mxu0 0.0
  %1424 = vmatpush1.msra.mxu0 0.0
  %1425 = vmatprep.subr.mxu0 0.0
  %1426 = vmatpush1.msra.mxu0 0.0
  %1427 = vmatprep.subr.mxu0 0.0
  %1428 = vmatpush1.msra.mxu0 0.0
  %1429 = vmatprep.subr.mxu0 0.0
  %1430 = vmatpush1.msra.mxu0 0.0
  %1431 = vmatprep.subr.mxu0 0.0
  %1432 = vmatpush1.msra.mxu0 0.0
  %1433 = vmatprep.subr.mxu0 0.0
  %1434 = vmatpush1.msra.mxu0 0.0
  %1435 = vmatprep.subr.mxu0 0.0
  %1436 = vmatpush1.msra.mxu0 0.0
  %1437 = vmatprep.subr.mxu0 0.0
  %1438 = vmatpush1.msra.mxu0 0.0
  %1439 = vmatprep.subr.mxu0 0.0
  %1440 = vmatpush1.msra.mxu0 0.0
  %1441 = vmatprep.subr.mxu0 0.0
  %1442 = vmatpush1.msra.mxu0 0.0
  %1443 = vmatprep.subr.mxu0 0.0
  %1444 = vmatpush1.msra.mxu0 0.0
  %1445 = vmatprep.subr.mxu0 0.0
  %1446 = vmatpush1.msra.mxu0 0.0
  %1447 = vmatprep.subr.mxu0 0.0
  %1448 = vmatpush1.msra.mxu0 0.0
  %1449 = vmatprep.subr.mxu0 0.0
  %1450 = vmatpush1.msra.mxu0 0.0
  %1451 = vmatprep.subr.mxu0 0.0
  %1452 = vmatpush1.msra.mxu0 0.0
  %1453 = vmatprep.subr.mxu0 0.0
  %1454 = vmatpush1.msra.mxu0 0.0
  %1455 = vmatprep.subr.mxu0 0.0
  %1456 = vmatpush1.msra.mxu0 0.0
  %1457 = vmatprep.subr.mxu0 0.0
  %1458 = vmatpush1.msra.mxu0 0.0
  %1459 = vmatprep.subr.mxu0 0.0
  %1460 = vmatpush1.msra.mxu0 0.0
  %1461 = vmatprep.subr.mxu0 0.0
  %1462 = vmatpush1.msra.mxu0 0.0
  %1463 = vmatprep.subr.mxu0 0.0
  %1464 = vmatpush1.msra.mxu0 0.0
  %1465 = vmatprep.subr.mxu0 0.0
  %1466 = vmatpush1.msra.mxu0 0.0
  %1467 = vmatprep.subr.mxu0 0.0
  %1468 = vmatpush1.msra.mxu0 0.0
  %1469 = vmatprep.subr.mxu0 0.0
  %1470 = vmatpush1.msra.mxu0 0.0
  %1471 = vmatprep.subr.mxu0 0.0
  %1472 = vmatpush1.msra.mxu0 0.0
  %1473 = vmatprep.subr.mxu0 0.0
  %1474 = vmatpush1.msra.mxu0 0.0
  %1475 = vmatprep.subr.mxu0 0.0
  %1476 = vmatpush1.msra.mxu0 0.0
  %1477 = vmatprep.subr.mxu0 0.0
  %1478 = vmatpush1.msra.mxu0 0.0
  %1479 = vmatprep.mubr.f32.mxu0 0.0
  %1480 = vmatmul.mubr.f32.gmra.mrb[0].mxu0 %v1413
  %v1481 = vpop.f32.mrb[0].mxu0
  %v1482 = vadd.f32 0.0, %v1481
  %v1483 = vpop.f32.mrb[0].mxu0
  %1484 = vdwg.mxu0
  %v1485 = vadd.f32 %v1412, %v1482
  %v1486 = vxor.u32 %v1485, 2147483648
  %v1487 = vmul.f32 %v1486, 1.442695
  %v1488 = vpow.pop %v1487
  %v1489 = vadd.f32 %v1488, 1.0
  %v1490 = vrcp.pop %v1489
  %v1491 = vmul.f32 1.0, %v1490
  %v1492 = vtanh.pop %v1485
  %v1493 = vmul.f32 %v1491, %v1400
  %1495 = vrot.lane.b32.xlu0 %v1492, 32
  %v1496 = vpop.permute.xlu0 %1495
  %v1498 = vmul.f32 %v1491, %v1496
  %1500 = vrot.lane.b32.xlu0 %v1498, 32
  %v1501 = vpop.permute.xlu0 %1500
  %v1503 = vadd.f32 %v1493, %v1501
  %v1504 = vtanh.pop %v1503
  %1506 = vrot.lane.b32.xlu0 %v1504, 32
  %v1507 = vpop.permute.xlu0 %1506
  %v1509 = vmul.f32 %v1491, %v1507
  %1511 = vrot.lane.b32.xlu0 %v1509, 64
  %v1512 = vpop.permute.xlu0 %1511
  %1514 = vst.msk [vmem:[%s502] sm:$0xff] %vm186, %v1512
  %v1515 = vld [vmem:[%s504] sm:$0xff]
  %v1516 = vsel %vm186, %v1512, 0
  %1518 = vmatprep.subr.mxu0 0.0
  %1519 = vmatpush1.msra.mxu0 %v1036
  %1520 = vmatprep.subr.mxu0 0.0
  %1521 = vmatpush1.msra.mxu0 %v1037
  %1522 = vmatprep.subr.mxu0 0.0
  %1523 = vmatpush1.msra.mxu0 %v1038
  %1524 = vmatprep.subr.mxu0 0.0
  %1525 = vmatpush1.msra.mxu0 %v1039
  %1526 = vmatprep.subr.mxu0 0.0
  %1527 = vmatpush1.msra.mxu0 0.0
  %1528 = vmatprep.subr.mxu0 0.0
  %1529 = vmatpush1.msra.mxu0 0.0
  %1530 = vmatprep.subr.mxu0 0.0
  %1531 = vmatpush1.msra.mxu0 0.0
  %1532 = vmatprep.subr.mxu0 0.0
  %1533 = vmatpush1.msra.mxu0 0.0
  %1534 = vmatprep.subr.mxu0 0.0
  %1535 = vmatpush1.msra.mxu0 0.0
  %1536 = vmatprep.subr.mxu0 0.0
  %1537 = vmatpush1.msra.mxu0 0.0
  %1538 = vmatprep.subr.mxu0 0.0
  %1539 = vmatpush1.msra.mxu0 0.0
  %1540 = vmatprep.subr.mxu0 0.0
  %1541 = vmatpush1.msra.mxu0 0.0
  %1542 = vmatprep.subr.mxu0 0.0
  %1543 = vmatpush1.msra.mxu0 0.0
  %1544 = vmatprep.subr.mxu0 0.0
  %1545 = vmatpush1.msra.mxu0 0.0
  %1546 = vmatprep.subr.mxu0 0.0
  %1547 = vmatpush1.msra.mxu0 0.0
  %1548 = vmatprep.subr.mxu0 0.0
  %1549 = vmatpush1.msra.mxu0 0.0
  %1550 = vmatprep.subr.mxu0 0.0
  %1551 = vmatpush1.msra.mxu0 0.0
  %1552 = vmatprep.subr.mxu0 0.0
  %1553 = vmatpush1.msra.mxu0 0.0
  %1554 = vmatprep.subr.mxu0 0.0
  %1555 = vmatpush1.msra.mxu0 0.0
  %1556 = vmatprep.subr.mxu0 0.0
  %1557 = vmatpush1.msra.mxu0 0.0
  %1558 = vmatprep.subr.mxu0 0.0
  %1559 = vmatpush1.msra.mxu0 0.0
  %1560 = vmatprep.subr.mxu0 0.0
  %1561 = vmatpush1.msra.mxu0 0.0
  %1562 = vmatprep.subr.mxu0 0.0
  %1563 = vmatpush1.msra.mxu0 0.0
  %1564 = vmatprep.subr.mxu0 0.0
  %1565 = vmatpush1.msra.mxu0 0.0
  %1566 = vmatprep.subr.mxu0 0.0
  %1567 = vmatpush1.msra.mxu0 0.0
  %1568 = vmatprep.subr.mxu0 0.0
  %1569 = vmatpush1.msra.mxu0 0.0
  %1570 = vmatprep.subr.mxu0 0.0
  %1571 = vmatpush1.msra.mxu0 0.0
  %1572 = vmatprep.subr.mxu0 0.0
  %1573 = vmatpush1.msra.mxu0 0.0
  %1574 = vmatprep.subr.mxu0 0.0
  %1575 = vmatpush1.msra.mxu0 0.0
  %1576 = vmatprep.subr.mxu0 0.0
  %1577 = vmatpush1.msra.mxu0 0.0
  %1578 = vmatprep.subr.mxu0 0.0
  %1579 = vmatpush1.msra.mxu0 0.0
  %1580 = vmatprep.subr.mxu0 0.0
  %1581 = vmatpush1.msra.mxu0 0.0
  %1582 = vmatprep.mubr.f32.mxu0 0.0
  %1583 = vmatmul.mubr.f32.gmra.mrb[0].mxu0 %v1516
  %v1584 = vpop.f32.mrb[0].mxu0
  %v1585 = vadd.f32 0.0, %v1584
  %v1586 = vpop.f32.mrb[0].mxu0
  %1587 = vdwg.mxu0
  %v1588 = vadd.f32 %v1515, %v1585
  %v1589 = vxor.u32 %v1588, 2147483648
  %v1590 = vmul.f32 %v1589, 1.442695
  %v1591 = vpow.pop %v1590
  %v1592 = vadd.f32 %v1591, 1.0
  %v1593 = vrcp.pop %v1592
  %v1594 = vmul.f32 1.0, %v1593
  %v1595 = vtanh.pop %v1588
  %v1596 = vmul.f32 %v1594, %v1503
  %1598 = vrot.lane.b32.xlu0 %v1595, 32
  %v1599 = vpop.permute.xlu0 %1598
  %v1601 = vmul.f32 %v1594, %v1599
  %1603 = vrot.lane.b32.xlu0 %v1601, 32
  %v1604 = vpop.permute.xlu0 %1603
  %v1606 = vadd.f32 %v1596, %v1604
  %v1607 = vtanh.pop %v1606
  %1609 = vrot.lane.b32.xlu0 %v1607, 32
  %v1610 = vpop.permute.xlu0 %1609
  %v1612 = vmul.f32 %v1594, %v1610
  %1614 = vrot.lane.b32.xlu0 %v1612, 64
  %v1615 = vpop.permute.xlu0 %1614
  %1617 = vst.msk [vmem:[%s607] sm:$0xff] %vm186, %v1615
  %v1618 = vld [vmem:[%s609] sm:$0xff]
  %v1619 = vsel %vm186, %v1615, 0
  %1621 = vmatprep.subr.mxu0 0.0
  %1622 = vmatpush1.msra.mxu0 %v1036
  %1623 = vmatprep.subr.mxu0 0.0
  %1624 = vmatpush1.msra.mxu0 %v1037
  %1625 = vmatprep.subr.mxu0 0.0
  %1626 = vmatpush1.msra.mxu0 %v1038
  %1627 = vmatprep.subr.mxu0 0.0
  %1628 = vmatpush1.msra.mxu0 %v1039
  %1629 = vmatprep.subr.mxu0 0.0
  %1630 = vmatpush1.msra.mxu0 0.0
  %1631 = vmatprep.subr.mxu0 0.0
  %1632 = vmatpush1.msra.mxu0 0.0
  %1633 = vmatprep.subr.mxu0 0.0
  %1634 = vmatpush1.msra.mxu0 0.0
  %1635 = vmatprep.subr.mxu0 0.0
  %1636 = vmatpush1.msra.mxu0 0.0
  %1637 = vmatprep.subr.mxu0 0.0
  %1638 = vmatpush1.msra.mxu0 0.0
  %1639 = vmatprep.subr.mxu0 0.0
  %1640 = vmatpush1.msra.mxu0 0.0
  %1641 = vmatprep.subr.mxu0 0.0
  %1642 = vmatpush1.msra.mxu0 0.0
  %1643 = vmatprep.subr.mxu0 0.0
  %1644 = vmatpush1.msra.mxu0 0.0
  %1645 = vmatprep.subr.mxu0 0.0
  %1646 = vmatpush1.msra.mxu0 0.0
  %1647 = vmatprep.subr.mxu0 0.0
  %1648 = vmatpush1.msra.mxu0 0.0
  %1649 = vmatprep.subr.mxu0 0.0
  %1650 = vmatpush1.msra.mxu0 0.0
  %1651 = vmatprep.subr.mxu0 0.0
  %1652 = vmatpush1.msra.mxu0 0.0
  %1653 = vmatprep.subr.mxu0 0.0
  %1654 = vmatpush1.msra.mxu0 0.0
  %1655 = vmatprep.subr.mxu0 0.0
  %1656 = vmatpush1.msra.mxu0 0.0
  %1657 = vmatprep.subr.mxu0 0.0
  %1658 = vmatpush1.msra.mxu0 0.0
  %1659 = vmatprep.subr.mxu0 0.0
  %1660 = vmatpush1.msra.mxu0 0.0
  %1661 = vmatprep.subr.mxu0 0.0
  %1662 = vmatpush1.msra.mxu0 0.0
  %1663 = vmatprep.subr.mxu0 0.0
  %1664 = vmatpush1.msra.mxu0 0.0
  %1665 = vmatprep.subr.mxu0 0.0
  %1666 = vmatpush1.msra.mxu0 0.0
  %1667 = vmatprep.subr.mxu0 0.0
  %1668 = vmatpush1.msra.mxu0 0.0
  %1669 = vmatprep.subr.mxu0 0.0
  %1670 = vmatpush1.msra.mxu0 0.0
  %1671 = vmatprep.subr.mxu0 0.0
  %1672 = vmatpush1.msra.mxu0 0.0
  %1673 = vmatprep.subr.mxu0 0.0
  %1674 = vmatpush1.msra.mxu0 0.0
  %1675 = vmatprep.subr.mxu0 0.0
  %1676 = vmatpush1.msra.mxu0 0.0
  %1677 = vmatprep.subr.mxu0 0.0
  %1678 = vmatpush1.msra.mxu0 0.0
  %1679 = vmatprep.subr.mxu0 0.0
  %1680 = vmatpush1.msra.mxu0 0.0
  %1681 = vmatprep.subr.mxu0 0.0
  %1682 = vmatpush1.msra.mxu0 0.0
  %1683 = vmatprep.subr.mxu0 0.0
  %1684 = vmatpush1.msra.mxu0 0.0
  %1685 = vmatprep.mubr.f32.mxu0 0.0
  %1686 = vmatmul.mubr.f32.gmra.mrb[0].mxu0 %v1619
  %v1687 = vpop.f32.mrb[0].mxu0
  %v1688 = vadd.f32 0.0, %v1687
  %v1689 = vpop.f32.mrb[0].mxu0
  %1690 = vdwg.mxu0
  %v1691 = vadd.f32 %v1618, %v1688
  %v1692 = vxor.u32 %v1691, 2147483648
  %v1693 = vmul.f32 %v1692, 1.442695
  %v1694 = vpow.pop %v1693
  %v1695 = vadd.f32 %v1694, 1.0
  %v1696 = vrcp.pop %v1695
  %v1697 = vmul.f32 1.0, %v1696
  %v1698 = vtanh.pop %v1691
  %v1699 = vmul.f32 %v1697, %v1606
  %1701 = vrot.lane.b32.xlu0 %v1698, 32
  %v1702 = vpop.permute.xlu0 %1701
  %v1704 = vmul.f32 %v1697, %v1702
  %1706 = vrot.lane.b32.xlu0 %v1704, 32
  %v1707 = vpop.permute.xlu0 %1706
  %v1709 = vadd.f32 %v1699, %v1707
  %v1710 = vtanh.pop %v1709
  %1712 = vrot.lane.b32.xlu0 %v1710, 32
  %v1713 = vpop.permute.xlu0 %1712
  %v1715 = vmul.f32 %v1697, %v1713
  %1717 = vrot.lane.b32.xlu0 %v1715, 64
  %v1718 = vpop.permute.xlu0 %1717
  %1720 = vst.msk [vmem:[%s712] sm:$0xff] %vm186, %v1718
  %v1721 = vld [vmem:[%s714] sm:$0xff]
  %v1722 = vsel %vm186, %v1718, 0
  %1724 = vmatprep.subr.mxu0 0.0
  %1725 = vmatpush1.msra.mxu0 %v1036
  %1726 = vmatprep.subr.mxu0 0.0
  %1727 = vmatpush1.msra.mxu0 %v1037
  %1728 = vmatprep.subr.mxu0 0.0
  %1729 = vmatpush1.msra.mxu0 %v1038
  %1730 = vmatprep.subr.mxu0 0.0
  %1731 = vmatpush1.msra.mxu0 %v1039
  %1732 = vmatprep.subr.mxu0 0.0
  %1733 = vmatpush1.msra.mxu0 0.0
  %1734 = vmatprep.subr.mxu0 0.0
  %1735 = vmatpush1.msra.mxu0 0.0
  %1736 = vmatprep.subr.mxu0 0.0
  %1737 = vmatpush1.msra.mxu0 0.0
  %1738 = vmatprep.subr.mxu0 0.0
  %1739 = vmatpush1.msra.mxu0 0.0
  %1740 = vmatprep.subr.mxu0 0.0
  %1741 = vmatpush1.msra.mxu0 0.0
  %1742 = vmatprep.subr.mxu0 0.0
  %1743 = vmatpush1.msra.mxu0 0.0
  %1744 = vmatprep.subr.mxu0 0.0
  %1745 = vmatpush1.msra.mxu0 0.0
  %1746 = vmatprep.subr.mxu0 0.0
  %1747 = vmatpush1.msra.mxu0 0.0
  %1748 = vmatprep.subr.mxu0 0.0
  %1749 = vmatpush1.msra.mxu0 0.0
  %1750 = vmatprep.subr.mxu0 0.0
  %1751 = vmatpush1.msra.mxu0 0.0
  %1752 = vmatprep.subr.mxu0 0.0
  %1753 = vmatpush1.msra.mxu0 0.0
  %1754 = vmatprep.subr.mxu0 0.0
  %1755 = vmatpush1.msra.mxu0 0.0
  %1756 = vmatprep.subr.mxu0 0.0
  %1757 = vmatpush1.msra.mxu0 0.0
  %1758 = vmatprep.subr.mxu0 0.0
  %1759 = vmatpush1.msra.mxu0 0.0
  %1760 = vmatprep.subr.mxu0 0.0
  %1761 = vmatpush1.msra.mxu0 0.0
  %1762 = vmatprep.subr.mxu0 0.0
  %1763 = vmatpush1.msra.mxu0 0.0
  %1764 = vmatprep.subr.mxu0 0.0
  %1765 = vmatpush1.msra.mxu0 0.0
  %1766 = vmatprep.subr.mxu0 0.0
  %1767 = vmatpush1.msra.mxu0 0.0
  %1768 = vmatprep.subr.mxu0 0.0
  %1769 = vmatpush1.msra.mxu0 0.0
  %1770 = vmatprep.subr.mxu0 0.0
  %1771 = vmatpush1.msra.mxu0 0.0
  %1772 = vmatprep.subr.mxu0 0.0
  %1773 = vmatpush1.msra.mxu0 0.0
  %1774 = vmatprep.subr.mxu0 0.0
  %1775 = vmatpush1.msra.mxu0 0.0
  %1776 = vmatprep.subr.mxu0 0.0
  %1777 = vmatpush1.msra.mxu0 0.0
  %1778 = vmatprep.subr.mxu0 0.0
  %1779 = vmatpush1.msra.mxu0 0.0
  %1780 = vmatprep.subr.mxu0 0.0
  %1781 = vmatpush1.msra.mxu0 0.0
  %1782 = vmatprep.subr.mxu0 0.0
  %1783 = vmatpush1.msra.mxu0 0.0
  %1784 = vmatprep.subr.mxu0 0.0
  %1785 = vmatpush1.msra.mxu0 0.0
  %1786 = vmatprep.subr.mxu0 0.0
  %1787 = vmatpush1.msra.mxu0 0.0
  %1788 = vmatprep.mubr.f32.mxu0 0.0
  %1789 = vmatmul.mubr.f32.gmra.mrb[0].mxu0 %v1722
  %v1790 = vpop.f32.mrb[0].mxu0
  %v1791 = vadd.f32 0.0, %v1790
  %v1792 = vpop.f32.mrb[0].mxu0
  %1793 = vdwg.mxu0
  %v1794 = vadd.f32 %v1721, %v1791
  %v1795 = vxor.u32 %v1794, 2147483648
  %v1796 = vmul.f32 %v1795, 1.442695
  %v1797 = vpow.pop %v1796
  %v1798 = vadd.f32 %v1797, 1.0
  %v1799 = vrcp.pop %v1798
  %v1800 = vmul.f32 1.0, %v1799
  %v1801 = vtanh.pop %v1794
  %v1802 = vmul.f32 %v1800, %v1709
  %1804 = vrot.lane.b32.xlu0 %v1801, 32
  %v1805 = vpop.permute.xlu0 %1804
  %v1807 = vmul.f32 %v1800, %v1805
  %1809 = vrot.lane.b32.xlu0 %v1807, 32
  %v1810 = vpop.permute.xlu0 %1809
  %v1812 = vadd.f32 %v1802, %v1810
  %v1813 = vtanh.pop %v1812
  %1815 = vrot.lane.b32.xlu0 %v1813, 32
  %v1816 = vpop.permute.xlu0 %1815
  %v1818 = vmul.f32 %v1800, %v1816
  %1820 = vrot.lane.b32.xlu0 %v1818, 64
  %v1821 = vpop.permute.xlu0 %1820
  %1823 = vst.msk [vmem:[%s817] sm:$0xff] %vm186, %v1821
  %v1824 = vld [vmem:[%s819] sm:$0xff]
  %v1825 = vsel %vm186, %v1821, 0
  %1827 = vmatprep.subr.mxu0 0.0
  %1828 = vmatpush1.msra.mxu0 %v1036
  %1829 = vmatprep.subr.mxu0 0.0
  %1830 = vmatpush1.msra.mxu0 %v1037
  %1831 = vmatprep.subr.mxu0 0.0
  %1832 = vmatpush1.msra.mxu0 %v1038
  %1833 = vmatprep.subr.mxu0 0.0
  %1834 = vmatpush1.msra.mxu0 %v1039
  %1835 = vmatprep.subr.mxu0 0.0
  %1836 = vmatpush1.msra.mxu0 0.0
  %1837 = vmatprep.subr.mxu0 0.0
  %1838 = vmatpush1.msra.mxu0 0.0
  %1839 = vmatprep.subr.mxu0 0.0
  %1840 = vmatpush1.msra.mxu0 0.0
  %1841 = vmatprep.subr.mxu0 0.0
  %1842 = vmatpush1.msra.mxu0 0.0
  %1843 = vmatprep.subr.mxu0 0.0
  %1844 = vmatpush1.msra.mxu0 0.0
  %1845 = vmatprep.subr.mxu0 0.0
  %1846 = vmatpush1.msra.mxu0 0.0
  %1847 = vmatprep.subr.mxu0 0.0
  %1848 = vmatpush1.msra.mxu0 0.0
  %1849 = vmatprep.subr.mxu0 0.0
  %1850 = vmatpush1.msra.mxu0 0.0
  %1851 = vmatprep.subr.mxu0 0.0
  %1852 = vmatpush1.msra.mxu0 0.0
  %1853 = vmatprep.subr.mxu0 0.0
  %1854 = vmatpush1.msra.mxu0 0.0
  %1855 = vmatprep.subr.mxu0 0.0
  %1856 = vmatpush1.msra.mxu0 0.0
  %1857 = vmatprep.subr.mxu0 0.0
  %1858 = vmatpush1.msra.mxu0 0.0
  %1859 = vmatprep.subr.mxu0 0.0
  %1860 = vmatpush1.msra.mxu0 0.0
  %1861 = vmatprep.subr.mxu0 0.0
  %1862 = vmatpush1.msra.mxu0 0.0
  %1863 = vmatprep.subr.mxu0 0.0
  %1864 = vmatpush1.msra.mxu0 0.0
  %1865 = vmatprep.subr.mxu0 0.0
  %1866 = vmatpush1.msra.mxu0 0.0
  %1867 = vmatprep.subr.mxu0 0.0
  %1868 = vmatpush1.msra.mxu0 0.0
  %1869 = vmatprep.subr.mxu0 0.0
  %1870 = vmatpush1.msra.mxu0 0.0
  %1871 = vmatprep.subr.mxu0 0.0
  %1872 = vmatpush1.msra.mxu0 0.0
  %1873 = vmatprep.subr.mxu0 0.0
  %1874 = vmatpush1.msra.mxu0 0.0
  %1875 = vmatprep.subr.mxu0 0.0
  %1876 = vmatpush1.msra.mxu0 0.0
  %1877 = vmatprep.subr.mxu0 0.0
  %1878 = vmatpush1.msra.mxu0 0.0
  %1879 = vmatprep.subr.mxu0 0.0
  %1880 = vmatpush1.msra.mxu0 0.0
  %1881 = vmatprep.subr.mxu0 0.0
  %1882 = vmatpush1.msra.mxu0 0.0
  %1883 = vmatprep.subr.mxu0 0.0
  %1884 = vmatpush1.msra.mxu0 0.0
  %1885 = vmatprep.subr.mxu0 0.0
  %1886 = vmatpush1.msra.mxu0 0.0
  %1887 = vmatprep.subr.mxu0 0.0
  %1888 = vmatpush1.msra.mxu0 0.0
  %1889 = vmatprep.subr.mxu0 0.0
  %1890 = vmatpush1.msra.mxu0 0.0
  %1891 = vmatprep.mubr.f32.mxu0 0.0
  %1892 = vmatmul.mubr.f32.gmra.mrb[0].mxu0 %v1825
  %v1893 = vpop.f32.mrb[0].mxu0
  %v1894 = vadd.f32 0.0, %v1893
  %v1895 = vpop.f32.mrb[0].mxu0
  %1896 = vdwg.mxu0
  %v1897 = vadd.f32 %v1824, %v1894
  %v1898 = vxor.u32 %v1897, 2147483648
  %v1899 = vmul.f32 %v1898, 1.442695
  %v1900 = vpow.pop %v1899
  %v1901 = vadd.f32 %v1900, 1.0
  %v1902 = vrcp.pop %v1901
  %v1903 = vmul.f32 1.0, %v1902
  %v1904 = vtanh.pop %v1897
  %v1905 = vmul.f32 %v1903, %v1812
  %1907 = vrot.lane.b32.xlu0 %v1904, 32
  %v1908 = vpop.permute.xlu0 %1907
  %v1910 = vmul.f32 %v1903, %v1908
  %1912 = vrot.lane.b32.xlu0 %v1910, 32
  %v1913 = vpop.permute.xlu0 %1912
  %v1915 = vadd.f32 %v1905, %v1913
  %v1916 = vtanh.pop %v1915
  %1918 = vrot.lane.b32.xlu0 %v1916, 32
  %v1919 = vpop.permute.xlu0 %1918
  %v1921 = vmul.f32 %v1903, %v1919
  %1923 = vrot.lane.b32.xlu0 %v1921, 64
  %v1924 = vpop.permute.xlu0 %1923
  %1926 = vst.msk [vmem:[%s922] sm:$0xff] %vm186, %v1924
  %v1927 = vld [vmem:[%s924] sm:$0xff]
  %v1928 = vsel %vm186, %v1924, 0
  %1930 = vmatprep.subr.mxu0 0.0
  %1931 = vmatpush1.msra.mxu0 %v1036
  %1932 = vmatprep.subr.mxu0 0.0
  %1933 = vmatpush1.msra.mxu0 %v1037
  %1934 = vmatprep.subr.mxu0 0.0
  %1935 = vmatpush1.msra.mxu0 %v1038
  %1936 = vmatprep.subr.mxu0 0.0
  %1937 = vmatpush1.msra.mxu0 %v1039
  %1938 = vmatprep.subr.mxu0 0.0
  %1939 = vmatpush1.msra.mxu0 0.0
  %1940 = vmatprep.subr.mxu0 0.0
  %1941 = vmatpush1.msra.mxu0 0.0
  %1942 = vmatprep.subr.mxu0 0.0
  %1943 = vmatpush1.msra.mxu0 0.0
  %1944 = vmatprep.subr.mxu0 0.0
  %1945 = vmatpush1.msra.mxu0 0.0
  %1946 = vmatprep.subr.mxu0 0.0
  %1947 = vmatpush1.msra.mxu0 0.0
  %1948 = vmatprep.subr.mxu0 0.0
  %1949 = vmatpush1.msra.mxu0 0.0
  %1950 = vmatprep.subr.mxu0 0.0
  %1951 = vmatpush1.msra.mxu0 0.0
  %1952 = vmatprep.subr.mxu0 0.0
  %1953 = vmatpush1.msra.mxu0 0.0
  %1954 = vmatprep.subr.mxu0 0.0
  %1955 = vmatpush1.msra.mxu0 0.0
  %1956 = vmatprep.subr.mxu0 0.0
  %1957 = vmatpush1.msra.mxu0 0.0
  %1958 = vmatprep.subr.mxu0 0.0
  %1959 = vmatpush1.msra.mxu0 0.0
  %1960 = vmatprep.subr.mxu0 0.0
  %1961 = vmatpush1.msra.mxu0 0.0
  %1962 = vmatprep.subr.mxu0 0.0
  %1963 = vmatpush1.msra.mxu0 0.0
  %1964 = vmatprep.subr.mxu0 0.0
  %1965 = vmatpush1.msra.mxu0 0.0
  %1966 = vmatprep.subr.mxu0 0.0
  %1967 = vmatpush1.msra.mxu0 0.0
  %1968 = vmatprep.subr.mxu0 0.0
  %1969 = vmatpush1.msra.mxu0 0.0
  %1970 = vmatprep.subr.mxu0 0.0
  %1971 = vmatpush1.msra.mxu0 0.0
  %1972 = vmatprep.subr.mxu0 0.0
  %1973 = vmatpush1.msra.mxu0 0.0
  %1974 = vmatprep.subr.mxu0 0.0
  %1975 = vmatpush1.msra.mxu0 0.0
  %1976 = vmatprep.subr.mxu0 0.0
  %1977 = vmatpush1.msra.mxu0 0.0
  %1978 = vmatprep.subr.mxu0 0.0
  %1979 = vmatpush1.msra.mxu0 0.0
  %1980 = vmatprep.subr.mxu0 0.0
  %1981 = vmatpush1.msra.mxu0 0.0
  %1982 = vmatprep.subr.mxu0 0.0
  %1983 = vmatpush1.msra.mxu0 0.0
  %1984 = vmatprep.subr.mxu0 0.0
  %1985 = vmatpush1.msra.mxu0 0.0
  %1986 = vmatprep.subr.mxu0 0.0
  %1987 = vmatpush1.msra.mxu0 0.0
  %1988 = vmatprep.subr.mxu0 0.0
  %1989 = vmatpush1.msra.mxu0 0.0
  %1990 = vmatprep.subr.mxu0 0.0
  %1991 = vmatpush1.msra.mxu0 0.0
  %1992 = vmatprep.subr.mxu0 0.0
  %1993 = vmatpush1.msra.mxu0 0.0
  %1994 = vmatprep.mubr.f32.mxu0 0.0
  %1995 = vmatmul.mubr.f32.gmra.mrb[0].mxu0 %v1928
  %v1996 = vpop.f32.mrb[0].mxu0
  %v1997 = vadd.f32 0.0, %v1996
  %v1998 = vpop.f32.mrb[0].mxu0
  %1999 = vdwg.mxu0
  %v2000 = vadd.f32 %v1927, %v1997
  %v2001 = vxor.u32 %v2000, 2147483648
  %v2002 = vmul.f32 %v2001, 1.442695
  %v2003 = vpow.pop %v2002
  %v2004 = vadd.f32 %v2003, 1.0
  %v2005 = vrcp.pop %v2004
  %v2006 = vmul.f32 1.0, %v2005
  %v2007 = vtanh.pop %v2000
  %v2008 = vmul.f32 %v2006, %v1915
  %2010 = vrot.lane.b32.xlu0 %v2007, 32
  %v2011 = vpop.permute.xlu0 %2010
  %v2013 = vmul.f32 %v2006, %v2011
  %2015 = vrot.lane.b32.xlu0 %v2013, 32
  %v2016 = vpop.permute.xlu0 %2015
  %v2018 = vadd.f32 %v2008, %v2016
  %v2019 = vtanh.pop %v2018
  %2021 = vrot.lane.b32.xlu0 %v2019, 32
  %v2022 = vpop.permute.xlu0 %2021
  %v2024 = vmul.f32 %v2006, %v2022
  %2026 = vrot.lane.b32.xlu0 %v2024, 64
  %v2027 = vpop.permute.xlu0 %2026
  %2029 = vst.msk [vmem:[%s1027] sm:$0xff] %vm186, %v2027
  %s2030 = scalar_lea.vmem %s12, 8
  %2031 = vst.msk [vmem:[%s2030] sm:$0xff] %vm186, %v2027
  %2033 = vrot.lane.b32.xlu0 %v2018, 96
  %v2034 = vpop.permute.xlu0 %2033
  %s2036 = scalar_lea.vmem %s13, 8
  %2037 = vst.msk [vmem:[%s2036] sm:$0xff] %vm186, %v2034
  %s2038 = scalar_lea.vmem %s5, 64
  %v2039 = vld [vmem:[%s2038] sm:$0xff]
  %v2040 = vld [vmem:[%s2038 + $0x8] sm:$0xff]
  %v2041 = vld [vmem:[%s2038 + $0x10] sm:$0xff]
  %v2042 = vld [vmem:[%s2038 + $0x18] sm:$0xff]
  %v2043 = vld [vmem:[#allocation2] sm:$0xff]
  %v2044 = vld [vmem:[#allocation2 + $0x8] sm:$0xff]
  %v2045 = vld [vmem:[#allocation2 + $0x10] sm:$0xff]
  %v2046 = vld [vmem:[#allocation2 + $0x18] sm:$0xff]
  %v2047 = vld [vmem:[#allocation2 + $0x20] sm:$0xff]
  %v2048 = vld [vmem:[#allocation2 + $0x28] sm:$0xff]
  %v2049 = vld [vmem:[#allocation2 + $0x30] sm:$0xff]
  %v2050 = vld [vmem:[#allocation2 + $0x38] sm:$0xff]
  %s2051 = scalar_lea.vmem %s4, 32
  %v2052 = vld [vmem:[%s2051] sm:$0xff]
  %v2053 = vld [vmem:[%s2051 + $0x8] sm:$0xff]
  %v2054 = vld [vmem:[%s2051 + $0x10] sm:$0xff]
  %v2055 = vld [vmem:[%s2051 + $0x18] sm:$0xff]
  %s2056 = scalar_lea.vmem %s6, 2
  %v2057 = vld [vmem:[%s2056] sm:$0x1]
  %v2059 = vlaneseq
  %v2060 = vshrl.u32 %v2059, 7
  %v2061 = vsub.s32 0, %v2060
  %v2062 = vrot.slane %v2057, %v2061
  %v2065 = vsel %vm186, %v2043, 0
  %v2068 = vsel %vm186, %v2044, 0
  %v2071 = vsel %vm186, %v2045, 0
  %v2074 = vsel %vm186, %v2046, 0
  %v2077 = vsel %vm186, %v2047, 0
  %v2080 = vsel %vm186, %v2048, 0
  %v2083 = vsel %vm186, %v2049, 0
  %v2086 = vsel %vm186, %v2050, 0
  %2088 = vmatprep.subr.mxu0 0.0
  %2089 = vmatpush1.msra.mxu0 %v2052
  %2090 = vmatprep.subr.mxu0 0.0
  %2091 = vmatpush1.msra.mxu0 %v2053
  %2092 = vmatprep.subr.mxu0 0.0
  %2093 = vmatpush1.msra.mxu0 %v2054
  %2094 = vmatprep.subr.mxu0 0.0
  %2095 = vmatpush1.msra.mxu0 %v2055
  %2096 = vmatprep.subr.mxu0 0.0
  %2097 = vmatpush1.msra.mxu0 0.0
  %2098 = vmatprep.subr.mxu0 0.0
  %2099 = vmatpush1.msra.mxu0 0.0
  %2100 = vmatprep.subr.mxu0 0.0
  %2101 = vmatpush1.msra.mxu0 0.0
  %2102 = vmatprep.subr.mxu0 0.0
  %2103 = vmatpush1.msra.mxu0 0.0
  %2104 = vmatprep.subr.mxu0 0.0
  %2105 = vmatpush1.msra.mxu0 0.0
  %2106 = vmatprep.subr.mxu0 0.0
  %2107 = vmatpush1.msra.mxu0 0.0
  %2108 = vmatprep.subr.mxu0 0.0
  %2109 = vmatpush1.msra.mxu0 0.0
  %2110 = vmatprep.subr.mxu0 0.0
  %2111 = vmatpush1.msra.mxu0 0.0
  %2112 = vmatprep.subr.mxu0 0.0
  %2113 = vmatpush1.msra.mxu0 0.0
  %2114 = vmatprep.subr.mxu0 0.0
  %2115 = vmatpush1.msra.mxu0 0.0
  %2116 = vmatprep.subr.mxu0 0.0
  %2117 = vmatpush1.msra.mxu0 0.0
  %2118 = vmatprep.subr.mxu0 0.0
  %2119 = vmatpush1.msra.mxu0 0.0
  %2120 = vmatprep.subr.mxu0 0.0
  %2121 = vmatpush1.msra.mxu0 0.0
  %2122 = vmatprep.subr.mxu0 0.0
  %2123 = vmatpush1.msra.mxu0 0.0
  %2124 = vmatprep.subr.mxu0 0.0
  %2125 = vmatpush1.msra.mxu0 0.0
  %2126 = vmatprep.subr.mxu0 0.0
  %2127 = vmatpush1.msra.mxu0 0.0
  %2128 = vmatprep.subr.mxu0 0.0
  %2129 = vmatpush1.msra.mxu0 0.0
  %2130 = vmatprep.subr.mxu0 0.0
  %2131 = vmatpush1.msra.mxu0 0.0
  %2132 = vmatprep.subr.mxu0 0.0
  %2133 = vmatpush1.msra.mxu0 0.0
  %2134 = vmatprep.subr.mxu0 0.0
  %2135 = vmatpush1.msra.mxu0 0.0
  %2136 = vmatprep.subr.mxu0 0.0
  %2137 = vmatpush1.msra.mxu0 0.0
  %2138 = vmatprep.subr.mxu0 0.0
  %2139 = vmatpush1.msra.mxu0 0.0
  %2140 = vmatprep.subr.mxu0 0.0
  %2141 = vmatpush1.msra.mxu0 0.0
  %2142 = vmatprep.subr.mxu0 0.0
  %2143 = vmatpush1.msra.mxu0 0.0
  %2144 = vmatprep.subr.mxu0 0.0
  %2145 = vmatpush1.msra.mxu0 0.0
  %2146 = vmatprep.subr.mxu0 0.0
  %2147 = vmatpush1.msra.mxu0 0.0
  %2148 = vmatprep.subr.mxu0 0.0
  %2149 = vmatpush1.msra.mxu0 0.0
  %2150 = vmatprep.subr.mxu0 0.0
  %2151 = vmatpush1.msra.mxu0 0.0
  %2152 = vmatprep.mubr.f32.mxu0 0.0
  %2153 = vmatmul.mubr.f32.gmra.mrb[0].mxu0 %v2065
  %v2154 = vpop.f32.mrb[0].mxu0
  %v2155 = vadd.f32 %v2062, %v2154
  %v2156 = vpop.f32.mrb[0].mxu0
  %2157 = vmatprep.mubr.f32.mxu0 0.0
  %2158 = vmatmul.mubr.f32.gmra.mrb[0].mxu0 %v2068
  %v2159 = vpop.f32.mrb[0].mxu0
  %v2160 = vadd.f32 %v2062, %v2159
  %v2161 = vpop.f32.mrb[0].mxu0
  %2162 = vmatprep.mubr.f32.mxu0 0.0
  %2163 = vmatmul.mubr.f32.gmra.mrb[0].mxu0 %v2071
  %v2164 = vpop.f32.mrb[0].mxu0
  %v2165 = vadd.f32 %v2062, %v2164
  %v2166 = vpop.f32.mrb[0].mxu0
  %2167 = vmatprep.mubr.f32.mxu0 0.0
  %2168 = vmatmul.mubr.f32.gmra.mrb[0].mxu0 %v2074
  %v2169 = vpop.f32.mrb[0].mxu0
  %v2170 = vadd.f32 %v2062, %v2169
  %v2171 = vpop.f32.mrb[0].mxu0
  %2172 = vmatprep.mubr.f32.mxu0 0.0
  %2173 = vmatmul.mubr.f32.gmra.mrb[0].mxu0 %v2077
  %v2174 = vpop.f32.mrb[0].mxu0
  %v2175 = vadd.f32 %v2062, %v2174
  %v2176 = vpop.f32.mrb[0].mxu0
  %2177 = vmatprep.mubr.f32.mxu0 0.0
  %2178 = vmatmul.mubr.f32.gmra.mrb[0].mxu0 %v2080
  %v2179 = vpop.f32.mrb[0].mxu0
  %v2180 = vadd.f32 %v2062, %v2179
  %v2181 = vpop.f32.mrb[0].mxu0
  %2182 = vmatprep.mubr.f32.mxu0 0.0
  %2183 = vmatmul.mubr.f32.gmra.mrb[0].mxu0 %v2083
  %v2184 = vpop.f32.mrb[0].mxu0
  %v2185 = vadd.f32 %v2062, %v2184
  %v2186 = vpop.f32.mrb[0].mxu0
  %2187 = vmatprep.mubr.f32.mxu0 0.0
  %2188 = vmatmul.mubr.f32.gmra.mrb[0].mxu0 %v2086
  %v2189 = vpop.f32.mrb[0].mxu0
  %v2190 = vadd.f32 %v2062, %v2189
  %v2191 = vpop.f32.mrb[0].mxu0
  %2192 = vdwg.mxu0
  %2193 = vst [vmem:[#allocation3] sm:$0xff] %v2155
  %2194 = vst [vmem:[#allocation3 + $0x8] sm:$0xff] %v2160
  %2195 = vst [vmem:[#allocation3 + $0x10] sm:$0xff] %v2165
  %2196 = vst [vmem:[#allocation3 + $0x18] sm:$0xff] %v2170
  %2197 = vst [vmem:[#allocation3 + $0x20] sm:$0xff] %v2175
  %2198 = vst [vmem:[#allocation3 + $0x28] sm:$0xff] %v2180
  %2199 = vst [vmem:[#allocation3 + $0x30] sm:$0xff] %v2185
  %2200 = vst [vmem:[#allocation3 + $0x38] sm:$0xff] %v2190
  %s2201 = scalar_lea.vmem %s1, 16
  %v2202 = vld [vmem:[%s2201] sm:$0xff]
  %s2203 = scalar_lea.vmem %s2, 16
  %v2204 = vld [vmem:[%s2203] sm:$0xff]
  %v2205 = vld [vmem:[#allocation3] sm:$0xff]
  %v2207 = vsel %vm186, %v2202, 0
  %2209 = vmatprep.subr.mxu0 0.0
  %2210 = vmatpush1.msra.mxu0 %v2039
  %2211 = vmatprep.subr.mxu0 0.0
  %2212 = vmatpush1.msra.mxu0 %v2040
  %2213 = vmatprep.subr.mxu0 0.0
  %2214 = vmatpush1.msra.mxu0 %v2041
  %2215 = vmatprep.subr.mxu0 0.0
  %2216 = vmatpush1.msra.mxu0 %v2042
  %2217 = vmatprep.subr.mxu0 0.0
  %2218 = vmatpush1.msra.mxu0 0.0
  %2219 = vmatprep.subr.mxu0 0.0
  %2220 = vmatpush1.msra.mxu0 0.0
  %2221 = vmatprep.subr.mxu0 0.0
  %2222 = vmatpush1.msra.mxu0 0.0
  %2223 = vmatprep.subr.mxu0 0.0
  %2224 = vmatpush1.msra.mxu0 0.0
  %2225 = vmatprep.subr.mxu0 0.0
  %2226 = vmatpush1.msra.mxu0 0.0
  %2227 = vmatprep.subr.mxu0 0.0
  %2228 = vmatpush1.msra.mxu0 0.0
  %2229 = vmatprep.subr.mxu0 0.0
  %2230 = vmatpush1.msra.mxu0 0.0
  %2231 = vmatprep.subr.mxu0 0.0
  %2232 = vmatpush1.msra.mxu0 0.0
  %2233 = vmatprep.subr.mxu0 0.0
  %2234 = vmatpush1.msra.mxu0 0.0
  %2235 = vmatprep.subr.mxu0 0.0
  %2236 = vmatpush1.msra.mxu0 0.0
  %2237 = vmatprep.subr.mxu0 0.0
  %2238 = vmatpush1.msra.mxu0 0.0
  %2239 = vmatprep.subr.mxu0 0.0
  %2240 = vmatpush1.msra.mxu0 0.0
  %2241 = vmatprep.subr.mxu0 0.0
  %2242 = vmatpush1.msra.mxu0 0.0
  %2243 = vmatprep.subr.mxu0 0.0
  %2244 = vmatpush1.msra.mxu0 0.0
  %2245 = vmatprep.subr.mxu0 0.0
  %2246 = vmatpush1.msra.mxu0 0.0
  %2247 = vmatprep.subr.mxu0 0.0
  %2248 = vmatpush1.msra.mxu0 0.0
  %2249 = vmatprep.subr.mxu0 0.0
  %2250 = vmatpush1.msra.mxu0 0.0
  %2251 = vmatprep.subr.mxu0 0.0
  %2252 = vmatpush1.msra.mxu0 0.0
  %2253 = vmatprep.subr.mxu0 0.0
  %2254 = vmatpush1.msra.mxu0 0.0
  %2255 = vmatprep.subr.mxu0 0.0
  %2256 = vmatpush1.msra.mxu0 0.0
  %2257 = vmatprep.subr.mxu0 0.0
  %2258 = vmatpush1.msra.mxu0 0.0
  %2259 = vmatprep.subr.mxu0 0.0
  %2260 = vmatpush1.msra.mxu0 0.0
  %2261 = vmatprep.subr.mxu0 0.0
  %2262 = vmatpush1.msra.mxu0 0.0
  %2263 = vmatprep.subr.mxu0 0.0
  %2264 = vmatpush1.msra.mxu0 0.0
  %2265 = vmatprep.subr.mxu0 0.0
  %2266 = vmatpush1.msra.mxu0 0.0
  %2267 = vmatprep.subr.mxu0 0.0
  %2268 = vmatpush1.msra.mxu0 0.0
  %2269 = vmatprep.subr.mxu0 0.0
  %2270 = vmatpush1.msra.mxu0 0.0
  %2271 = vmatprep.subr.mxu0 0.0
  %2272 = vmatpush1.msra.mxu0 0.0
  %2273 = vmatprep.mubr.f32.mxu0 0.0
  %2274 = vmatmul.mubr.f32.gmra.mrb[0].mxu0 %v2207
  %v2275 = vpop.f32.mrb[0].mxu0
  %v2276 = vadd.f32 0.0, %v2275
  %v2277 = vpop.f32.mrb[0].mxu0
  %2278 = vdwg.mxu0
  %v2279 = vadd.f32 %v2205, %v2276
  %v2280 = vxor.u32 %v2279, 2147483648
  %v2281 = vmul.f32 %v2280, 1.442695
  %v2282 = vpow.pop %v2281
  %v2283 = vadd.f32 %v2282, 1.0
  %v2284 = vrcp.pop %v2283
  %v2285 = vmul.f32 1.0, %v2284
  %v2286 = vtanh.pop %v2279
  %2288 = vrot.lane.b32.xlu0 %v2204, 32
  %v2289 = vpop.permute.xlu0 %2288
  %v2291 = vmul.f32 %v2285, %v2289
  %2293 = vrot.lane.b32.xlu0 %v2286, 32
  %v2294 = vpop.permute.xlu0 %2293
  %v2296 = vmul.f32 %v2285, %v2294
  %2298 = vrot.lane.b32.xlu0 %v2296, 32
  %v2299 = vpop.permute.xlu0 %2298
  %v2301 = vadd.f32 %v2291, %v2299
  %v2302 = vtanh.pop %v2301
  %2304 = vrot.lane.b32.xlu0 %v2302, 32
  %v2305 = vpop.permute.xlu0 %2304
  %v2307 = vmul.f32 %v2285, %v2305
  %2309 = vrot.lane.b32.xlu0 %v2307, 64
  %v2310 = vpop.permute.xlu0 %2309
  %2312 = vst.msk [vmem:[#allocation2] sm:$0xff] %vm186, %v2310
  %v2313 = vld [vmem:[%s294] sm:$0xff]
  %v2314 = vsel %vm186, %v2310, 0
  %2316 = vmatprep.subr.mxu0 0.0
  %2317 = vmatpush1.msra.mxu0 %v2039
  %2318 = vmatprep.subr.mxu0 0.0
  %2319 = vmatpush1.msra.mxu0 %v2040
  %2320 = vmatprep.subr.mxu0 0.0
  %2321 = vmatpush1.msra.mxu0 %v2041
  %2322 = vmatprep.subr.mxu0 0.0
  %2323 = vmatpush1.msra.mxu0 %v2042
  %2324 = vmatprep.subr.mxu0 0.0
  %2325 = vmatpush1.msra.mxu0 0.0
  %2326 = vmatprep.subr.mxu0 0.0
  %2327 = vmatpush1.msra.mxu0 0.0
  %2328 = vmatprep.subr.mxu0 0.0
  %2329 = vmatpush1.msra.mxu0 0.0
  %2330 = vmatprep.subr.mxu0 0.0
  %2331 = vmatpush1.msra.mxu0 0.0
  %2332 = vmatprep.subr.mxu0 0.0
  %2333 = vmatpush1.msra.mxu0 0.0
  %2334 = vmatprep.subr.mxu0 0.0
  %2335 = vmatpush1.msra.mxu0 0.0
  %2336 = vmatprep.subr.mxu0 0.0
  %2337 = vmatpush1.msra.mxu0 0.0
  %2338 = vmatprep.subr.mxu0 0.0
  %2339 = vmatpush1.msra.mxu0 0.0
  %2340 = vmatprep.subr.mxu0 0.0
  %2341 = vmatpush1.msra.mxu0 0.0
  %2342 = vmatprep.subr.mxu0 0.0
  %2343 = vmatpush1.msra.mxu0 0.0
  %2344 = vmatprep.subr.mxu0 0.0
  %2345 = vmatpush1.msra.mxu0 0.0
  %2346 = vmatprep.subr.mxu0 0.0
  %2347 = vmatpush1.msra.mxu0 0.0
  %2348 = vmatprep.subr.mxu0 0.0
  %2349 = vmatpush1.msra.mxu0 0.0
  %2350 = vmatprep.subr.mxu0 0.0
  %2351 = vmatpush1.msra.mxu0 0.0
  %2352 = vmatprep.subr.mxu0 0.0
  %2353 = vmatpush1.msra.mxu0 0.0
  %2354 = vmatprep.subr.mxu0 0.0
  %2355 = vmatpush1.msra.mxu0 0.0
  %2356 = vmatprep.subr.mxu0 0.0
  %2357 = vmatpush1.msra.mxu0 0.0
  %2358 = vmatprep.subr.mxu0 0.0
  %2359 = vmatpush1.msra.mxu0 0.0
  %2360 = vmatprep.subr.mxu0 0.0
  %2361 = vmatpush1.msra.mxu0 0.0
  %2362 = vmatprep.subr.mxu0 0.0
  %2363 = vmatpush1.msra.mxu0 0.0
  %2364 = vmatprep.subr.mxu0 0.0
  %2365 = vmatpush1.msra.mxu0 0.0
  %2366 = vmatprep.subr.mxu0 0.0
  %2367 = vmatpush1.msra.mxu0 0.0
  %2368 = vmatprep.subr.mxu0 0.0
  %2369 = vmatpush1.msra.mxu0 0.0
  %2370 = vmatprep.subr.mxu0 0.0
  %2371 = vmatpush1.msra.mxu0 0.0
  %2372 = vmatprep.subr.mxu0 0.0
  %2373 = vmatpush1.msra.mxu0 0.0
  %2374 = vmatprep.subr.mxu0 0.0
  %2375 = vmatpush1.msra.mxu0 0.0
  %2376 = vmatprep.subr.mxu0 0.0
  %2377 = vmatpush1.msra.mxu0 0.0
  %2378 = vmatprep.subr.mxu0 0.0
  %2379 = vmatpush1.msra.mxu0 0.0
  %2380 = vmatprep.mubr.f32.mxu0 0.0
  %2381 = vmatmul.mubr.f32.gmra.mrb[0].mxu0 %v2314
  %v2382 = vpop.f32.mrb[0].mxu0
  %v2383 = vadd.f32 0.0, %v2382
  %v2384 = vpop.f32.mrb[0].mxu0
  %2385 = vdwg.mxu0
  %v2386 = vadd.f32 %v2313, %v2383
  %v2387 = vxor.u32 %v2386, 2147483648
  %v2388 = vmul.f32 %v2387, 1.442695
  %v2389 = vpow.pop %v2388
  %v2390 = vadd.f32 %v2389, 1.0
  %v2391 = vrcp.pop %v2390
  %v2392 = vmul.f32 1.0, %v2391
  %v2393 = vtanh.pop %v2386
  %v2394 = vmul.f32 %v2392, %v2301
  %2396 = vrot.lane.b32.xlu0 %v2393, 32
  %v2397 = vpop.permute.xlu0 %2396
  %v2399 = vmul.f32 %v2392, %v2397
  %2401 = vrot.lane.b32.xlu0 %v2399, 32
  %v2402 = vpop.permute.xlu0 %2401
  %v2404 = vadd.f32 %v2394, %v2402
  %v2405 = vtanh.pop %v2404
  %2407 = vrot.lane.b32.xlu0 %v2405, 32
  %v2408 = vpop.permute.xlu0 %2407
  %v2410 = vmul.f32 %v2392, %v2408
  %2412 = vrot.lane.b32.xlu0 %v2410, 64
  %v2413 = vpop.permute.xlu0 %2412
  %2415 = vst.msk [vmem:[%s397] sm:$0xff] %vm186, %v2413
  %v2416 = vld [vmem:[%s399] sm:$0xff]
  %v2417 = vsel %vm186, %v2413, 0
  %2419 = vmatprep.subr.mxu0 0.0
  %2420 = vmatpush1.msra.mxu0 %v2039
  %2421 = vmatprep.subr.mxu0 0.0
  %2422 = vmatpush1.msra.mxu0 %v2040
  %2423 = vmatprep.subr.mxu0 0.0
  %2424 = vmatpush1.msra.mxu0 %v2041
  %2425 = vmatprep.subr.mxu0 0.0
  %2426 = vmatpush1.msra.mxu0 %v2042
  %2427 = vmatprep.subr.mxu0 0.0
  %2428 = vmatpush1.msra.mxu0 0.0
  %2429 = vmatprep.subr.mxu0 0.0
  %2430 = vmatpush1.msra.mxu0 0.0
  %2431 = vmatprep.subr.mxu0 0.0
  %2432 = vmatpush1.msra.mxu0 0.0
  %2433 = vmatprep.subr.mxu0 0.0
  %2434 = vmatpush1.msra.mxu0 0.0
  %2435 = vmatprep.subr.mxu0 0.0
  %2436 = vmatpush1.msra.mxu0 0.0
  %2437 = vmatprep.subr.mxu0 0.0
  %2438 = vmatpush1.msra.mxu0 0.0
  %2439 = vmatprep.subr.mxu0 0.0
  %2440 = vmatpush1.msra.mxu0 0.0
  %2441 = vmatprep.subr.mxu0 0.0
  %2442 = vmatpush1.msra.mxu0 0.0
  %2443 = vmatprep.subr.mxu0 0.0
  %2444 = vmatpush1.msra.mxu0 0.0
  %2445 = vmatprep.subr.mxu0 0.0
  %2446 = vmatpush1.msra.mxu0 0.0
  %2447 = vmatprep.subr.mxu0 0.0
  %2448 = vmatpush1.msra.mxu0 0.0
  %2449 = vmatprep.subr.mxu0 0.0
  %2450 = vmatpush1.msra.mxu0 0.0
  %2451 = vmatprep.subr.mxu0 0.0
  %2452 = vmatpush1.msra.mxu0 0.0
  %2453 = vmatprep.subr.mxu0 0.0
  %2454 = vmatpush1.msra.mxu0 0.0
  %2455 = vmatprep.subr.mxu0 0.0
  %2456 = vmatpush1.msra.mxu0 0.0
  %2457 = vmatprep.subr.mxu0 0.0
  %2458 = vmatpush1.msra.mxu0 0.0
  %2459 = vmatprep.subr.mxu0 0.0
  %2460 = vmatpush1.msra.mxu0 0.0
  %2461 = vmatprep.subr.mxu0 0.0
  %2462 = vmatpush1.msra.mxu0 0.0
  %2463 = vmatprep.subr.mxu0 0.0
  %2464 = vmatpush1.msra.mxu0 0.0
  %2465 = vmatprep.subr.mxu0 0.0
  %2466 = vmatpush1.msra.mxu0 0.0
  %2467 = vmatprep.subr.mxu0 0.0
  %2468 = vmatpush1.msra.mxu0 0.0
  %2469 = vmatprep.subr.mxu0 0.0
  %2470 = vmatpush1.msra.mxu0 0.0
  %2471 = vmatprep.subr.mxu0 0.0
  %2472 = vmatpush1.msra.mxu0 0.0
  %2473 = vmatprep.subr.mxu0 0.0
  %2474 = vmatpush1.msra.mxu0 0.0
  %2475 = vmatprep.subr.mxu0 0.0
  %2476 = vmatpush1.msra.mxu0 0.0
  %2477 = vmatprep.subr.mxu0 0.0
  %2478 = vmatpush1.msra.mxu0 0.0
  %2479 = vmatprep.subr.mxu0 0.0
  %2480 = vmatpush1.msra.mxu0 0.0
  %2481 = vmatprep.subr.mxu0 0.0
  %2482 = vmatpush1.msra.mxu0 0.0
  %2483 = vmatprep.mubr.f32.mxu0 0.0
  %2484 = vmatmul.mubr.f32.gmra.mrb[0].mxu0 %v2417
  %v2485 = vpop.f32.mrb[0].mxu0
  %v2486 = vadd.f32 0.0, %v2485
  %v2487 = vpop.f32.mrb[0].mxu0
  %2488 = vdwg.mxu0
  %v2489 = vadd.f32 %v2416, %v2486
  %v2490 = vxor.u32 %v2489, 2147483648
  %v2491 = vmul.f32 %v2490, 1.442695
  %v2492 = vpow.pop %v2491
  %v2493 = vadd.f32 %v2492, 1.0
  %v2494 = vrcp.pop %v2493
  %v2495 = vmul.f32 1.0, %v2494
  %v2496 = vtanh.pop %v2489
  %v2497 = vmul.f32 %v2495, %v2404
  %2499 = vrot.lane.b32.xlu0 %v2496, 32
  %v2500 = vpop.permute.xlu0 %2499
  %v2502 = vmul.f32 %v2495, %v2500
  %2504 = vrot.lane.b32.xlu0 %v2502, 32
  %v2505 = vpop.permute.xlu0 %2504
  %v2507 = vadd.f32 %v2497, %v2505
  %v2508 = vtanh.pop %v2507
  %2510 = vrot.lane.b32.xlu0 %v2508, 32
  %v2511 = vpop.permute.xlu0 %2510
  %v2513 = vmul.f32 %v2495, %v2511
  %2515 = vrot.lane.b32.xlu0 %v2513, 64
  %v2516 = vpop.permute.xlu0 %2515
  %2518 = vst.msk [vmem:[%s502] sm:$0xff] %vm186, %v2516
  %v2519 = vld [vmem:[%s504] sm:$0xff]
  %v2520 = vsel %vm186, %v2516, 0
  %2522 = vmatprep.subr.mxu0 0.0
  %2523 = vmatpush1.msra.mxu0 %v2039
  %2524 = vmatprep.subr.mxu0 0.0
  %2525 = vmatpush1.msra.mxu0 %v2040
  %2526 = vmatprep.subr.mxu0 0.0
  %2527 = vmatpush1.msra.mxu0 %v2041
  %2528 = vmatprep.subr.mxu0 0.0
  %2529 = vmatpush1.msra.mxu0 %v2042
  %2530 = vmatprep.subr.mxu0 0.0
  %2531 = vmatpush1.msra.mxu0 0.0
  %2532 = vmatprep.subr.mxu0 0.0
  %2533 = vmatpush1.msra.mxu0 0.0
  %2534 = vmatprep.subr.mxu0 0.0
  %2535 = vmatpush1.msra.mxu0 0.0
  %2536 = vmatprep.subr.mxu0 0.0
  %2537 = vmatpush1.msra.mxu0 0.0
  %2538 = vmatprep.subr.mxu0 0.0
  %2539 = vmatpush1.msra.mxu0 0.0
  %2540 = vmatprep.subr.mxu0 0.0
  %2541 = vmatpush1.msra.mxu0 0.0
  %2542 = vmatprep.subr.mxu0 0.0
  %2543 = vmatpush1.msra.mxu0 0.0
  %2544 = vmatprep.subr.mxu0 0.0
  %2545 = vmatpush1.msra.mxu0 0.0
  %2546 = vmatprep.subr.mxu0 0.0
  %2547 = vmatpush1.msra.mxu0 0.0
  %2548 = vmatprep.subr.mxu0 0.0
  %2549 = vmatpush1.msra.mxu0 0.0
  %2550 = vmatprep.subr.mxu0 0.0
  %2551 = vmatpush1.msra.mxu0 0.0
  %2552 = vmatprep.subr.mxu0 0.0
  %2553 = vmatpush1.msra.mxu0 0.0
  %2554 = vmatprep.subr.mxu0 0.0
  %2555 = vmatpush1.msra.mxu0 0.0
  %2556 = vmatprep.subr.mxu0 0.0
  %2557 = vmatpush1.msra.mxu0 0.0
  %2558 = vmatprep.subr.mxu0 0.0
  %2559 = vmatpush1.msra.mxu0 0.0
  %2560 = vmatprep.subr.mxu0 0.0
  %2561 = vmatpush1.msra.mxu0 0.0
  %2562 = vmatprep.subr.mxu0 0.0
  %2563 = vmatpush1.msra.mxu0 0.0
  %2564 = vmatprep.subr.mxu0 0.0
  %2565 = vmatpush1.msra.mxu0 0.0
  %2566 = vmatprep.subr.mxu0 0.0
  %2567 = vmatpush1.msra.mxu0 0.0
  %2568 = vmatprep.subr.mxu0 0.0
  %2569 = vmatpush1.msra.mxu0 0.0
  %2570 = vmatprep.subr.mxu0 0.0
  %2571 = vmatpush1.msra.mxu0 0.0
  %2572 = vmatprep.subr.mxu0 0.0
  %2573 = vmatpush1.msra.mxu0 0.0
  %2574 = vmatprep.subr.mxu0 0.0
  %2575 = vmatpush1.msra.mxu0 0.0
  %2576 = vmatprep.subr.mxu0 0.0
  %2577 = vmatpush1.msra.mxu0 0.0
  %2578 = vmatprep.subr.mxu0 0.0
  %2579 = vmatpush1.msra.mxu0 0.0
  %2580 = vmatprep.subr.mxu0 0.0
  %2581 = vmatpush1.msra.mxu0 0.0
  %2582 = vmatprep.subr.mxu0 0.0
  %2583 = vmatpush1.msra.mxu0 0.0
  %2584 = vmatprep.subr.mxu0 0.0
  %2585 = vmatpush1.msra.mxu0 0.0
  %2586 = vmatprep.mubr.f32.mxu0 0.0
  %2587 = vmatmul.mubr.f32.gmra.mrb[0].mxu0 %v2520
  %v2588 = vpop.f32.mrb[0].mxu0
  %v2589 = vadd.f32 0.0, %v2588
  %v2590 = vpop.f32.mrb[0].mxu0
  %2591 = vdwg.mxu0
  %v2592 = vadd.f32 %v2519, %v2589
  %v2593 = vxor.u32 %v2592, 2147483648
  %v2594 = vmul.f32 %v2593, 1.442695
  %v2595 = vpow.pop %v2594
  %v2596 = vadd.f32 %v2595, 1.0
  %v2597 = vrcp.pop %v2596
  %v2598 = vmul.f32 1.0, %v2597
  %v2599 = vtanh.pop %v2592
  %v2600 = vmul.f32 %v2598, %v2507
  %2602 = vrot.lane.b32.xlu0 %v2599, 32
  %v2603 = vpop.permute.xlu0 %2602
  %v2605 = vmul.f32 %v2598, %v2603
  %2607 = vrot.lane.b32.xlu0 %v2605, 32
  %v2608 = vpop.permute.xlu0 %2607
  %v2610 = vadd.f32 %v2600, %v2608
  %v2611 = vtanh.pop %v2610
  %2613 = vrot.lane.b32.xlu0 %v2611, 32
  %v2614 = vpop.permute.xlu0 %2613
  %v2616 = vmul.f32 %v2598, %v2614
  %2618 = vrot.lane.b32.xlu0 %v2616, 64
  %v2619 = vpop.permute.xlu0 %2618
  %2621 = vst.msk [vmem:[%s607] sm:$0xff] %vm186, %v2619
  %v2622 = vld [vmem:[%s609] sm:$0xff]
  %v2623 = vsel %vm186, %v2619, 0
  %2625 = vmatprep.subr.mxu0 0.0
  %2626 = vmatpush1.msra.mxu0 %v2039
  %2627 = vmatprep.subr.mxu0 0.0
  %2628 = vmatpush1.msra.mxu0 %v2040
  %2629 = vmatprep.subr.mxu0 0.0
  %2630 = vmatpush1.msra.mxu0 %v2041
  %2631 = vmatprep.subr.mxu0 0.0
  %2632 = vmatpush1.msra.mxu0 %v2042
  %2633 = vmatprep.subr.mxu0 0.0
  %2634 = vmatpush1.msra.mxu0 0.0
  %2635 = vmatprep.subr.mxu0 0.0
  %2636 = vmatpush1.msra.mxu0 0.0
  %2637 = vmatprep.subr.mxu0 0.0
  %2638 = vmatpush1.msra.mxu0 0.0
  %2639 = vmatprep.subr.mxu0 0.0
  %2640 = vmatpush1.msra.mxu0 0.0
  %2641 = vmatprep.subr.mxu0 0.0
  %2642 = vmatpush1.msra.mxu0 0.0
  %2643 = vmatprep.subr.mxu0 0.0
  %2644 = vmatpush1.msra.mxu0 0.0
  %2645 = vmatprep.subr.mxu0 0.0
  %2646 = vmatpush1.msra.mxu0 0.0
  %2647 = vmatprep.subr.mxu0 0.0
  %2648 = vmatpush1.msra.mxu0 0.0
  %2649 = vmatprep.subr.mxu0 0.0
  %2650 = vmatpush1.msra.mxu0 0.0
  %2651 = vmatprep.subr.mxu0 0.0
  %2652 = vmatpush1.msra.mxu0 0.0
  %2653 = vmatprep.subr.mxu0 0.0
  %2654 = vmatpush1.msra.mxu0 0.0
  %2655 = vmatprep.subr.mxu0 0.0
  %2656 = vmatpush1.msra.mxu0 0.0
  %2657 = vmatprep.subr.mxu0 0.0
  %2658 = vmatpush1.msra.mxu0 0.0
  %2659 = vmatprep.subr.mxu0 0.0
  %2660 = vmatpush1.msra.mxu0 0.0
  %2661 = vmatprep.subr.mxu0 0.0
  %2662 = vmatpush1.msra.mxu0 0.0
  %2663 = vmatprep.subr.mxu0 0.0
  %2664 = vmatpush1.msra.mxu0 0.0
  %2665 = vmatprep.subr.mxu0 0.0
  %2666 = vmatpush1.msra.mxu0 0.0
  %2667 = vmatprep.subr.mxu0 0.0
  %2668 = vmatpush1.msra.mxu0 0.0
  %2669 = vmatprep.subr.mxu0 0.0
  %2670 = vmatpush1.msra.mxu0 0.0
  %2671 = vmatprep.subr.mxu0 0.0
  %2672 = vmatpush1.msra.mxu0 0.0
  %2673 = vmatprep.subr.mxu0 0.0
  %2674 = vmatpush1.msra.mxu0 0.0
  %2675 = vmatprep.subr.mxu0 0.0
  %2676 = vmatpush1.msra.mxu0 0.0
  %2677 = vmatprep.subr.mxu0 0.0
  %2678 = vmatpush1.msra.mxu0 0.0
  %2679 = vmatprep.subr.mxu0 0.0
  %2680 = vmatpush1.msra.mxu0 0.0
  %2681 = vmatprep.subr.mxu0 0.0
  %2682 = vmatpush1.msra.mxu0 0.0
  %2683 = vmatprep.subr.mxu0 0.0
  %2684 = vmatpush1.msra.mxu0 0.0
  %2685 = vmatprep.subr.mxu0 0.0
  %2686 = vmatpush1.msra.mxu0 0.0
  %2687 = vmatprep.subr.mxu0 0.0
  %2688 = vmatpush1.msra.mxu0 0.0
  %2689 = vmatprep.mubr.f32.mxu0 0.0
  %2690 = vmatmul.mubr.f32.gmra.mrb[0].mxu0 %v2623
  %v2691 = vpop.f32.mrb[0].mxu0
  %v2692 = vadd.f32 0.0, %v2691
  %v2693 = vpop.f32.mrb[0].mxu0
  %2694 = vdwg.mxu0
  %v2695 = vadd.f32 %v2622, %v2692
  %v2696 = vxor.u32 %v2695, 2147483648
  %v2697 = vmul.f32 %v2696, 1.442695
  %v2698 = vpow.pop %v2697
  %v2699 = vadd.f32 %v2698, 1.0
  %v2700 = vrcp.pop %v2699
  %v2701 = vmul.f32 1.0, %v2700
  %v2702 = vtanh.pop %v2695
  %v2703 = vmul.f32 %v2701, %v2610
  %2705 = vrot.lane.b32.xlu0 %v2702, 32
  %v2706 = vpop.permute.xlu0 %2705
  %v2708 = vmul.f32 %v2701, %v2706
  %2710 = vrot.lane.b32.xlu0 %v2708, 32
  %v2711 = vpop.permute.xlu0 %2710
  %v2713 = vadd.f32 %v2703, %v2711
  %v2714 = vtanh.pop %v2713
  %2716 = vrot.lane.b32.xlu0 %v2714, 32
  %v2717 = vpop.permute.xlu0 %2716
  %v2719 = vmul.f32 %v2701, %v2717
  %2721 = vrot.lane.b32.xlu0 %v2719, 64
  %v2722 = vpop.permute.xlu0 %2721
  %2724 = vst.msk [vmem:[%s712] sm:$0xff] %vm186, %v2722
  %v2725 = vld [vmem:[%s714] sm:$0xff]
  %v2726 = vsel %vm186, %v2722, 0
  %2728 = vmatprep.subr.mxu0 0.0
  %2729 = vmatpush1.msra.mxu0 %v2039
  %2730 = vmatprep.subr.mxu0 0.0
  %2731 = vmatpush1.msra.mxu0 %v2040
  %2732 = vmatprep.subr.mxu0 0.0
  %2733 = vmatpush1.msra.mxu0 %v2041
  %2734 = vmatprep.subr.mxu0 0.0
  %2735 = vmatpush1.msra.mxu0 %v2042
  %2736 = vmatprep.subr.mxu0 0.0
  %2737 = vmatpush1.msra.mxu0 0.0
  %2738 = vmatprep.subr.mxu0 0.0
  %2739 = vmatpush1.msra.mxu0 0.0
  %2740 = vmatprep.subr.mxu0 0.0
  %2741 = vmatpush1.msra.mxu0 0.0
  %2742 = vmatprep.subr.mxu0 0.0
  %2743 = vmatpush1.msra.mxu0 0.0
  %2744 = vmatprep.subr.mxu0 0.0
  %2745 = vmatpush1.msra.mxu0 0.0
  %2746 = vmatprep.subr.mxu0 0.0
  %2747 = vmatpush1.msra.mxu0 0.0
  %2748 = vmatprep.subr.mxu0 0.0
  %2749 = vmatpush1.msra.mxu0 0.0
  %2750 = vmatprep.subr.mxu0 0.0
  %2751 = vmatpush1.msra.mxu0 0.0
  %2752 = vmatprep.subr.mxu0 0.0
  %2753 = vmatpush1.msra.mxu0 0.0
  %2754 = vmatprep.subr.mxu0 0.0
  %2755 = vmatpush1.msra.mxu0 0.0
  %2756 = vmatprep.subr.mxu0 0.0
  %2757 = vmatpush1.msra.mxu0 0.0
  %2758 = vmatprep.subr.mxu0 0.0
  %2759 = vmatpush1.msra.mxu0 0.0
  %2760 = vmatprep.subr.mxu0 0.0
  %2761 = vmatpush1.msra.mxu0 0.0
  %2762 = vmatprep.subr.mxu0 0.0
  %2763 = vmatpush1.msra.mxu0 0.0
  %2764 = vmatprep.subr.mxu0 0.0
  %2765 = vmatpush1.msra.mxu0 0.0
  %2766 = vmatprep.subr.mxu0 0.0
  %2767 = vmatpush1.msra.mxu0 0.0
  %2768 = vmatprep.subr.mxu0 0.0
  %2769 = vmatpush1.msra.mxu0 0.0
  %2770 = vmatprep.subr.mxu0 0.0
  %2771 = vmatpush1.msra.mxu0 0.0
  %2772 = vmatprep.subr.mxu0 0.0
  %2773 = vmatpush1.msra.mxu0 0.0
  %2774 = vmatprep.subr.mxu0 0.0
  %2775 = vmatpush1.msra.mxu0 0.0
  %2776 = vmatprep.subr.mxu0 0.0
  %2777 = vmatpush1.msra.mxu0 0.0
  %2778 = vmatprep.subr.mxu0 0.0
  %2779 = vmatpush1.msra.mxu0 0.0
  %2780 = vmatprep.subr.mxu0 0.0
  %2781 = vmatpush1.msra.mxu0 0.0
  %2782 = vmatprep.subr.mxu0 0.0
  %2783 = vmatpush1.msra.mxu0 0.0
  %2784 = vmatprep.subr.mxu0 0.0
  %2785 = vmatpush1.msra.mxu0 0.0
  %2786 = vmatprep.subr.mxu0 0.0
  %2787 = vmatpush1.msra.mxu0 0.0
  %2788 = vmatprep.subr.mxu0 0.0
  %2789 = vmatpush1.msra.mxu0 0.0
  %2790 = vmatprep.subr.mxu0 0.0
  %2791 = vmatpush1.msra.mxu0 0.0
  %2792 = vmatprep.mubr.f32.mxu0 0.0
  %2793 = vmatmul.mubr.f32.gmra.mrb[0].mxu0 %v2726
  %v2794 = vpop.f32.mrb[0].mxu0
  %v2795 = vadd.f32 0.0, %v2794
  %v2796 = vpop.f32.mrb[0].mxu0
  %2797 = vdwg.mxu0
  %v2798 = vadd.f32 %v2725, %v2795
  %v2799 = vxor.u32 %v2798, 2147483648
  %v2800 = vmul.f32 %v2799, 1.442695
  %v2801 = vpow.pop %v2800
  %v2802 = vadd.f32 %v2801, 1.0
  %v2803 = vrcp.pop %v2802
  %v2804 = vmul.f32 1.0, %v2803
  %v2805 = vtanh.pop %v2798
  %v2806 = vmul.f32 %v2804, %v2713
  %2808 = vrot.lane.b32.xlu0 %v2805, 32
  %v2809 = vpop.permute.xlu0 %2808
  %v2811 = vmul.f32 %v2804, %v2809
  %2813 = vrot.lane.b32.xlu0 %v2811, 32
  %v2814 = vpop.permute.xlu0 %2813
  %v2816 = vadd.f32 %v2806, %v2814
  %v2817 = vtanh.pop %v2816
  %2819 = vrot.lane.b32.xlu0 %v2817, 32
  %v2820 = vpop.permute.xlu0 %2819
  %v2822 = vmul.f32 %v2804, %v2820
  %2824 = vrot.lane.b32.xlu0 %v2822, 64
  %v2825 = vpop.permute.xlu0 %2824
  %2827 = vst.msk [vmem:[%s817] sm:$0xff] %vm186, %v2825
  %v2828 = vld [vmem:[%s819] sm:$0xff]
  %v2829 = vsel %vm186, %v2825, 0
  %2831 = vmatprep.subr.mxu0 0.0
  %2832 = vmatpush1.msra.mxu0 %v2039
  %2833 = vmatprep.subr.mxu0 0.0
  %2834 = vmatpush1.msra.mxu0 %v2040
  %2835 = vmatprep.subr.mxu0 0.0
  %2836 = vmatpush1.msra.mxu0 %v2041
  %2837 = vmatprep.subr.mxu0 0.0
  %2838 = vmatpush1.msra.mxu0 %v2042
  %2839 = vmatprep.subr.mxu0 0.0
  %2840 = vmatpush1.msra.mxu0 0.0
  %2841 = vmatprep.subr.mxu0 0.0
  %2842 = vmatpush1.msra.mxu0 0.0
  %2843 = vmatprep.subr.mxu0 0.0
  %2844 = vmatpush1.msra.mxu0 0.0
  %2845 = vmatprep.subr.mxu0 0.0
  %2846 = vmatpush1.msra.mxu0 0.0
  %2847 = vmatprep.subr.mxu0 0.0
  %2848 = vmatpush1.msra.mxu0 0.0
  %2849 = vmatprep.subr.mxu0 0.0
  %2850 = vmatpush1.msra.mxu0 0.0
  %2851 = vmatprep.subr.mxu0 0.0
  %2852 = vmatpush1.msra.mxu0 0.0
  %2853 = vmatprep.subr.mxu0 0.0
  %2854 = vmatpush1.msra.mxu0 0.0
  %2855 = vmatprep.subr.mxu0 0.0
  %2856 = vmatpush1.msra.mxu0 0.0
  %2857 = vmatprep.subr.mxu0 0.0
  %2858 = vmatpush1.msra.mxu0 0.0
  %2859 = vmatprep.subr.mxu0 0.0
  %2860 = vmatpush1.msra.mxu0 0.0
  %2861 = vmatprep.subr.mxu0 0.0
  %2862 = vmatpush1.msra.mxu0 0.0
  %2863 = vmatprep.subr.mxu0 0.0
  %2864 = vmatpush1.msra.mxu0 0.0
  %2865 = vmatprep.subr.mxu0 0.0
  %2866 = vmatpush1.msra.mxu0 0.0
  %2867 = vmatprep.subr.mxu0 0.0
  %2868 = vmatpush1.msra.mxu0 0.0
  %2869 = vmatprep.subr.mxu0 0.0
  %2870 = vmatpush1.msra.mxu0 0.0
  %2871 = vmatprep.subr.mxu0 0.0
  %2872 = vmatpush1.msra.mxu0 0.0
  %2873 = vmatprep.subr.mxu0 0.0
  %2874 = vmatpush1.msra.mxu0 0.0
  %2875 = vmatprep.subr.mxu0 0.0
  %2876 = vmatpush1.msra.mxu0 0.0
  %2877 = vmatprep.subr.mxu0 0.0
  %2878 = vmatpush1.msra.mxu0 0.0
  %2879 = vmatprep.subr.mxu0 0.0
  %2880 = vmatpush1.msra.mxu0 0.0
  %2881 = vmatprep.subr.mxu0 0.0
  %2882 = vmatpush1.msra.mxu0 0.0
  %2883 = vmatprep.subr.mxu0 0.0
  %2884 = vmatpush1.msra.mxu0 0.0
  %2885 = vmatprep.subr.mxu0 0.0
  %2886 = vmatpush1.msra.mxu0 0.0
  %2887 = vmatprep.subr.mxu0 0.0
  %2888 = vmatpush1.msra.mxu0 0.0
  %2889 = vmatprep.subr.mxu0 0.0
  %2890 = vmatpush1.msra.mxu0 0.0
  %2891 = vmatprep.subr.mxu0 0.0
  %2892 = vmatpush1.msra.mxu0 0.0
  %2893 = vmatprep.subr.mxu0 0.0
  %2894 = vmatpush1.msra.mxu0 0.0
  %2895 = vmatprep.mubr.f32.mxu0 0.0
  %2896 = vmatmul.mubr.f32.gmra.mrb[0].mxu0 %v2829
  %v2897 = vpop.f32.mrb[0].mxu0
  %v2898 = vadd.f32 0.0, %v2897
  %v2899 = vpop.f32.mrb[0].mxu0
  %2900 = vdwg.mxu0
  %v2901 = vadd.f32 %v2828, %v2898
  %v2902 = vxor.u32 %v2901, 2147483648
  %v2903 = vmul.f32 %v2902, 1.442695
  %v2904 = vpow.pop %v2903
  %v2905 = vadd.f32 %v2904, 1.0
  %v2906 = vrcp.pop %v2905
  %v2907 = vmul.f32 1.0, %v2906
  %v2908 = vtanh.pop %v2901
  %v2909 = vmul.f32 %v2907, %v2816
  %2911 = vrot.lane.b32.xlu0 %v2908, 32
  %v2912 = vpop.permute.xlu0 %2911
  %v2914 = vmul.f32 %v2907, %v2912
  %2916 = vrot.lane.b32.xlu0 %v2914, 32
  %v2917 = vpop.permute.xlu0 %2916
  %v2919 = vadd.f32 %v2909, %v2917
  %v2920 = vtanh.pop %v2919
  %2922 = vrot.lane.b32.xlu0 %v2920, 32
  %v2923 = vpop.permute.xlu0 %2922
  %v2925 = vmul.f32 %v2907, %v2923
  %2927 = vrot.lane.b32.xlu0 %v2925, 64
  %v2928 = vpop.permute.xlu0 %2927
  %2930 = vst.msk [vmem:[%s922] sm:$0xff] %vm186, %v2928
  %v2931 = vld [vmem:[%s924] sm:$0xff]
  %v2932 = vsel %vm186, %v2928, 0
  %2934 = vmatprep.subr.mxu0 0.0
  %2935 = vmatpush1.msra.mxu0 %v2039
  %2936 = vmatprep.subr.mxu0 0.0
  %2937 = vmatpush1.msra.mxu0 %v2040
  %2938 = vmatprep.subr.mxu0 0.0
  %2939 = vmatpush1.msra.mxu0 %v2041
  %2940 = vmatprep.subr.mxu0 0.0
  %2941 = vmatpush1.msra.mxu0 %v2042
  %2942 = vmatprep.subr.mxu0 0.0
  %2943 = vmatpush1.msra.mxu0 0.0
  %2944 = vmatprep.subr.mxu0 0.0
  %2945 = vmatpush1.msra.mxu0 0.0
  %2946 = vmatprep.subr.mxu0 0.0
  %2947 = vmatpush1.msra.mxu0 0.0
  %2948 = vmatprep.subr.mxu0 0.0
  %2949 = vmatpush1.msra.mxu0 0.0
  %2950 = vmatprep.subr.mxu0 0.0
  %2951 = vmatpush1.msra.mxu0 0.0
  %2952 = vmatprep.subr.mxu0 0.0
  %2953 = vmatpush1.msra.mxu0 0.0
  %2954 = vmatprep.subr.mxu0 0.0
  %2955 = vmatpush1.msra.mxu0 0.0
  %2956 = vmatprep.subr.mxu0 0.0
  %2957 = vmatpush1.msra.mxu0 0.0
  %2958 = vmatprep.subr.mxu0 0.0
  %2959 = vmatpush1.msra.mxu0 0.0
  %2960 = vmatprep.subr.mxu0 0.0
  %2961 = vmatpush1.msra.mxu0 0.0
  %2962 = vmatprep.subr.mxu0 0.0
  %2963 = vmatpush1.msra.mxu0 0.0
  %2964 = vmatprep.subr.mxu0 0.0
  %2965 = vmatpush1.msra.mxu0 0.0
  %2966 = vmatprep.subr.mxu0 0.0
  %2967 = vmatpush1.msra.mxu0 0.0
  %2968 = vmatprep.subr.mxu0 0.0
  %2969 = vmatpush1.msra.mxu0 0.0
  %2970 = vmatprep.subr.mxu0 0.0
  %2971 = vmatpush1.msra.mxu0 0.0
  %2972 = vmatprep.subr.mxu0 0.0
  %2973 = vmatpush1.msra.mxu0 0.0
  %2974 = vmatprep.subr.mxu0 0.0
  %2975 = vmatpush1.msra.mxu0 0.0
  %2976 = vmatprep.subr.mxu0 0.0
  %2977 = vmatpush1.msra.mxu0 0.0
  %2978 = vmatprep.subr.mxu0 0.0
  %2979 = vmatpush1.msra.mxu0 0.0
  %2980 = vmatprep.subr.mxu0 0.0
  %2981 = vmatpush1.msra.mxu0 0.0
  %2982 = vmatprep.subr.mxu0 0.0
  %2983 = vmatpush1.msra.mxu0 0.0
  %2984 = vmatprep.subr.mxu0 0.0
  %2985 = vmatpush1.msra.mxu0 0.0
  %2986 = vmatprep.subr.mxu0 0.0
  %2987 = vmatpush1.msra.mxu0 0.0
  %2988 = vmatprep.subr.mxu0 0.0
  %2989 = vmatpush1.msra.mxu0 0.0
  %2990 = vmatprep.subr.mxu0 0.0
  %2991 = vmatpush1.msra.mxu0 0.0
  %2992 = vmatprep.subr.mxu0 0.0
  %2993 = vmatpush1.msra.mxu0 0.0
  %2994 = vmatprep.subr.mxu0 0.0
  %2995 = vmatpush1.msra.mxu0 0.0
  %2996 = vmatprep.subr.mxu0 0.0
  %2997 = vmatpush1.msra.mxu0 0.0
  %2998 = vmatprep.mubr.f32.mxu0 0.0
  %2999 = vmatmul.mubr.f32.gmra.mrb[0].mxu0 %v2932
  %v3000 = vpop.f32.mrb[0].mxu0
  %v3001 = vadd.f32 0.0, %v3000
  %v3002 = vpop.f32.mrb[0].mxu0
  %3003 = vdwg.mxu0
  %v3004 = vadd.f32 %v2931, %v3001
  %v3005 = vxor.u32 %v3004, 2147483648
  %v3006 = vmul.f32 %v3005, 1.442695
  %v3007 = vpow.pop %v3006
  %v3008 = vadd.f32 %v3007, 1.0
  %v3009 = vrcp.pop %v3008
  %v3010 = vmul.f32 1.0, %v3009
  %v3011 = vtanh.pop %v3004
  %v3012 = vmul.f32 %v3010, %v2919
  %3014 = vrot.lane.b32.xlu0 %v3011, 32
  %v3015 = vpop.permute.xlu0 %3014
  %v3017 = vmul.f32 %v3010, %v3015
  %3019 = vrot.lane.b32.xlu0 %v3017, 32
  %v3020 = vpop.permute.xlu0 %3019
  %v3022 = vadd.f32 %v3012, %v3020
  %v3023 = vtanh.pop %v3022
  %3025 = vrot.lane.b32.xlu0 %v3023, 32
  %v3026 = vpop.permute.xlu0 %3025
  %v3028 = vmul.f32 %v3010, %v3026
  %3030 = vrot.lane.b32.xlu0 %v3028, 64
  %v3031 = vpop.permute.xlu0 %3030
  %3033 = vst.msk [vmem:[%s1027] sm:$0xff] %vm186, %v3031
  %s3034 = scalar_lea.vmem %s12, 16
  %3035 = vst.msk [vmem:[%s3034] sm:$0xff] %vm186, %v3031
  %3037 = vrot.lane.b32.xlu0 %v3022, 96
  %v3038 = vpop.permute.xlu0 %3037
  %s3040 = scalar_lea.vmem %s13, 16
  %3041 = vst.msk [vmem:[%s3040] sm:$0xff] %vm186, %v3038
  %v3042 = vld [vmem:[#allocation2] sm:$0xff]
  %v3043 = vld [vmem:[#allocation2 + $0x8] sm:$0xff]
  %v3044 = vld [vmem:[#allocation2 + $0x10] sm:$0xff]
  %v3045 = vld [vmem:[#allocation2 + $0x18] sm:$0xff]
  %v3046 = vld [vmem:[#allocation2 + $0x20] sm:$0xff]
  %v3047 = vld [vmem:[#allocation2 + $0x28] sm:$0xff]
  %v3048 = vld [vmem:[#allocation2 + $0x30] sm:$0xff]
  %v3049 = vld [vmem:[#allocation2 + $0x38] sm:$0xff]
  %v3050 = vld [vmem:[%s7] sm:$0xff]
  %v3051 = vld [vmem:[%s7 + $0x8] sm:$0xff]
  %v3052 = vld [vmem:[%s7 + $0x10] sm:$0xff]
  %v3053 = vld [vmem:[%s7 + $0x18] sm:$0xff]
  %v3054 = vld [vmem:[%s8] sm:$0x1]
  %v3056 = vlaneseq
  %v3057 = vshrl.u32 %v3056, 7
  %v3058 = vsub.s32 0, %v3057
  %v3059 = vrot.slane %v3054, %v3058
  %v3062 = vsel %vm186, %v3042, 0
  %v3065 = vsel %vm186, %v3043, 0
  %v3068 = vsel %vm186, %v3044, 0
  %v3071 = vsel %vm186, %v3045, 0
  %v3074 = vsel %vm186, %v3046, 0
  %v3077 = vsel %vm186, %v3047, 0
  %v3080 = vsel %vm186, %v3048, 0
  %v3083 = vsel %vm186, %v3049, 0
  %3085 = vmatprep.subr.mxu0 0.0
  %3086 = vmatpush1.msra.mxu0 %v3050
  %3087 = vmatprep.subr.mxu0 0.0
  %3088 = vmatpush1.msra.mxu0 %v3051
  %3089 = vmatprep.subr.mxu0 0.0
  %3090 = vmatpush1.msra.mxu0 %v3052
  %3091 = vmatprep.subr.mxu0 0.0
  %3092 = vmatpush1.msra.mxu0 %v3053
  %3093 = vmatprep.subr.mxu0 0.0
  %3094 = vmatpush1.msra.mxu0 0.0
  %3095 = vmatprep.subr.mxu0 0.0
  %3096 = vmatpush1.msra.mxu0 0.0
  %3097 = vmatprep.subr.mxu0 0.0
  %3098 = vmatpush1.msra.mxu0 0.0
  %3099 = vmatprep.subr.mxu0 0.0
  %3100 = vmatpush1.msra.mxu0 0.0
  %3101 = vmatprep.subr.mxu0 0.0
  %3102 = vmatpush1.msra.mxu0 0.0
  %3103 = vmatprep.subr.mxu0 0.0
  %3104 = vmatpush1.msra.mxu0 0.0
  %3105 = vmatprep.subr.mxu0 0.0
  %3106 = vmatpush1.msra.mxu0 0.0
  %3107 = vmatprep.subr.mxu0 0.0
  %3108 = vmatpush1.msra.mxu0 0.0
  %3109 = vmatprep.subr.mxu0 0.0
  %3110 = vmatpush1.msra.mxu0 0.0
  %3111 = vmatprep.subr.mxu0 0.0
  %3112 = vmatpush1.msra.mxu0 0.0
  %3113 = vmatprep.subr.mxu0 0.0
  %3114 = vmatpush1.msra.mxu0 0.0
  %3115 = vmatprep.subr.mxu0 0.0
  %3116 = vmatpush1.msra.mxu0 0.0
  %3117 = vmatprep.subr.mxu0 0.0
  %3118 = vmatpush1.msra.mxu0 0.0
  %3119 = vmatprep.subr.mxu0 0.0
  %3120 = vmatpush1.msra.mxu0 0.0
  %3121 = vmatprep.subr.mxu0 0.0
  %3122 = vmatpush1.msra.mxu0 0.0
  %3123 = vmatprep.subr.mxu0 0.0
  %3124 = vmatpush1.msra.mxu0 0.0
  %3125 = vmatprep.subr.mxu0 0.0
  %3126 = vmatpush1.msra.mxu0 0.0
  %3127 = vmatprep.subr.mxu0 0.0
  %3128 = vmatpush1.msra.mxu0 0.0
  %3129 = vmatprep.subr.mxu0 0.0
  %3130 = vmatpush1.msra.mxu0 0.0
  %3131 = vmatprep.subr.mxu0 0.0
  %3132 = vmatpush1.msra.mxu0 0.0
  %3133 = vmatprep.subr.mxu0 0.0
  %3134 = vmatpush1.msra.mxu0 0.0
  %3135 = vmatprep.subr.mxu0 0.0
  %3136 = vmatpush1.msra.mxu0 0.0
  %3137 = vmatprep.subr.mxu0 0.0
  %3138 = vmatpush1.msra.mxu0 0.0
  %3139 = vmatprep.subr.mxu0 0.0
  %3140 = vmatpush1.msra.mxu0 0.0
  %3141 = vmatprep.subr.mxu0 0.0
  %3142 = vmatpush1.msra.mxu0 0.0
  %3143 = vmatprep.subr.mxu0 0.0
  %3144 = vmatpush1.msra.mxu0 0.0
  %3145 = vmatprep.subr.mxu0 0.0
  %3146 = vmatpush1.msra.mxu0 0.0
  %3147 = vmatprep.subr.mxu0 0.0
  %3148 = vmatpush1.msra.mxu0 0.0
  %3149 = vmatprep.mubr.f32.mxu0 0.0
  %3150 = vmatmul.mubr.f32.gmra.mrb[0].mxu0 %v3062
  %v3151 = vpop.f32.mrb[0].mxu0
  %v3152 = vadd.f32 %v3059, %v3151
  %v3153 = vpop.f32.mrb[0].mxu0
  %3154 = vmatprep.mubr.f32.mxu0 0.0
  %3155 = vmatmul.mubr.f32.gmra.mrb[0].mxu0 %v3065
  %v3156 = vpop.f32.mrb[0].mxu0
  %v3157 = vadd.f32 %v3059, %v3156
  %v3158 = vpop.f32.mrb[0].mxu0
  %3159 = vmatprep.mubr.f32.mxu0 0.0
  %3160 = vmatmul.mubr.f32.gmra.mrb[0].mxu0 %v3068
  %v3161 = vpop.f32.mrb[0].mxu0
  %v3162 = vadd.f32 %v3059, %v3161
  %v3163 = vpop.f32.mrb[0].mxu0
  %3164 = vmatprep.mubr.f32.mxu0 0.0
  %3165 = vmatmul.mubr.f32.gmra.mrb[0].mxu0 %v3071
  %v3166 = vpop.f32.mrb[0].mxu0
  %v3167 = vadd.f32 %v3059, %v3166
  %v3168 = vpop.f32.mrb[0].mxu0
  %3169 = vmatprep.mubr.f32.mxu0 0.0
  %3170 = vmatmul.mubr.f32.gmra.mrb[0].mxu0 %v3074
  %v3171 = vpop.f32.mrb[0].mxu0
  %v3172 = vadd.f32 %v3059, %v3171
  %v3173 = vpop.f32.mrb[0].mxu0
  %3174 = vmatprep.mubr.f32.mxu0 0.0
  %3175 = vmatmul.mubr.f32.gmra.mrb[0].mxu0 %v3077
  %v3176 = vpop.f32.mrb[0].mxu0
  %v3177 = vadd.f32 %v3059, %v3176
  %v3178 = vpop.f32.mrb[0].mxu0
  %3179 = vmatprep.mubr.f32.mxu0 0.0
  %3180 = vmatmul.mubr.f32.gmra.mrb[0].mxu0 %v3080
  %v3181 = vpop.f32.mrb[0].mxu0
  %v3182 = vadd.f32 %v3059, %v3181
  %v3183 = vpop.f32.mrb[0].mxu0
  %3184 = vmatprep.mubr.f32.mxu0 0.0
  %3185 = vmatmul.mubr.f32.gmra.mrb[0].mxu0 %v3083
  %v3186 = vpop.f32.mrb[0].mxu0
  %v3187 = vadd.f32 %v3059, %v3186
  %v3188 = vpop.f32.mrb[0].mxu0
  %3189 = vdwg.mxu0
  %vm3190 = vcmp.gt.f32.partialorder %v3152, 0.0
  %vm3191 = vcmp.gt.f32.partialorder %v3157, 0.0
  %vm3192 = vcmp.gt.f32.partialorder %v3162, 0.0
  %vm3193 = vcmp.gt.f32.partialorder %v3167, 0.0
  %vm3194 = vcmp.gt.f32.partialorder %v3172, 0.0
  %vm3195 = vcmp.gt.f32.partialorder %v3177, 0.0
  %vm3196 = vcmp.gt.f32.partialorder %v3182, 0.0
  %vm3197 = vcmp.gt.f32.partialorder %v3187, 0.0
  %v3198 = vmul.f32 %v3152, 0.01
  %v3199 = vmul.f32 %v3157, 0.01
  %v3200 = vmul.f32 %v3162, 0.01
  %v3201 = vmul.f32 %v3167, 0.01
  %v3202 = vmul.f32 %v3172, 0.01
  %v3203 = vmul.f32 %v3177, 0.01
  %v3204 = vmul.f32 %v3182, 0.01
  %v3205 = vmul.f32 %v3187, 0.01
  %v3206 = vsel %vm3190, %v3152, %v3198
  %v3207 = vsel %vm3191, %v3157, %v3199
  %v3208 = vsel %vm3192, %v3162, %v3200
  %v3209 = vsel %vm3193, %v3167, %v3201
  %v3210 = vsel %vm3194, %v3172, %v3202
  %v3211 = vsel %vm3195, %v3177, %v3203
  %v3212 = vsel %vm3196, %v3182, %v3204
  %v3213 = vsel %vm3197, %v3187, %v3205
  %v3214 = vld [vmem:[%s9] sm:$0x1]
  %v3216 = vlaneseq
  %v3217 = vshrl.u32 %v3216, 7
  %v3218 = vsub.s32 0, %v3217
  %v3219 = vrot.slane %v3214, %v3218
  %v3221 = vmul.f32 %v3206, %v3219
  %v3222 = vmul.f32 %v3207, %v3219
  %v3223 = vmul.f32 %v3208, %v3219
  %v3224 = vmul.f32 %v3209, %v3219
  %v3225 = vmul.f32 %v3210, %v3219
  %v3226 = vmul.f32 %v3211, %v3219
  %v3227 = vmul.f32 %v3212, %v3219
  %v3228 = vmul.f32 %v3213, %v3219
  %vm3229 = vcmask 130048
  %v3230 = vsel %vm3229, %v3221, 0.0
  %3231 = vadd.xlane.f32.xlu0 %v3230
  %v3232 = vpop.xlane.xlu0 %3231
  %v3233 = vsel %vm3229, %v3222, 0.0
  %3234 = vadd.xlane.f32.xlu0 %v3233
  %v3235 = vpop.xlane.xlu0 %3234
  %v3236 = vsel %vm3229, %v3223, 0.0
  %3237 = vadd.xlane.f32.xlu0 %v3236
  %v3238 = vpop.xlane.xlu0 %3237
  %v3239 = vsel %vm3229, %v3224, 0.0
  %3240 = vadd.xlane.f32.xlu0 %v3239
  %v3241 = vpop.xlane.xlu0 %3240
  %v3242 = vsel %vm3229, %v3225, 0.0
  %3243 = vadd.xlane.f32.xlu0 %v3242
  %v3244 = vpop.xlane.xlu0 %3243
  %v3245 = vsel %vm3229, %v3226, 0.0
  %3246 = vadd.xlane.f32.xlu0 %v3245
  %v3247 = vpop.xlane.xlu0 %3246
  %v3248 = vsel %vm3229, %v3227, 0.0
  %3249 = vadd.xlane.f32.xlu0 %v3248
  %v3250 = vpop.xlane.xlu0 %3249
  %v3251 = vsel %vm3229, %v3228, 0.0
  %3252 = vadd.xlane.f32.xlu0 %v3251
  %v3253 = vpop.xlane.xlu0 %3252
  %v3254 = vld [vmem:[#allocation4] sm:$0x1]
  %v3256 = vlaneseq
  %v3257 = vshrl.u32 %v3256, 7
  %v3258 = vsub.s32 0, %v3257
  %v3259 = vrot.slane %v3254, %v3258
  %v3261 = vadd.f32 %v3232, %v3259
  %v3262 = vadd.f32 %v3235, %v3259
  %v3263 = vadd.f32 %v3238, %v3259
  %v3264 = vadd.f32 %v3241, %v3259
  %v3265 = vadd.f32 %v3244, %v3259
  %v3266 = vadd.f32 %v3247, %v3259
  %v3267 = vadd.f32 %v3250, %v3259
  %v3268 = vadd.f32 %v3253, %v3259
  %vm3269 = vcmask 7168
  %3270 = vst.msk [vmem:[%s11] sm:$0xff] %vm3269, %v3261
  %3271 = vst.msk [vmem:[%s11 + $0x8] sm:$0xff] %vm3269, %v3262
  %3272 = vst.msk [vmem:[%s11 + $0x10] sm:$0xff] %vm3269, %v3263
  %3273 = vst.msk [vmem:[%s11 + $0x18] sm:$0xff] %vm3269, %v3264
  %3274 = vst.msk [vmem:[%s11 + $0x20] sm:$0xff] %vm3269, %v3265
  %3275 = vst.msk [vmem:[%s11 + $0x28] sm:$0xff] %vm3269, %v3266
  %3276 = vst.msk [vmem:[%s11 + $0x30] sm:$0xff] %vm3269, %v3267
  %3277 = vst.msk [vmem:[%s11 + $0x38] sm:$0xff] %vm3269, %v3268
  // Predicated region
  $region46: #{bwlstm3_forward.1} parent=0 // pred_check
    _
  $region47: #{bwlstm3_forward.1} parent=0 // pred_check_branch
    %3279 = sbr.rel (0) target = $region49
  $region48: #{bwlstm3_forward.1} parent=0 // pred_region
    _
  $region49: #{bwlstm3_forward.1} parent=0 // pred_fallthru
    _
  // Predicated region
  $region50: #{bwlstm3_forward.1} parent=0 // pred_check
    _
  $region51: #{bwlstm3_forward.1} parent=0 // pred_check_branch
    %3281 = sbr.rel (0) target = $region53
  $region52: #{bwlstm3_forward.1} parent=0 // pred_region
    _
  $region53: #{bwlstm3_forward.1} parent=0 // pred_fallthru
    _
  // Predicated region
  $region54: #{bwlstm3_forward.1} parent=0 // pred_check
    _
  $region55: #{bwlstm3_forward.1} parent=0 // pred_check_branch
    %3283 = sbr.rel (0) target = $region57
  $region56: #{bwlstm3_forward.1} parent=0 // pred_region
    _
  $region57: #{bwlstm3_forward.1} parent=0 // pred_fallthru
    _
  // Predicated region
  $region58: #{bwlstm3_forward.1} parent=0 // pred_check
    _
  $region59: #{bwlstm3_forward.1} parent=0 // pred_check_branch
    %3285 = sbr.rel (0) target = $region61
  $region60: #{bwlstm3_forward.1} parent=0 // pred_region
    _
  $region61: #{bwlstm3_forward.1} parent=0 // pred_fallthru
    _
  // Predicated region
  $region62: #{bwlstm3_forward.1} parent=0 // pred_check
    _
  $region63: #{bwlstm3_forward.1} parent=0 // pred_check_branch
    %3287 = sbr.rel (0) target = $region65
  $region64: #{bwlstm3_forward.1} parent=0 // pred_region
    _
  $region65: #{bwlstm3_forward.1} parent=0 // pred_fallthru
    _
  // Predicated region
  $region66: #{bwlstm3_forward.1} parent=0 // pred_check
    _
  $region67: #{bwlstm3_forward.1} parent=0 // pred_check_branch
    %3289 = sbr.rel (0) target = $region69
  $region68: #{bwlstm3_forward.1} parent=0 // pred_region
    _
  $region69: #{bwlstm3_forward.1} parent=0 // pred_fallthru
    _

</llo_original>
